<compile_context>
chip_gen: v5e
topology: v5e:2x2
jax: 0.10.0
libtpu: 0.0.40
codegen_flags: <defaults>
</compile_context>

<pallas_src>
import functools

import jax
import jax.numpy as jnp
from jax import lax
from jax.experimental import pallas as pl
from jax.experimental.pallas import tpu as pltpu

NEG_SLOPE = 0.01      # nn.LeakyReLU default
EPS = 1e-5            # nn.InstanceNorm3d default
VMEM_LIMIT = 48 * 1024 * 1024   # explicit budget, fits v5e/v6e (128MiB) and v7x (64MiB)


# -----------------------------------------------------------------------------
# Kernel 1: tap-accumulated 3x3x3 conv + bias, channels-last, plus fused
#           per-(n, d-plane) partial moments for the following instance norm.
#
# Input plane layout: padded upsampled activation reshaped to
#   (N, Dp, PLANE, Cin) with PLANE = (Ho+3) * (Wo+2)  (flattened padded H,W).
# Output row q = h*(Wo+2) + w ; columns with (q mod Wp) >= Wo are junk that is
# masked out of the statistics and sliced away at the very end.
# -----------------------------------------------------------------------------
def _conv_tap_kernel(x_ref, w_ref, b_ref, m_ref,     # inputs
                     y_ref, ps_ref, pq_ref,          # outputs
                     acc_ref,                        # f32 VMEM scratch accumulator
                     *, wp, l_rows, n_kd):
    kd = pl.program_id(2)

    @pl.when(kd == 0)
    def _init():
        # bias folded into the accumulator init (epilogue-free bias add)
        acc_ref[...] = jnp.broadcast_to(b_ref[...], acc_ref.shape)

    # 9 (kh, kw) taps: each is just a row-offset window of the flattened plane.
    for t in range(9):
        kh, kw = divmod(t, 3)
        lhs = x_ref[0, 0, pl.ds(kh * wp + kw, l_rows), :]          # (L, Cin) bf16
        acc_ref[...] += jnp.dot(lhs, w_ref[0, t],
                                preferred_element_type=jnp.float32)

    @pl.when(kd == n_kd - 1)
    def _finalize():
        acc = acc_ref[...]                                         # (L, Cout) f32
        y_ref[0, 0] = acc.astype(y_ref.dtype)
        av = acc * m_ref[...]                                      # mask junk W columns
        ps_ref[0, 0] = jnp.sum(av, axis=0, keepdims=True)          # (1, Cout)
        pq_ref[0, 0] = jnp.sum(av * av, axis=0, keepdims=True)     # (1, Cout)


def _conv3x3_bias_moments(xpf, wk, b2, mask, *, n, do, plane, l_rows, cin, cout, wp):
    kernel = functools.partial(_conv_tap_kernel, wp=wp, l_rows=l_rows, n_kd=3)
    return pl.pallas_call(
        kernel,
        grid=(n, do, 3),
        in_specs=[
            pl.BlockSpec((1, 1, plane, cin), lambda i, j, k: (i, j + k, 0, 0)),
            pl.BlockSpec((1, 9, cin, cout), lambda i, j, k: (k, 0, 0, 0)),
            pl.BlockSpec((1, cout), lambda i, j, k: (0, 0)),
            pl.BlockSpec((l_rows, 1), lambda i, j, k: (0, 0)),
        ],
        out_specs=[
            pl.BlockSpec((1, 1, l_rows, cout), lambda i, j, k: (i, j, 0, 0)),
            pl.BlockSpec((1, 1, 1, cout), lambda i, j, k: (i, j, 0, 0)),
            pl.BlockSpec((1, 1, 1, cout), lambda i, j, k: (i, j, 0, 0)),
        ],
        out_shape=[
            jax.ShapeDtypeStruct((n, do, l_rows, cout), jnp.bfloat16),
            jax.ShapeDtypeStruct((n, do, 1, cout), jnp.float32),
            jax.ShapeDtypeStruct((n, do, 1, cout), jnp.float32),
        ],
        scratch_shapes=[pltpu.VMEM((l_rows, cout), jnp.float32)],
        compiler_params=pltpu.CompilerParams(
            dimension_semantics=("parallel", "parallel", "arbitrary"),
            vmem_limit_bytes=VMEM_LIMIT,
        ),
    )(xpf, wk, b2, mask)


# -----------------------------------------------------------------------------
# Kernel 2: instance-norm apply + LeakyReLU, tiled over (n, d-plane) with a
#           fully 'parallel' grid. Junk columns flow through and are sliced
#           away outside (they stay finite).
# -----------------------------------------------------------------------------
def _norm_lrelu_kernel(y_ref, mu_ref, inv_ref, o_ref):
    y = y_ref[0, 0].astype(jnp.float32)          # (L, Cout)
    z = (y - mu_ref[0]) * inv_ref[0]
    o_ref[0, 0] = jnp.where(z >= 0.0, z, NEG_SLOPE * z)


def _inst_norm_lrelu(y, mu, inv, *, n, do, l_rows, cout):
    return pl.pallas_call(
        _norm_lrelu_kernel,
        grid=(n, do),
        in_specs=[
            pl.BlockSpec((1, 1, l_rows, cout), lambda i, j: (i, j, 0, 0)),
            pl.BlockSpec((1, 1, cout), lambda i, j: (i, 0, 0)),
            pl.BlockSpec((1, 1, cout), lambda i, j: (i, 0, 0)),
        ],
        out_specs=pl.BlockSpec((1, 1, l_rows, cout), lambda i, j: (i, j, 0, 0)),
        out_shape=jax.ShapeDtypeStruct((n, do, l_rows, cout), jnp.float32),
        compiler_params=pltpu.CompilerParams(
            dimension_semantics=("parallel", "parallel"),
            vmem_limit_bytes=VMEM_LIMIT,
        ),
    )(y, mu, inv)


# -----------------------------------------------------------------------------
# up_conv forward: Upsample(x2) -> Conv3d(3,1,1,bias) -> InstanceNorm3d -> LeakyReLU
# x: (N, Cin, D, H, W) f32 ; w: (Cout, Cin, 3, 3, 3) ; b: (Cout,)
# returns (N, Cout, 2D, 2H, 2W) f32
# -----------------------------------------------------------------------------
def up_conv_forward(x, w, b):
    n, cin, d, h, wdim = x.shape
    cout = w.shape[0]
    do, ho, wo = 2 * d, 2 * h, 2 * wdim
    wp = wo + 2               # W padded by (1,1)
    hp = ho + 3               # H padded by (1,2): extra bottom row keeps every tap window in-bounds
    dp = do + 2               # D padded by (1,1)
    plane = hp * wp
    l_rows = ho * wp          # output rows per d-plane (W-padded)

    # ---- entry transpose: NCDHW -> NDHWC, done exactly once ----
    x_cl = jnp.transpose(x, (0, 2, 3, 4, 1))

    # ---- nearest upsample x2: single broadcast + reshape ----
    x_up = jnp.broadcast_to(
        x_cl[:, :, None, :, None, :, None, :],
        (n, d, 2, h, 2, wdim, 2, cin)).reshape(n, do, ho, wo, cin)

    # ---- zero pad for the 3x3x3 taps, flatten (H, W), cast to bf16 ----
    xp = jnp.pad(x_up, ((0, 0), (1, 1), (1, 2), (1, 1), (0, 0)))
    xpf = xp.reshape(n, dp, plane, cin).astype(jnp.bfloat16)

    # ---- weights: (Cout, Cin, kd, kh, kw) -> (kd, kh*3+kw, Cin, Cout), bf16 ----
    wk = jnp.transpose(w, (2, 3, 4, 1, 0)).reshape(3, 9, cin, cout).astype(jnp.bfloat16)
    b2 = b.reshape(1, cout).astype(jnp.float32)

    # validity mask over flattened plane rows: (row mod Wp) < Wo
    mask = ((jnp.arange(l_rows, dtype=jnp.int32) % wp) < wo)
    mask = mask.astype(jnp.float32).reshape(l_rows, 1)

    # ---- fused conv + bias + partial moments (Pallas) ----
    y, ps, pq = _conv3x3_bias_moments(
        xpf, wk, b2, mask,
        n=n, do=do, plane=plane, l_rows=l_rows, cin=cin, cout=cout, wp=wp)

    # ---- tiny (N, Do, Cout) -> (N, Cout) reduction for the instance-norm stats ----
    cnt = float(do * ho * wo)
    s = jnp.sum(ps, axis=1)                       # (N, 1, Cout)
    q = jnp.sum(pq, axis=1)
    mu = s / cnt
    var = jnp.maximum(q / cnt - mu * mu, 0.0)     # biased variance, as in PyTorch
    inv = lax.rsqrt(var + EPS)

    # ---- normalize + LeakyReLU (Pallas) ----
    z = _inst_norm_lrelu(y, mu, inv, n=n, do=do, l_rows=l_rows, cout=cout)

    # ---- exit: drop W padding + back to NCDHW in one fused slice+transpose ----
    z = z.reshape(n, do, ho, wp, cout)[:, :, :, :wo, :]
    return jnp.transpose(z, (0, 4, 1, 2, 3))


# -----------------------------------------------------------------------------
# Pure-JAX reference (f32) for a sanity check.
# -----------------------------------------------------------------------------
def _reference_up_conv(x, w, b):
    xu = jnp.repeat(jnp.repeat(jnp.repeat(x, 2, axis=2), 2, axis=3), 2, axis=4)
    y = lax.conv_general_dilated(
        xu, w, window_strides=(1, 1, 1),
        padding=((1, 1), (1, 1), (1, 1)),
        dimension_numbers=("NCDHW", "OIDHW", "NCDHW"),
        precision=lax.Precision.HIGHEST) + b.reshape(1, -1, 1, 1, 1)
    mu = jnp.mean(y, axis=(2, 3, 4), keepdims=True)
    var = jnp.mean(jnp.square(y - mu), axis=(2, 3, 4), keepdims=True)
    z = (y - mu) * lax.rsqrt(var + EPS)
    return jnp.where(z >= 0.0, z, NEG_SLOPE * z)


if __name__ == "__main__":
    N, CH_IN, CH_OUT = 2, 32, 16
    D = H = W = 8                       # upsampled to 16^3 inside the block

    key = jax.random.PRNGKey(0)
    kx, kw_, kb = jax.random.split(key, 3)
    x = jax.random.normal(kx, (N, CH_IN, D, H, W), jnp.float32)
    fan_in = CH_IN * 27
    bound = 1.0 / (fan_in ** 0.5)
    w = jax.random.uniform(kw_, (CH_OUT, CH_IN, 3, 3, 3), jnp.float32, -bound, bound)
    b = jax.random.uniform(kb, (CH_OUT,), jnp.float32, -bound, bound)

    fwd = jax.jit(up_conv_forward)
    out = jax.block_until_ready(fwd(x, w, b))

    assert out.shape == (N, CH_OUT, 2 * D, 2 * H, 2 * W), out.shape
    assert bool(jnp.all(jnp.isfinite(out)))

    ref = _reference_up_conv(x, w, b)
    err = float(jnp.max(jnp.abs(out - ref)))
    assert err < 5e-2, f"max abs error vs reference: {err}"
    print("KERNEL_OK")
</pallas_src>

<mosaic_0001>
module attributes {stable_mosaic.version = 11 : i64} {
  func.func @_conv_tap_kernel(%arg0: i32, %arg1: i32, %arg2: i32, %arg3: memref<1x1x342x32xbf16, #tpu.memory_space<vmem>>, %arg4: memref<1x9x32x16xbf16, #tpu.memory_space<vmem>>, %arg5: memref<1x16xf32, #tpu.memory_space<vmem>>, %arg6: memref<288x1xf32, #tpu.memory_space<vmem>>, %arg7: memref<1x1x288x16xbf16, #tpu.memory_space<vmem>>, %arg8: memref<1x1x1x16xf32, #tpu.memory_space<vmem>>, %arg9: memref<1x1x1x16xf32, #tpu.memory_space<vmem>>, %arg10: memref<288x16xf32, #tpu.memory_space<vmem>>) attributes {dimension_semantics = [#tpu.dimension_semantics<parallel>, #tpu.dimension_semantics<parallel>, #tpu.dimension_semantics<arbitrary>], iteration_bounds = array<i64: 2, 16, 3>, scalar_prefetch = 0 : i64, scratch_operands = 1 : i64, tpu.core_type = #tpu.core_type<tc>, window_params = [{transform_indices = @transform_0, window_bounds = array<i64: 1, 1, 342, 32>}, {transform_indices = @transform_1, window_bounds = array<i64: 1, 9, 32, 16>}, {pipeline_mode = #tpu.pipeline_mode<synchronous>, transform_indices = @transform_2, window_bounds = array<i64: 1, 16>}, {pipeline_mode = #tpu.pipeline_mode<synchronous>, transform_indices = @transform_3, window_bounds = array<i64: 288, 1>}, {transform_indices = @transform_4, window_bounds = array<i64: 1, 1, 288, 16>}, {transform_indices = @transform_5, window_bounds = array<i64: 1, 1, 1, 16>}, {transform_indices = @transform_6, window_bounds = array<i64: 1, 1, 1, 16>}]} {
    %c0_i32 = arith.constant 0 : i32
    %0 = arith.cmpi eq, %arg2, %c0_i32 : i32
    %1 = arith.extui %0 : i1 to i32
    %c0_i32_0 = arith.constant 0 : i32
    %2 = arith.cmpi ne, %1, %c0_i32_0 : i32
    scf.if %2 {
      %c0_103 = arith.constant 0 : index
      %c0_104 = arith.constant 0 : index
      %78 = vector.load %arg5[%c0_103, %c0_104] : memref<1x16xf32, #tpu.memory_space<vmem>>, vector<1x16xf32>
      %79 = vector.shape_cast %78 : vector<1x16xf32> to vector<1x16xf32>
      %80 = vector.broadcast %79 : vector<1x16xf32> to vector<288x16xf32>
      %c0_105 = arith.constant 0 : index
      %c0_106 = arith.constant 0 : index
      %81 = vector.load %arg10[%c0_105, %c0_106] : memref<288x16xf32, #tpu.memory_space<vmem>>, vector<288x16xf32>
      tpu.vector_store %arg10[%c0_105, %c0_106], %80 {strides = array<i32>} : memref<288x16xf32, #tpu.memory_space<vmem>>, vector<288x16xf32>,
    } else {
    }
    %c0 = arith.constant 0 : index
    %c0_1 = arith.constant 0 : index
    %c0_2 = arith.constant 0 : index
    %c0_3 = arith.constant 0 : index
    %3 = vector.load %arg3[%c0, %c0_1, %c0_2, %c0_3] : memref<1x1x342x32xbf16, #tpu.memory_space<vmem>>, vector<1x1x288x32xbf16>
    %4 = vector.shape_cast %3 : vector<1x1x288x32xbf16> to vector<288x32xbf16>
    %c0_4 = arith.constant 0 : index
    %c0_5 = arith.constant 0 : index
    %5 = vector.load %arg10[%c0_4, %c0_5] : memref<288x16xf32, #tpu.memory_space<vmem>>, vector<288x16xf32>
    %c0_6 = arith.constant 0 : index
    %c0_7 = arith.constant 0 : index
    %c0_8 = arith.constant 0 : index
    %c0_9 = arith.constant 0 : index
    %6 = vector.load %arg4[%c0_6, %c0_7, %c0_8, %c0_9] : memref<1x9x32x16xbf16, #tpu.memory_space<vmem>>, vector<1x1x32x16xbf16>
    %7 = vector.shape_cast %6 : vector<1x1x32x16xbf16> to vector<32x16xbf16>
    %cst = arith.constant dense<0.000000e+00> : vector<288x16xf32>
    %8 = tpu.matmul %4, %7, %cst {dimension_numbers = #tpu.dot_dimension_numbers<[1], [0], [0], [1], [0, 0, 1, 1], [], []>} : vector<288x32xbf16>, vector<32x16xbf16>, vector<288x16xf32> -> vector<288x16xf32>
    %9 = arith.addf %5, %8 : vector<288x16xf32>
    %c0_10 = arith.constant 0 : index
    %c0_11 = arith.constant 0 : index
    %10 = vector.load %arg10[%c0_10, %c0_11] : memref<288x16xf32, #tpu.memory_space<vmem>>, vector<288x16xf32>
    tpu.vector_store %arg10[%c0_10, %c0_11], %9 {strides = array<i32>} : memref<288x16xf32, #tpu.memory_space<vmem>>, vector<288x16xf32>,
    %c0_12 = arith.constant 0 : index
    %c0_13 = arith.constant 0 : index
    %c1 = arith.constant 1 : index
    %c0_14 = arith.constant 0 : index
    %11 = vector.load %arg3[%c0_12, %c0_13, %c1, %c0_14] : memref<1x1x342x32xbf16, #tpu.memory_space<vmem>>, vector<1x1x288x32xbf16>
    %12 = vector.shape_cast %11 : vector<1x1x288x32xbf16> to vector<288x32xbf16>
    %c0_15 = arith.constant 0 : index
    %c0_16 = arith.constant 0 : index
    %13 = vector.load %arg10[%c0_15, %c0_16] : memref<288x16xf32, #tpu.memory_space<vmem>>, vector<288x16xf32>
    %c0_17 = arith.constant 0 : index
    %c1_18 = arith.constant 1 : index
    %c0_19 = arith.constant 0 : index
    %c0_20 = arith.constant 0 : index
    %14 = vector.load %arg4[%c0_17, %c1_18, %c0_19, %c0_20] : memref<1x9x32x16xbf16, #tpu.memory_space<vmem>>, vector<1x1x32x16xbf16>
    %15 = vector.shape_cast %14 : vector<1x1x32x16xbf16> to vector<32x16xbf16>
    %cst_21 = arith.constant dense<0.000000e+00> : vector<288x16xf32>
    %16 = tpu.matmul %12, %15, %cst_21 {dimension_numbers = #tpu.dot_dimension_numbers<[1], [0], [0], [1], [0, 0, 1, 1], [], []>} : vector<288x32xbf16>, vector<32x16xbf16>, vector<288x16xf32> -> vector<288x16xf32>
    %17 = arith.addf %13, %16 : vector<288x16xf32>
    %c0_22 = arith.constant 0 : index
    %c0_23 = arith.constant 0 : index
    %18 = vector.load %arg10[%c0_22, %c0_23] : memref<288x16xf32, #tpu.memory_space<vmem>>, vector<288x16xf32>
    tpu.vector_store %arg10[%c0_22, %c0_23], %17 {strides = array<i32>} : memref<288x16xf32, #tpu.memory_space<vmem>>, vector<288x16xf32>,
    %c0_24 = arith.constant 0 : index
    %c0_25 = arith.constant 0 : index
    %c2 = arith.constant 2 : index
    %c0_26 = arith.constant 0 : index
    %19 = vector.load %arg3[%c0_24, %c0_25, %c2, %c0_26] : memref<1x1x342x32xbf16, #tpu.memory_space<vmem>>, vector<1x1x288x32xbf16>
    %20 = vector.shape_cast %19 : vector<1x1x288x32xbf16> to vector<288x32xbf16>
    %c0_27 = arith.constant 0 : index
    %c0_28 = arith.constant 0 : index
    %21 = vector.load %arg10[%c0_27, %c0_28] : memref<288x16xf32, #tpu.memory_space<vmem>>, vector<288x16xf32>
    %c0_29 = arith.constant 0 : index
    %c2_30 = arith.constant 2 : index
    %c0_31 = arith.constant 0 : index
    %c0_32 = arith.constant 0 : index
    %22 = vector.load %arg4[%c0_29, %c2_30, %c0_31, %c0_32] : memref<1x9x32x16xbf16, #tpu.memory_space<vmem>>, vector<1x1x32x16xbf16>
    %23 = vector.shape_cast %22 : vector<1x1x32x16xbf16> to vector<32x16xbf16>
    %cst_33 = arith.constant dense<0.000000e+00> : vector<288x16xf32>
    %24 = tpu.matmul %20, %23, %cst_33 {dimension_numbers = #tpu.dot_dimension_numbers<[1], [0], [0], [1], [0, 0, 1, 1], [], []>} : vector<288x32xbf16>, vector<32x16xbf16>, vector<288x16xf32> -> vector<288x16xf32>
    %25 = arith.addf %21, %24 : vector<288x16xf32>
    %c0_34 = arith.constant 0 : index
    %c0_35 = arith.constant 0 : index
    %26 = vector.load %arg10[%c0_34, %c0_35] : memref<288x16xf32, #tpu.memory_space<vmem>>, vector<288x16xf32>
    tpu.vector_store %arg10[%c0_34, %c0_35], %25 {strides = array<i32>} : memref<288x16xf32, #tpu.memory_space<vmem>>, vector<288x16xf32>,
    %c0_36 = arith.constant 0 : index
    %c0_37 = arith.constant 0 : index
    %c18 = arith.constant 18 : index
    %c0_38 = arith.constant 0 : index
    %27 = vector.load %arg3[%c0_36, %c0_37, %c18, %c0_38] : memref<1x1x342x32xbf16, #tpu.memory_space<vmem>>, vector<1x1x288x32xbf16>
    %28 = vector.shape_cast %27 : vector<1x1x288x32xbf16> to vector<288x32xbf16>
    %c0_39 = arith.constant 0 : index
    %c0_40 = arith.constant 0 : index
    %29 = vector.load %arg10[%c0_39, %c0_40] : memref<288x16xf32, #tpu.memory_space<vmem>>, vector<288x16xf32>
    %c0_41 = arith.constant 0 : index
    %c3 = arith.constant 3 : index
    %c0_42 = arith.constant 0 : index
    %c0_43 = arith.constant 0 : index
    %30 = vector.load %arg4[%c0_41, %c3, %c0_42, %c0_43] : memref<1x9x32x16xbf16, #tpu.memory_space<vmem>>, vector<1x1x32x16xbf16>
    %31 = vector.shape_cast %30 : vector<1x1x32x16xbf16> to vector<32x16xbf16>
    %cst_44 = arith.constant dense<0.000000e+00> : vector<288x16xf32>
    %32 = tpu.matmul %28, %31, %cst_44 {dimension_numbers = #tpu.dot_dimension_numbers<[1], [0], [0], [1], [0, 0, 1, 1], [], []>} : vector<288x32xbf16>, vector<32x16xbf16>, vector<288x16xf32> -> vector<288x16xf32>
    %33 = arith.addf %29, %32 : vector<288x16xf32>
    %c0_45 = arith.constant 0 : index
    %c0_46 = arith.constant 0 : index
    %34 = vector.load %arg10[%c0_45, %c0_46] : memref<288x16xf32, #tpu.memory_space<vmem>>, vector<288x16xf32>
    tpu.vector_store %arg10[%c0_45, %c0_46], %33 {strides = array<i32>} : memref<288x16xf32, #tpu.memory_space<vmem>>, vector<288x16xf32>,
    %c0_47 = arith.constant 0 : index
    %c0_48 = arith.constant 0 : index
    %c19 = arith.constant 19 : index
    %c0_49 = arith.constant 0 : index
    %35 = vector.load %arg3[%c0_47, %c0_48, %c19, %c0_49] : memref<1x1x342x32xbf16, #tpu.memory_space<vmem>>, vector<1x1x288x32xbf16>
    %36 = vector.shape_cast %35 : vector<1x1x288x32xbf16> to vector<288x32xbf16>
    %c0_50 = arith.constant 0 : index
    %c0_51 = arith.constant 0 : index
    %37 = vector.load %arg10[%c0_50, %c0_51] : memref<288x16xf32, #tpu.memory_space<vmem>>, vector<288x16xf32>
    %c0_52 = arith.constant 0 : index
    %c4 = arith.constant 4 : index
    %c0_53 = arith.constant 0 : index
    %c0_54 = arith.constant 0 : index
    %38 = vector.load %arg4[%c0_52, %c4, %c0_53, %c0_54] : memref<1x9x32x16xbf16, #tpu.memory_space<vmem>>, vector<1x1x32x16xbf16>
    %39 = vector.shape_cast %38 : vector<1x1x32x16xbf16> to vector<32x16xbf16>
    %cst_55 = arith.constant dense<0.000000e+00> : vector<288x16xf32>
    %40 = tpu.matmul %36, %39, %cst_55 {dimension_numbers = #tpu.dot_dimension_numbers<[1], [0], [0], [1], [0, 0, 1, 1], [], []>} : vector<288x32xbf16>, vector<32x16xbf16>, vector<288x16xf32> -> vector<288x16xf32>
    %41 = arith.addf %37, %40 : vector<288x16xf32>
    %c0_56 = arith.constant 0 : index
    %c0_57 = arith.constant 0 : index
    %42 = vector.load %arg10[%c0_56, %c0_57] : memref<288x16xf32, #tpu.memory_space<vmem>>, vector<288x16xf32>
    tpu.vector_store %arg10[%c0_56, %c0_57], %41 {strides = array<i32>} : memref<288x16xf32, #tpu.memory_space<vmem>>, vector<288x16xf32>,
    %c0_58 = arith.constant 0 : index
    %c0_59 = arith.constant 0 : index
    %c20 = arith.constant 20 : index
    %c0_60 = arith.constant 0 : index
    %43 = vector.load %arg3[%c0_58, %c0_59, %c20, %c0_60] : memref<1x1x342x32xbf16, #tpu.memory_space<vmem>>, vector<1x1x288x32xbf16>
    %44 = vector.shape_cast %43 : vector<1x1x288x32xbf16> to vector<288x32xbf16>
    %c0_61 = arith.constant 0 : index
    %c0_62 = arith.constant 0 : index
    %45 = vector.load %arg10[%c0_61, %c0_62] : memref<288x16xf32, #tpu.memory_space<vmem>>, vector<288x16xf32>
    %c0_63 = arith.constant 0 : index
    %c5 = arith.constant 5 : index
    %c0_64 = arith.constant 0 : index
    %c0_65 = arith.constant 0 : index
    %46 = vector.load %arg4[%c0_63, %c5, %c0_64, %c0_65] : memref<1x9x32x16xbf16, #tpu.memory_space<vmem>>, vector<1x1x32x16xbf16>
    %47 = vector.shape_cast %46 : vector<1x1x32x16xbf16> to vector<32x16xbf16>
    %cst_66 = arith.constant dense<0.000000e+00> : vector<288x16xf32>
    %48 = tpu.matmul %44, %47, %cst_66 {dimension_numbers = #tpu.dot_dimension_numbers<[1], [0], [0], [1], [0, 0, 1, 1], [], []>} : vector<288x32xbf16>, vector<32x16xbf16>, vector<288x16xf32> -> vector<288x16xf32>
    %49 = arith.addf %45, %48 : vector<288x16xf32>
    %c0_67 = arith.constant 0 : index
    %c0_68 = arith.constant 0 : index
    %50 = vector.load %arg10[%c0_67, %c0_68] : memref<288x16xf32, #tpu.memory_space<vmem>>, vector<288x16xf32>
    tpu.vector_store %arg10[%c0_67, %c0_68], %49 {strides = array<i32>} : memref<288x16xf32, #tpu.memory_space<vmem>>, vector<288x16xf32>,
    %c0_69 = arith.constant 0 : index
    %c0_70 = arith.constant 0 : index
    %c36 = arith.constant 36 : index
    %c0_71 = arith.constant 0 : index
    %51 = vector.load %arg3[%c0_69, %c0_70, %c36, %c0_71] : memref<1x1x342x32xbf16, #tpu.memory_space<vmem>>, vector<1x1x288x32xbf16>
    %52 = vector.shape_cast %51 : vector<1x1x288x32xbf16> to vector<288x32xbf16>
    %c0_72 = arith.constant 0 : index
    %c0_73 = arith.constant 0 : index
    %53 = vector.load %arg10[%c0_72, %c0_73] : memref<288x16xf32, #tpu.memory_space<vmem>>, vector<288x16xf32>
    %c0_74 = arith.constant 0 : index
    %c6 = arith.constant 6 : index
    %c0_75 = arith.constant 0 : index
    %c0_76 = arith.constant 0 : index
    %54 = vector.load %arg4[%c0_74, %c6, %c0_75, %c0_76] : memref<1x9x32x16xbf16, #tpu.memory_space<vmem>>, vector<1x1x32x16xbf16>
    %55 = vector.shape_cast %54 : vector<1x1x32x16xbf16> to vector<32x16xbf16>
    %cst_77 = arith.constant dense<0.000000e+00> : vector<288x16xf32>
    %56 = tpu.matmul %52, %55, %cst_77 {dimension_numbers = #tpu.dot_dimension_numbers<[1], [0], [0], [1], [0, 0, 1, 1], [], []>} : vector<288x32xbf16>, vector<32x16xbf16>, vector<288x16xf32> -> vector<288x16xf32>
    %57 = arith.addf %53, %56 : vector<288x16xf32>
    %c0_78 = arith.constant 0 : index
    %c0_79 = arith.constant 0 : index
    %58 = vector.load %arg10[%c0_78, %c0_79] : memref<288x16xf32, #tpu.memory_space<vmem>>, vector<288x16xf32>
    tpu.vector_store %arg10[%c0_78, %c0_79], %57 {strides = array<i32>} : memref<288x16xf32, #tpu.memory_space<vmem>>, vector<288x16xf32>,
    %c0_80 = arith.constant 0 : index
    %c0_81 = arith.constant 0 : index
    %c37 = arith.constant 37 : index
    %c0_82 = arith.constant 0 : index
    %59 = vector.load %arg3[%c0_80, %c0_81, %c37, %c0_82] : memref<1x1x342x32xbf16, #tpu.memory_space<vmem>>, vector<1x1x288x32xbf16>
    %60 = vector.shape_cast %59 : vector<1x1x288x32xbf16> to vector<288x32xbf16>
    %c0_83 = arith.constant 0 : index
    %c0_84 = arith.constant 0 : index
    %61 = vector.load %arg10[%c0_83, %c0_84] : memref<288x16xf32, #tpu.memory_space<vmem>>, vector<288x16xf32>
    %c0_85 = arith.constant 0 : index
    %c7 = arith.constant 7 : index
    %c0_86 = arith.constant 0 : index
    %c0_87 = arith.constant 0 : index
    %62 = vector.load %arg4[%c0_85, %c7, %c0_86, %c0_87] : memref<1x9x32x16xbf16, #tpu.memory_space<vmem>>, vector<1x1x32x16xbf16>
    %63 = vector.shape_cast %62 : vector<1x1x32x16xbf16> to vector<32x16xbf16>
    %cst_88 = arith.constant dense<0.000000e+00> : vector<288x16xf32>
    %64 = tpu.matmul %60, %63, %cst_88 {dimension_numbers = #tpu.dot_dimension_numbers<[1], [0], [0], [1], [0, 0, 1, 1], [], []>} : vector<288x32xbf16>, vector<32x16xbf16>, vector<288x16xf32> -> vector<288x16xf32>
    %65 = arith.addf %61, %64 : vector<288x16xf32>
    %c0_89 = arith.constant 0 : index
    %c0_90 = arith.constant 0 : index
    %66 = vector.load %arg10[%c0_89, %c0_90] : memref<288x16xf32, #tpu.memory_space<vmem>>, vector<288x16xf32>
    tpu.vector_store %arg10[%c0_89, %c0_90], %65 {strides = array<i32>} : memref<288x16xf32, #tpu.memory_space<vmem>>, vector<288x16xf32>,
    %c0_91 = arith.constant 0 : index
    %c0_92 = arith.constant 0 : index
    %c38 = arith.constant 38 : index
    %c0_93 = arith.constant 0 : index
    %67 = vector.load %arg3[%c0_91, %c0_92, %c38, %c0_93] : memref<1x1x342x32xbf16, #tpu.memory_space<vmem>>, vector<1x1x288x32xbf16>
    %68 = vector.shape_cast %67 : vector<1x1x288x32xbf16> to vector<288x32xbf16>
    %c0_94 = arith.constant 0 : index
    %c0_95 = arith.constant 0 : index
    %69 = vector.load %arg10[%c0_94, %c0_95] : memref<288x16xf32, #tpu.memory_space<vmem>>, vector<288x16xf32>
    %c0_96 = arith.constant 0 : index
    %c8 = arith.constant 8 : index
    %c0_97 = arith.constant 0 : index
    %c0_98 = arith.constant 0 : index
    %70 = vector.load %arg4[%c0_96, %c8, %c0_97, %c0_98] : memref<1x9x32x16xbf16, #tpu.memory_space<vmem>>, vector<1x1x32x16xbf16>
    %71 = vector.shape_cast %70 : vector<1x1x32x16xbf16> to vector<32x16xbf16>
    %cst_99 = arith.constant dense<0.000000e+00> : vector<288x16xf32>
    %72 = tpu.matmul %68, %71, %cst_99 {dimension_numbers = #tpu.dot_dimension_numbers<[1], [0], [0], [1], [0, 0, 1, 1], [], []>} : vector<288x32xbf16>, vector<32x16xbf16>, vector<288x16xf32> -> vector<288x16xf32>
    %73 = arith.addf %69, %72 : vector<288x16xf32>
    %c0_100 = arith.constant 0 : index
    %c0_101 = arith.constant 0 : index
    %74 = vector.load %arg10[%c0_100, %c0_101] : memref<288x16xf32, #tpu.memory_space<vmem>>, vector<288x16xf32>
    tpu.vector_store %arg10[%c0_100, %c0_101], %73 {strides = array<i32>} : memref<288x16xf32, #tpu.memory_space<vmem>>, vector<288x16xf32>,
    %c2_i32 = arith.constant 2 : i32
    %75 = arith.cmpi eq, %arg2, %c2_i32 : i32
    %76 = arith.extui %75 : i1 to i32
    %c0_i32_102 = arith.constant 0 : i32
    %77 = arith.cmpi ne, %76, %c0_i32_102 : i32
    scf.if %77 {
      %c0_103 = arith.constant 0 : index
      %c0_104 = arith.constant 0 : index
      %78 = vector.load %arg10[%c0_103, %c0_104] : memref<288x16xf32, #tpu.memory_space<vmem>>, vector<288x16xf32>
      %79 = arith.truncf %78 : vector<288x16xf32> to vector<288x16xbf16>
      %c0_105 = arith.constant 0 : index
      %c0_106 = arith.constant 0 : index
      %c0_107 = arith.constant 0 : index
      %c0_108 = arith.constant 0 : index
      %80 = vector.load %arg7[%c0_105, %c0_106, %c0_107, %c0_108] : memref<1x1x288x16xbf16, #tpu.memory_space<vmem>>, vector<1x1x288x16xbf16>
      %81 = vector.shape_cast %80 : vector<1x1x288x16xbf16> to vector<288x16xbf16>
      %82 = vector.shape_cast %79 : vector<288x16xbf16> to vector<1x1x288x16xbf16>
      tpu.vector_store %arg7[%c0_105, %c0_106, %c0_107, %c0_108], %82 {strides = array<i32>} : memref<1x1x288x16xbf16, #tpu.memory_space<vmem>>, vector<1x1x288x16xbf16>,
      %c0_109 = arith.constant 0 : index
      %c0_110 = arith.constant 0 : index
      %83 = vector.load %arg6[%c0_109, %c0_110] : memref<288x1xf32, #tpu.memory_space<vmem>>, vector<288x1xf32>
      %84 = vector.broadcast %83 : vector<288x1xf32> to vector<288x16xf32>
      %85 = arith.mulf %78, %84 : vector<288x16xf32>
      %cst_111 = arith.constant dense<0.000000e+00> : vector<16xf32>
      %86 = vector.multi_reduction <add>, %85, %cst_111 [0] : vector<288x16xf32> to vector<16xf32>
      %87 = vector.shape_cast %86 : vector<16xf32> to vector<1x16xf32>
      %c0_112 = arith.constant 0 : index
      %c0_113 = arith.constant 0 : index
      %c0_114 = arith.constant 0 : index
      %c0_115 = arith.constant 0 : index
      %88 = vector.load %arg8[%c0_112, %c0_113, %c0_114, %c0_115] : memref<1x1x1x16xf32, #tpu.memory_space<vmem>>, vector<1x1x1x16xf32>
      %89 = vector.shape_cast %88 : vector<1x1x1x16xf32> to vector<1x16xf32>
      %90 = vector.shape_cast %87 : vector<1x16xf32> to vector<1x1x1x16xf32>
      tpu.vector_store %arg8[%c0_112, %c0_113, %c0_114, %c0_115], %90 {strides = array<i32>} : memref<1x1x1x16xf32, #tpu.memory_space<vmem>>, vector<1x1x1x16xf32>,
      %91 = arith.mulf %85, %85 : vector<288x16xf32>
      %cst_116 = arith.constant dense<0.000000e+00> : vector<16xf32>
      %92 = vector.multi_reduction <add>, %91, %cst_116 [0] : vector<288x16xf32> to vector<16xf32>
      %93 = vector.shape_cast %92 : vector<16xf32> to vector<1x16xf32>
      %c0_117 = arith.constant 0 : index
      %c0_118 = arith.constant 0 : index
      %c0_119 = arith.constant 0 : index
      %c0_120 = arith.constant 0 : index
      %94 = vector.load %arg9[%c0_117, %c0_118, %c0_119, %c0_120] : memref<1x1x1x16xf32, #tpu.memory_space<vmem>>, vector<1x1x1x16xf32>
      %95 = vector.shape_cast %94 : vector<1x1x1x16xf32> to vector<1x16xf32>
      %96 = vector.shape_cast %93 : vector<1x16xf32> to vector<1x1x1x16xf32>
      tpu.vector_store %arg9[%c0_117, %c0_118, %c0_119, %c0_120], %96 {strides = array<i32>} : memref<1x1x1x16xf32, #tpu.memory_space<vmem>>, vector<1x1x1x16xf32>,
    } else {
    }
    return
  }
  func.func @transform_0(%arg0: i32, %arg1: i32, %arg2: i32) -> (i32, i32, i32, i32) {
    %0 = arith.addi %arg1, %arg2 : i32
    %c0_i32 = arith.constant 0 : i32
    %c0_i32_0 = arith.constant 0 : i32
    %c0_i32_1 = arith.constant 0 : i32
    return %arg0, %0, %c0_i32, %c0_i32_0 : i32, i32, i32, i32
  }
  func.func @transform_1(%arg0: i32, %arg1: i32, %arg2: i32) -> (i32, i32, i32, i32) {
    %c0_i32 = arith.constant 0 : i32
    %c0_i32_0 = arith.constant 0 : i32
    %c0_i32_1 = arith.constant 0 : i32
    %c0_i32_2 = arith.constant 0 : i32
    return %arg2, %c0_i32, %c0_i32_0, %c0_i32_1 : i32, i32, i32, i32
  }
  func.func @transform_2(%arg0: i32, %arg1: i32, %arg2: i32) -> (i32, i32) {
    %c0_i32 = arith.constant 0 : i32
    %c0_i32_0 = arith.constant 0 : i32
    %c0_i32_1 = arith.constant 0 : i32
    return %c0_i32, %c0_i32_0 : i32, i32
  }
  func.func @transform_3(%arg0: i32, %arg1: i32, %arg2: i32) -> (i32, i32) {
    %c0_i32 = arith.constant 0 : i32
    %c0_i32_0 = arith.constant 0 : i32
    %c0_i32_1 = arith.constant 0 : i32
    return %c0_i32, %c0_i32_0 : i32, i32
  }
  func.func @transform_4(%arg0: i32, %arg1: i32, %arg2: i32) -> (i32, i32, i32, i32) {
    %c0_i32 = arith.constant 0 : i32
    %c0_i32_0 = arith.constant 0 : i32
    %c0_i32_1 = arith.constant 0 : i32
    return %arg0, %arg1, %c0_i32, %c0_i32_0 : i32, i32, i32, i32
  }
  func.func @transform_5(%arg0: i32, %arg1: i32, %arg2: i32) -> (i32, i32, i32, i32) {
    %c0_i32 = arith.constant 0 : i32
    %c0_i32_0 = arith.constant 0 : i32
    %c0_i32_1 = arith.constant 0 : i32
    return %arg0, %arg1, %c0_i32, %c0_i32_0 : i32, i32, i32, i32
  }
  func.func @transform_6(%arg0: i32, %arg1: i32, %arg2: i32) -> (i32, i32, i32, i32) {
    %c0_i32 = arith.constant 0 : i32
    %c0_i32_0 = arith.constant 0 : i32
    %c0_i32_1 = arith.constant 0 : i32
    return %arg0, %arg1, %c0_i32, %c0_i32_0 : i32, i32, i32, i32
  }
}

module attributes {stable_mosaic.version = 11 : i64} {
  func.func @_norm_lrelu_kernel(%arg0: i32, %arg1: i32, %arg2: memref<1x1x288x16xbf16, #tpu.memory_space<vmem>>, %arg3: memref<1x1x16xf32, #tpu.memory_space<vmem>>, %arg4: memref<1x1x16xf32, #tpu.memory_space<vmem>>, %arg5: memref<1x1x288x16xf32, #tpu.memory_space<vmem>>) attributes {dimension_semantics = [#tpu.dimension_semantics<parallel>, #tpu.dimension_semantics<parallel>], iteration_bounds = array<i64: 2, 16>, scalar_prefetch = 0 : i64, scratch_operands = 0 : i64, tpu.core_type = #tpu.core_type<tc>, window_params = [{transform_indices = @transform_0, window_bounds = array<i64: 1, 1, 288, 16>}, {transform_indices = @transform_1, window_bounds = array<i64: 1, 1, 16>}, {transform_indices = @transform_2, window_bounds = array<i64: 1, 1, 16>}, {transform_indices = @transform_3, window_bounds = array<i64: 1, 1, 288, 16>}]} {
    %c0 = arith.constant 0 : index
    %c0_0 = arith.constant 0 : index
    %c0_1 = arith.constant 0 : index
    %c0_2 = arith.constant 0 : index
    %0 = vector.load %arg2[%c0, %c0_0, %c0_1, %c0_2] : memref<1x1x288x16xbf16, #tpu.memory_space<vmem>>, vector<1x1x288x16xbf16>
    %1 = vector.shape_cast %0 : vector<1x1x288x16xbf16> to vector<288x16xbf16>
    %2 = arith.extf %1 : vector<288x16xbf16> to vector<288x16xf32>
    %c0_3 = arith.constant 0 : index
    %c0_4 = arith.constant 0 : index
    %c0_5 = arith.constant 0 : index
    %3 = vector.load %arg3[%c0_3, %c0_4, %c0_5] : memref<1x1x16xf32, #tpu.memory_space<vmem>>, vector<1x1x16xf32>
    %4 = vector.shape_cast %3 : vector<1x1x16xf32> to vector<1x16xf32>
    %5 = vector.broadcast %4 : vector<1x16xf32> to vector<288x16xf32>
    %6 = arith.subf %2, %5 : vector<288x16xf32>
    %c0_6 = arith.constant 0 : index
    %c0_7 = arith.constant 0 : index
    %c0_8 = arith.constant 0 : index
    %7 = vector.load %arg4[%c0_6, %c0_7, %c0_8] : memref<1x1x16xf32, #tpu.memory_space<vmem>>, vector<1x1x16xf32>
    %8 = vector.shape_cast %7 : vector<1x1x16xf32> to vector<1x16xf32>
    %9 = vector.broadcast %8 : vector<1x16xf32> to vector<288x16xf32>
    %10 = arith.mulf %6, %9 : vector<288x16xf32>
    %cst = arith.constant 0.000000e+00 : f32
    %11 = vector.broadcast %cst : f32 to vector<288x16xf32>
    %12 = arith.cmpf oge, %10, %11 : vector<288x16xf32>
    %cst_9 = arith.constant 0.00999999977 : f32
    %13 = vector.broadcast %cst_9 : f32 to vector<288x16xf32>
    %14 = arith.mulf %13, %10 : vector<288x16xf32>
    %15 = arith.select %12, %10, %14 : vector<288x16xi1>, vector<288x16xf32>
    %c0_10 = arith.constant 0 : index
    %c0_11 = arith.constant 0 : index
    %c0_12 = arith.constant 0 : index
    %c0_13 = arith.constant 0 : index
    %16 = vector.load %arg5[%c0_10, %c0_11, %c0_12, %c0_13] : memref<1x1x288x16xf32, #tpu.memory_space<vmem>>, vector<1x1x288x16xf32>
    %17 = vector.shape_cast %16 : vector<1x1x288x16xf32> to vector<288x16xf32>
    %18 = vector.shape_cast %15 : vector<288x16xf32> to vector<1x1x288x16xf32>
    tpu.vector_store %arg5[%c0_10, %c0_11, %c0_12, %c0_13], %18 {strides = array<i32>} : memref<1x1x288x16xf32, #tpu.memory_space<vmem>>, vector<1x1x288x16xf32>,
    return
  }
  func.func @transform_0(%arg0: i32, %arg1: i32) -> (i32, i32, i32, i32) {
    %c0_i32 = arith.constant 0 : i32
    %c0_i32_0 = arith.constant 0 : i32
    %c0_i32_1 = arith.constant 0 : i32
    return %arg0, %arg1, %c0_i32, %c0_i32_0 : i32, i32, i32, i32
  }
  func.func @transform_1(%arg0: i32, %arg1: i32) -> (i32, i32, i32) {
    %c0_i32 = arith.constant 0 : i32
    %c0_i32_0 = arith.constant 0 : i32
    %c0_i32_1 = arith.constant 0 : i32
    return %arg0, %c0_i32, %c0_i32_0 : i32, i32, i32
  }
  func.func @transform_2(%arg0: i32, %arg1: i32) -> (i32, i32, i32) {
    %c0_i32 = arith.constant 0 : i32
    %c0_i32_0 = arith.constant 0 : i32
    %c0_i32_1 = arith.constant 0 : i32
    return %arg0, %c0_i32, %c0_i32_0 : i32, i32, i32
  }
  func.func @transform_3(%arg0: i32, %arg1: i32) -> (i32, i32, i32, i32) {
    %c0_i32 = arith.constant 0 : i32
    %c0_i32_0 = arith.constant 0 : i32
    %c0_i32_1 = arith.constant 0 : i32
    return %arg0, %arg1, %c0_i32, %c0_i32_0 : i32, i32, i32, i32
  }
}

</mosaic_0001>

<llo_original>
// kernel: up_conv_forward.3
$region0: #{up_conv_forward.3}
  #allocation0 [shape = 'u32[]', space=smem, size = 0x4, offset = 0x4, fixed_abs, tag = 'smem constant byte address 0x4 - core index']
  #allocation1 [shape = 'u32[72,128]{1,0:T(1,128)}', space=vmem, size = 0x9000, scoped, tag = 'internal scratch']
  %s0 = inlined_call_operand.vmem [shape: bf16[2,16,288,16], index: 0, kind: input, shape index: {}]
  %s1 = inlined_call_operand.vmem [shape: f32[2,1,16], index: 1, kind: input, shape index: {}]
  %s2 = inlined_call_operand.vmem [shape: f32[2,1,16], index: 2, kind: input, shape index: {}]
  %s3 = inlined_call_operand.vmem [shape: f32[2,16,288,16], index: 3, kind: output, shape index: {}]
  %s4 = sld [smem:[#allocation0]]
  $region45: #{up_conv_forward.3} parent=0
    _
  %s6 = ssub.s32 1, %s4
  %s7 = scalar_select 0, %s6, %s4
  loop: start=0, step=1, limit=34
  $region2: #{up_conv_forward.3} parent=0 // loop_pre_header
    _
  $region3: #{up_conv_forward.3} parent=0 // loop_header
    %s9 = sphi 0, %s13
    %p10 = scmp.ge.s32.totalorder %s9, 34
    %s16 = sphi 0, %s28
    %s17 = sphi 0, %s24
    %s18 = sphi 0, %s16
    %s19 = sphi 0, %s17
    %s20 = sphi 0, %s18
    %s21 = sphi 0, %s19
    %s33 = sphi 0, %s35
    %s36 = sphi 0, %s33
    %s37 = sphi 0, %s36
    %s53 = sphi 0, %s37
    %s59 = sphi 0, %s61
    %s62 = sphi 0, %s59
    %s63 = sphi 0, %s62
    %s79 = sphi 0, %s63
    %s85 = sphi 0, %s87
    %s88 = sphi 0, %s85
    %s89 = sphi 0, %s88
    %s105 = sphi 0, %s89
    %s113 = sphi 0, %s115
    %s116 = sphi 0, %s113
    %s117 = sphi 0, %s116
    %s133 = sphi 0, %s117
  $region4: #{up_conv_forward.3} parent=0 // loop_header_branch
    %12 = sbr.rel (%p10) target = $region8
  $region5: #{up_conv_forward.3} parent=0 // loop_body
    %s14 = ssub.s32 %s9, 1
    %s15 = ssub.s32 %s9, 2
    %s22 = sadd.s32 1, %s17
    %p23 = scmp.ge.s32.totalorder %s22, 16
    %s24 = scalar_select %p23, 0, %s22
    %s25 = sadd.s32 1, %s16
    %s26 = scalar_select %p23, %s25, %s16
    %p27 = scmp.ge.s32.totalorder %s26, 2
    %s28 = scalar_select %p27, 0, %s26
    %s29 = ssub.s32 %s16, %s28
    %s30 = ssub.s32 %s17, %s24
    %s31 = sor.u32 %s29, %s30
    %p32 = scmp.eq.s32.totalorder %s31, 0
    %s34 = sadd.s32 %s33, 1
    %s35 = scalar_select %p32, %s33, %s34
    %p38 = pneg %p32
    %p39 = scmp.eq.s32.totalorder %s9, 31
    %p40 = por %p38, %p39
    %p41 = scmp.ne.s32.totalorder %s33, %s36
    %p42 = scmp.eq.s32.totalorder %s9, 0
    %p43 = por %p41, %p42
    %p44 = scmp.ne.s32.totalorder %s33, %s36
    %p45 = scmp.eq.s32.totalorder %s14, 31
    %p46 = por %p44, %p45
    %p47 = scmp.ne.s32.totalorder %s36, %s37
    %p48 = scmp.eq.s32.totalorder %s14, 0
    %p49 = por %p47, %p48
    %p50 = scmp.ne.s32.totalorder %s36, %s37
    %p51 = scmp.eq.s32.totalorder %s15, 31
    %p52 = por %p50, %p51
    %p54 = scmp.ne.s32.totalorder %s37, %s53
    %p55 = scmp.eq.s32.totalorder %s15, 0
    %p56 = por %p54, %p55
    %s57 = ssub.s32 %s16, %s28
    %p58 = scmp.eq.s32.totalorder %s57, 0
    %s60 = sadd.s32 %s59, 1
    %s61 = scalar_select %p58, %s59, %s60
    %p64 = pneg %p58
    %p65 = scmp.eq.s32.totalorder %s9, 31
    %p66 = por %p64, %p65
    %p67 = scmp.ne.s32.totalorder %s59, %s62
    %p68 = scmp.eq.s32.totalorder %s9, 0
    %p69 = por %p67, %p68
    %p70 = scmp.ne.s32.totalorder %s59, %s62
    %p71 = scmp.eq.s32.totalorder %s14, 31
    %p72 = por %p70, %p71
    %p73 = scmp.ne.s32.totalorder %s62, %s63
    %p74 = scmp.eq.s32.totalorder %s14, 0
    %p75 = por %p73, %p74
    %p76 = scmp.ne.s32.totalorder %s62, %s63
    %p77 = scmp.eq.s32.totalorder %s15, 31
    %p78 = por %p76, %p77
    %p80 = scmp.ne.s32.totalorder %s63, %s79
    %p81 = scmp.eq.s32.totalorder %s15, 0
    %p82 = por %p80, %p81
    %s83 = ssub.s32 %s16, %s28
    %p84 = scmp.eq.s32.totalorder %s83, 0
    %s86 = sadd.s32 %s85, 1
    %s87 = scalar_select %p84, %s85, %s86
    %p90 = pneg %p84
    %p91 = scmp.eq.s32.totalorder %s9, 31
    %p92 = por %p90, %p91
    %p93 = scmp.ne.s32.totalorder %s85, %s88
    %p94 = scmp.eq.s32.totalorder %s9, 0
    %p95 = por %p93, %p94
    %p96 = scmp.ne.s32.totalorder %s85, %s88
    %p97 = scmp.eq.s32.totalorder %s14, 31
    %p98 = por %p96, %p97
    %p99 = scmp.ne.s32.totalorder %s88, %s89
    %p100 = scmp.eq.s32.totalorder %s14, 0
    %p101 = por %p99, %p100
    %p102 = scmp.ne.s32.totalorder %s88, %s89
    %p103 = scmp.eq.s32.totalorder %s15, 31
    %p104 = por %p102, %p103
    %p106 = scmp.ne.s32.totalorder %s89, %s105
    %p107 = scmp.eq.s32.totalorder %s15, 0
    %p108 = por %p106, %p107
    %s109 = ssub.s32 %s16, %s28
    %s110 = ssub.s32 %s17, %s24
    %s111 = sor.u32 %s109, %s110
    %p112 = scmp.eq.s32.totalorder %s111, 0
    %s114 = sadd.s32 %s113, 1
    %s115 = scalar_select %p112, %s113, %s114
    %p118 = pneg %p112
    %p119 = scmp.eq.s32.totalorder %s9, 31
    %p120 = por %p118, %p119
    %p121 = scmp.ne.s32.totalorder %s113, %s116
    %p122 = scmp.eq.s32.totalorder %s9, 0
    %p123 = por %p121, %p122
    %p124 = scmp.ne.s32.totalorder %s113, %s116
    %p125 = scmp.eq.s32.totalorder %s14, 31
    %p126 = por %p124, %p125
    %p127 = scmp.ne.s32.totalorder %s116, %s117
    %p128 = scmp.eq.s32.totalorder %s14, 0
    %p129 = por %p127, %p128
    %p130 = scmp.ne.s32.totalorder %s116, %s117
    %p131 = scmp.eq.s32.totalorder %s15, 31
    %p132 = por %p130, %p131
    %p134 = scmp.ne.s32.totalorder %s117, %s133
    %p135 = scmp.eq.s32.totalorder %s15, 0
    %p136 = por %p134, %p135
    %p137 = scmp.le.s32.totalorder 1, %s9
    %p138 = scmp.lt.s32.totalorder %s9, 33
    %p139 = pnand %p137, %p138
    %p140 = pneg %p139
    // Predicated region
    $region9: #{up_conv_forward.3} parent=5 // pred_check
      _
    $region10: #{up_conv_forward.3} parent=5 // pred_check_branch
      %142 = sbr.rel (%p139) target = $region12
    $region11: #{up_conv_forward.3} parent=5 // pred_region
      %s143 = ssub.s32 %s9, 1
    $region12: #{up_conv_forward.3} parent=5 // pred_fallthru
      _
    %p144 = scmp.lt.s32.totalorder %s9, 32
    // Predicated region
    $region13: #{up_conv_forward.3} parent=5 // pred_check
      %p145 = pneg %p144
    $region14: #{up_conv_forward.3} parent=5 // pred_check_branch
      %147 = sbr.rel (%p145) target = $region16
    $region15: #{up_conv_forward.3} parent=5 // pred_region
      // Predicated region
      $region17: #{up_conv_forward.3} parent=15 // pred_check
        %p148 = pneg %p43
      $region18: #{up_conv_forward.3} parent=15 // pred_check_branch
        %150 = sbr.rel (%p148) target = $region20
      $region19: #{up_conv_forward.3} parent=15 // pred_region
        %p151 = scmp.lt.s32.totalorder %s16, 1
        %s152 = scalar_select %p151, %s16, 1
        %p153 = scmp.lt.s32.totalorder %s17, 15
        %s154 = scalar_select %p153, %s17, 15
        %s155 = smul.addr %s154, 36
        %s156 = smul.addr %s152, 576
        %s157 = sadd.s32 %s155, %s156
        %s158 = smul.addr %s157, 4
        %s159 = scalar_lea.vmem %s0, %s158
      $region20: #{up_conv_forward.3} parent=15 // pred_fallthru
        _
      // Predicated region
      $region21: #{up_conv_forward.3} parent=15 // pred_check
        %p160 = pneg %p69
      $region22: #{up_conv_forward.3} parent=15 // pred_check_branch
        %162 = sbr.rel (%p160) target = $region24
      $region23: #{up_conv_forward.3} parent=15 // pred_region
        %p163 = scmp.lt.s32.totalorder %s16, 1
        %s164 = scalar_select %p163, %s16, 1
        %s165 = scalar_lea.vmem %s1, %s164
      $region24: #{up_conv_forward.3} parent=15 // pred_fallthru
        _
      // Predicated region
      $region25: #{up_conv_forward.3} parent=15 // pred_check
        %p166 = pneg %p95
      $region26: #{up_conv_forward.3} parent=15 // pred_check_branch
        %168 = sbr.rel (%p166) target = $region28
      $region27: #{up_conv_forward.3} parent=15 // pred_region
        %p169 = scmp.lt.s32.totalorder %s16, 1
        %s170 = scalar_select %p169, %s16, 1
        %s171 = scalar_lea.vmem %s2, %s170
      $region28: #{up_conv_forward.3} parent=15 // pred_fallthru
        _
    $region16: #{up_conv_forward.3} parent=5 // pred_fallthru
      _
    %p172 = scmp.le.s32.totalorder 1, %s9
    %p173 = scmp.lt.s32.totalorder %s9, 33
    %p174 = pnand %p172, %p173
    %p175 = pneg %p174
    // Predicated region
    $region29: #{up_conv_forward.3} parent=5 // pred_check
      _
    $region30: #{up_conv_forward.3} parent=5 // pred_check_branch
      %177 = sbr.rel (%p174) target = $region32
    $region31: #{up_conv_forward.3} parent=5 // pred_region
      %s178 = ssub.s32 %s9, 1
      %p179 = scmp.lt.s32.totalorder %s18, 1
      %s180 = scalar_select %p179, %s18, 1
      %p181 = scmp.lt.s32.totalorder %s19, 15
      %s182 = scalar_select %p181, %s19, 15
      %s183 = smul.addr %s182, 36
      %s184 = smul.addr %s180, 576
      %s185 = sadd.s32 %s183, %s184
      %s186 = smul.addr %s185, 4
      %s187 = scalar_lea.vmem %s0, %s186
      %p188 = pneg %p49
      %p189 = pneg %p46
      %p190 = scmp.lt.s32.totalorder %s18, 1
      %s191 = scalar_select %p190, %s18, 1
      %s192 = scalar_lea.vmem %s1, %s191
      %p193 = pneg %p75
      %p194 = pneg %p72
      %p195 = scmp.lt.s32.totalorder %s18, 1
      %s196 = scalar_select %p195, %s18, 1
      %s197 = scalar_lea.vmem %s2, %s196
      %p198 = pneg %p101
      %p199 = pneg %p98
      %p200 = pneg %p129
      %p201 = pneg %p126
      %p202 = scmp.lt.s32.totalorder %s18, 1
      %s203 = scalar_select %p202, %s18, 1
      %p204 = scmp.lt.s32.totalorder %s19, 15
      %s205 = scalar_select %p204, %s19, 15
      %s206 = smul.addr %s205, 36
      %s207 = smul.addr %s203, 576
      %s208 = sadd.s32 %s206, %s207
      %s209 = smul.addr %s208, 8
      %s210 = scalar_lea.vmem %s3, %s209
      %p211 = scmp.lt.s32.totalorder %s18, 1
      %s212 = scalar_select %p211, %s18, 1
      %p213 = scmp.lt.s32.totalorder %s19, 15
      %s214 = scalar_select %p213, %s19, 15
      %s215 = smul.addr %s214, 36
      %s216 = smul.addr %s212, 576
      %s217 = sadd.s32 %s215, %s216
      %s218 = smul.addr %s217, 4
      %s219 = scalar_lea.vmem %s0, %s218
      %p220 = scmp.lt.s32.totalorder %s18, 1
      %s221 = scalar_select %p220, %s18, 1
      %s222 = scalar_lea.vmem %s1, %s221
      %p223 = scmp.lt.s32.totalorder %s18, 1
      %s224 = scalar_select %p223, %s18, 1
      %s225 = scalar_lea.vmem %s2, %s224
      %p226 = scmp.lt.s32.totalorder %s18, 1
      %s227 = scalar_select %p226, %s18, 1
      %p228 = scmp.lt.s32.totalorder %s19, 15
      %s229 = scalar_select %p228, %s19, 15
      %s230 = smul.addr %s229, 36
      %s231 = smul.addr %s227, 576
      %s232 = sadd.s32 %s230, %s231
      %s233 = smul.addr %s232, 8
      %s234 = scalar_lea.vmem %s3, %s233
      %v235 = vld [vmem:[%s219] sm:$0xf]
      %v236 = vld [vmem:[%s219 + $0x4] sm:$0xf]
      %v237 = vld [vmem:[%s219 + $0x8] sm:$0xf]
      %v238 = vld [vmem:[%s219 + $0xc] sm:$0xf]
      %v239 = vld [vmem:[%s219 + $0x10] sm:$0xf]
      %v240 = vld [vmem:[%s219 + $0x14] sm:$0xf]
      %v241 = vld [vmem:[%s219 + $0x18] sm:$0xf]
      %v242 = vld [vmem:[%s219 + $0x1c] sm:$0xf]
      %v243 = vld [vmem:[%s219 + $0x20] sm:$0xf]
      %v244 = vld [vmem:[%s219 + $0x24] sm:$0xf]
      %v245 = vld [vmem:[%s219 + $0x28] sm:$0xf]
      %v246 = vld [vmem:[%s219 + $0x2c] sm:$0xf]
      %v247 = vld [vmem:[%s219 + $0x30] sm:$0xf]
      %v248 = vld [vmem:[%s219 + $0x34] sm:$0xf]
      %v249 = vld [vmem:[%s219 + $0x38] sm:$0xf]
      %v250 = vld [vmem:[%s219 + $0x3c] sm:$0xf]
      %v251 = vld [vmem:[%s219 + $0x40] sm:$0xf]
      %v252 = vld [vmem:[%s219 + $0x44] sm:$0xf]
      %v253 = vld [vmem:[%s219 + $0x48] sm:$0xf]
      %v254 = vld [vmem:[%s219 + $0x4c] sm:$0xf]
      %v255 = vld [vmem:[%s219 + $0x50] sm:$0xf]
      %v256 = vld [vmem:[%s219 + $0x54] sm:$0xf]
      %v257 = vld [vmem:[%s219 + $0x58] sm:$0xf]
      %v258 = vld [vmem:[%s219 + $0x5c] sm:$0xf]
      %v259 = vld [vmem:[%s219 + $0x60] sm:$0xf]
      %v260 = vld [vmem:[%s219 + $0x64] sm:$0xf]
      %v261 = vld [vmem:[%s219 + $0x68] sm:$0xf]
      %v262 = vld [vmem:[%s219 + $0x6c] sm:$0xf]
      %v263 = vld [vmem:[%s219 + $0x70] sm:$0xf]
      %v264 = vld [vmem:[%s219 + $0x74] sm:$0xf]
      %v265 = vld [vmem:[%s219 + $0x78] sm:$0xf]
      %v266 = vld [vmem:[%s219 + $0x7c] sm:$0xf]
      %v267 = vld [vmem:[%s219 + $0x80] sm:$0xf]
      %v268 = vld [vmem:[%s219 + $0x84] sm:$0xf]
      %v269 = vld [vmem:[%s219 + $0x88] sm:$0xf]
      %v270 = vld [vmem:[%s219 + $0x8c] sm:$0xf]
      %v271 = vunpack.c.l.bf16 %v235
      %v272 = vunpack.c.l.bf16 %v236
      %v273 = vunpack.c.l.bf16 %v237
      %v274 = vunpack.c.l.bf16 %v238
      %v275 = vunpack.c.l.bf16 %v239
      %v276 = vunpack.c.l.bf16 %v240
      %v277 = vunpack.c.l.bf16 %v241
      %v278 = vunpack.c.l.bf16 %v242
      %v279 = vunpack.c.l.bf16 %v243
      %v280 = vunpack.c.l.bf16 %v244
      %v281 = vunpack.c.l.bf16 %v245
      %v282 = vunpack.c.l.bf16 %v246
      %v283 = vunpack.c.l.bf16 %v247
      %v284 = vunpack.c.l.bf16 %v248
      %v285 = vunpack.c.l.bf16 %v249
      %v286 = vunpack.c.l.bf16 %v250
      %v287 = vunpack.c.l.bf16 %v251
      %v288 = vunpack.c.l.bf16 %v252
      %v289 = vunpack.c.l.bf16 %v253
      %v290 = vunpack.c.l.bf16 %v254
      %v291 = vunpack.c.l.bf16 %v255
      %v292 = vunpack.c.l.bf16 %v256
      %v293 = vunpack.c.l.bf16 %v257
      %v294 = vunpack.c.l.bf16 %v258
      %v295 = vunpack.c.l.bf16 %v259
      %v296 = vunpack.c.l.bf16 %v260
      %v297 = vunpack.c.l.bf16 %v261
      %v298 = vunpack.c.l.bf16 %v262
      %v299 = vunpack.c.l.bf16 %v263
      %v300 = vunpack.c.l.bf16 %v264
      %v301 = vunpack.c.l.bf16 %v265
      %v302 = vunpack.c.l.bf16 %v266
      %v303 = vunpack.c.l.bf16 %v267
      %v304 = vunpack.c.l.bf16 %v268
      %v305 = vunpack.c.l.bf16 %v269
      %v306 = vunpack.c.l.bf16 %v270
      %v307 = vld [vmem:[%s222] sm:$0x1]
      %v309 = vperm.slane %v307, 0
      %v311 = vsub.f32 %v271, %v309
      %v312 = vsub.f32 %v272, %v309
      %v313 = vsub.f32 %v273, %v309
      %v314 = vsub.f32 %v274, %v309
      %v315 = vsub.f32 %v275, %v309
      %v316 = vsub.f32 %v276, %v309
      %v317 = vsub.f32 %v277, %v309
      %v318 = vsub.f32 %v278, %v309
      %v319 = vsub.f32 %v279, %v309
      %v320 = vsub.f32 %v280, %v309
      %v321 = vsub.f32 %v281, %v309
      %v322 = vsub.f32 %v282, %v309
      %v323 = vsub.f32 %v283, %v309
      %v324 = vsub.f32 %v284, %v309
      %v325 = vsub.f32 %v285, %v309
      %v326 = vsub.f32 %v286, %v309
      %v327 = vsub.f32 %v287, %v309
      %v328 = vsub.f32 %v288, %v309
      %v329 = vsub.f32 %v289, %v309
      %v330 = vsub.f32 %v290, %v309
      %v331 = vsub.f32 %v291, %v309
      %v332 = vsub.f32 %v292, %v309
      %v333 = vsub.f32 %v293, %v309
      %v334 = vsub.f32 %v294, %v309
      %v335 = vsub.f32 %v295, %v309
      %v336 = vsub.f32 %v296, %v309
      %v337 = vsub.f32 %v297, %v309
      %v338 = vsub.f32 %v298, %v309
      %v339 = vsub.f32 %v299, %v309
      %v340 = vsub.f32 %v300, %v309
      %v341 = vsub.f32 %v301, %v309
      %v342 = vsub.f32 %v302, %v309
      %v343 = vsub.f32 %v303, %v309
      %v344 = vsub.f32 %v304, %v309
      %v345 = vsub.f32 %v305, %v309
      %v346 = vsub.f32 %v306, %v309
      %v347 = vld [vmem:[%s225] sm:$0x1]
      %v349 = vperm.slane %v347, 0
      %v351 = vmul.f32 %v311, %v349
      %v352 = vmul.f32 %v312, %v349
      %v353 = vmul.f32 %v313, %v349
      %v354 = vmul.f32 %v314, %v349
      %v355 = vmul.f32 %v315, %v349
      %v356 = vmul.f32 %v316, %v349
      %v357 = vmul.f32 %v317, %v349
      %v358 = vmul.f32 %v318, %v349
      %v359 = vmul.f32 %v319, %v349
      %v360 = vmul.f32 %v320, %v349
      %v361 = vmul.f32 %v321, %v349
      %v362 = vmul.f32 %v322, %v349
      %v363 = vmul.f32 %v323, %v349
      %v364 = vmul.f32 %v324, %v349
      %v365 = vmul.f32 %v325, %v349
      %v366 = vmul.f32 %v326, %v349
      %v367 = vmul.f32 %v327, %v349
      %v368 = vmul.f32 %v328, %v349
      %v369 = vmul.f32 %v329, %v349
      %v370 = vmul.f32 %v330, %v349
      %v371 = vmul.f32 %v331, %v349
      %v372 = vmul.f32 %v332, %v349
      %v373 = vmul.f32 %v333, %v349
      %v374 = vmul.f32 %v334, %v349
      %v375 = vmul.f32 %v335, %v349
      %v376 = vmul.f32 %v336, %v349
      %v377 = vmul.f32 %v337, %v349
      %v378 = vmul.f32 %v338, %v349
      %v379 = vmul.f32 %v339, %v349
      %v380 = vmul.f32 %v340, %v349
      %v381 = vmul.f32 %v341, %v349
      %v382 = vmul.f32 %v342, %v349
      %v383 = vmul.f32 %v343, %v349
      %v384 = vmul.f32 %v344, %v349
      %v385 = vmul.f32 %v345, %v349
      %v386 = vmul.f32 %v346, %v349
      %vm387 = vcmp.ge.f32.partialorder %v351, 0.0
      %vm388 = vcmp.ge.f32.partialorder %v352, 0.0
      %vm389 = vcmp.ge.f32.partialorder %v353, 0.0
      %vm390 = vcmp.ge.f32.partialorder %v354, 0.0
      %vm391 = vcmp.ge.f32.partialorder %v355, 0.0
      %vm392 = vcmp.ge.f32.partialorder %v356, 0.0
      %vm393 = vcmp.ge.f32.partialorder %v357, 0.0
      %vm394 = vcmp.ge.f32.partialorder %v358, 0.0
      %vm395 = vcmp.ge.f32.partialorder %v359, 0.0
      %vm396 = vcmp.ge.f32.partialorder %v360, 0.0
      %vm397 = vcmp.ge.f32.partialorder %v361, 0.0
      %vm398 = vcmp.ge.f32.partialorder %v362, 0.0
      %vm399 = vcmp.ge.f32.partialorder %v363, 0.0
      %vm400 = vcmp.ge.f32.partialorder %v364, 0.0
      %vm401 = vcmp.ge.f32.partialorder %v365, 0.0
      %vm402 = vcmp.ge.f32.partialorder %v366, 0.0
      %vm403 = vcmp.ge.f32.partialorder %v367, 0.0
      %vm404 = vcmp.ge.f32.partialorder %v368, 0.0
      %vm405 = vcmp.ge.f32.partialorder %v369, 0.0
      %vm406 = vcmp.ge.f32.partialorder %v370, 0.0
      %vm407 = vcmp.ge.f32.partialorder %v371, 0.0
      %vm408 = vcmp.ge.f32.partialorder %v372, 0.0
      %vm409 = vcmp.ge.f32.partialorder %v373, 0.0
      %vm410 = vcmp.ge.f32.partialorder %v374, 0.0
      %vm411 = vcmp.ge.f32.partialorder %v375, 0.0
      %vm412 = vcmp.ge.f32.partialorder %v376, 0.0
      %vm413 = vcmp.ge.f32.partialorder %v377, 0.0
      %vm414 = vcmp.ge.f32.partialorder %v378, 0.0
      %vm415 = vcmp.ge.f32.partialorder %v379, 0.0
      %vm416 = vcmp.ge.f32.partialorder %v380, 0.0
      %vm417 = vcmp.ge.f32.partialorder %v381, 0.0
      %vm418 = vcmp.ge.f32.partialorder %v382, 0.0
      %vm419 = vcmp.ge.f32.partialorder %v383, 0.0
      %vm420 = vcmp.ge.f32.partialorder %v384, 0.0
      %vm421 = vcmp.ge.f32.partialorder %v385, 0.0
      %vm422 = vcmp.ge.f32.partialorder %v386, 0.0
      %v423 = vmul.f32 %v351, 0.01
      %v424 = vmul.f32 %v352, 0.01
      %v425 = vmul.f32 %v353, 0.01
      %v426 = vmul.f32 %v354, 0.01
      %v427 = vmul.f32 %v355, 0.01
      %v428 = vmul.f32 %v356, 0.01
      %v429 = vmul.f32 %v357, 0.01
      %v430 = vmul.f32 %v358, 0.01
      %v431 = vmul.f32 %v359, 0.01
      %v432 = vmul.f32 %v360, 0.01
      %v433 = vmul.f32 %v361, 0.01
      %v434 = vmul.f32 %v362, 0.01
      %v435 = vmul.f32 %v363, 0.01
      %v436 = vmul.f32 %v364, 0.01
      %v437 = vmul.f32 %v365, 0.01
      %v438 = vmul.f32 %v366, 0.01
      %v439 = vmul.f32 %v367, 0.01
      %v440 = vmul.f32 %v368, 0.01
      %v441 = vmul.f32 %v369, 0.01
      %v442 = vmul.f32 %v370, 0.01
      %v443 = vmul.f32 %v371, 0.01
      %v444 = vmul.f32 %v372, 0.01
      %v445 = vmul.f32 %v373, 0.01
      %v446 = vmul.f32 %v374, 0.01
      %v447 = vmul.f32 %v375, 0.01
      %v448 = vmul.f32 %v376, 0.01
      %v449 = vmul.f32 %v377, 0.01
      %v450 = vmul.f32 %v378, 0.01
      %v451 = vmul.f32 %v379, 0.01
      %v452 = vmul.f32 %v380, 0.01
      %v453 = vmul.f32 %v381, 0.01
      %v454 = vmul.f32 %v382, 0.01
      %v455 = vmul.f32 %v383, 0.01
      %v456 = vmul.f32 %v384, 0.01
      %v457 = vmul.f32 %v385, 0.01
      %v458 = vmul.f32 %v386, 0.01
      %v459 = vsel %vm387, %v351, %v423
      %v460 = vsel %vm388, %v352, %v424
      %v461 = vsel %vm389, %v353, %v425
      %v462 = vsel %vm390, %v354, %v426
      %v463 = vsel %vm391, %v355, %v427
      %v464 = vsel %vm392, %v356, %v428
      %v465 = vsel %vm393, %v357, %v429
      %v466 = vsel %vm394, %v358, %v430
      %v467 = vsel %vm395, %v359, %v431
      %v468 = vsel %vm396, %v360, %v432
      %v469 = vsel %vm397, %v361, %v433
      %v470 = vsel %vm398, %v362, %v434
      %v471 = vsel %vm399, %v363, %v435
      %v472 = vsel %vm400, %v364, %v436
      %v473 = vsel %vm401, %v365, %v437
      %v474 = vsel %vm402, %v366, %v438
      %v475 = vsel %vm403, %v367, %v439
      %v476 = vsel %vm404, %v368, %v440
      %v477 = vsel %vm405, %v369, %v441
      %v478 = vsel %vm406, %v370, %v442
      %v479 = vsel %vm407, %v371, %v443
      %v480 = vsel %vm408, %v372, %v444
      %v481 = vsel %vm409, %v373, %v445
      %v482 = vsel %vm410, %v374, %v446
      %v483 = vsel %vm411, %v375, %v447
      %v484 = vsel %vm412, %v376, %v448
      %v485 = vsel %vm413, %v377, %v449
      %v486 = vsel %vm414, %v378, %v450
      %v487 = vsel %vm415, %v379, %v451
      %v488 = vsel %vm416, %v380, %v452
      %v489 = vsel %vm417, %v381, %v453
      %v490 = vsel %vm418, %v382, %v454
      %v491 = vsel %vm419, %v383, %v455
      %v492 = vsel %vm420, %v384, %v456
      %v493 = vsel %vm421, %v385, %v457
      %v494 = vsel %vm422, %v386, %v458
      %vm495 = vcmask 130048
      %496 = vst.msk [vmem:[%s234] sm:$0xff] %vm495, %v459
      %497 = vst.msk [vmem:[%s234 + $0x8] sm:$0xff] %vm495, %v460
      %498 = vst.msk [vmem:[%s234 + $0x10] sm:$0xff] %vm495, %v461
      %499 = vst.msk [vmem:[%s234 + $0x18] sm:$0xff] %vm495, %v462
      %500 = vst.msk [vmem:[%s234 + $0x20] sm:$0xff] %vm495, %v463
      %501 = vst.msk [vmem:[%s234 + $0x28] sm:$0xff] %vm495, %v464
      %502 = vst.msk [vmem:[%s234 + $0x30] sm:$0xff] %vm495, %v465
      %503 = vst.msk [vmem:[%s234 + $0x38] sm:$0xff] %vm495, %v466
      %504 = vst.msk [vmem:[%s234 + $0x40] sm:$0xff] %vm495, %v467
      %505 = vst.msk [vmem:[%s234 + $0x48] sm:$0xff] %vm495, %v468
      %506 = vst.msk [vmem:[%s234 + $0x50] sm:$0xff] %vm495, %v469
      %507 = vst.msk [vmem:[%s234 + $0x58] sm:$0xff] %vm495, %v470
      %508 = vst.msk [vmem:[%s234 + $0x60] sm:$0xff] %vm495, %v471
      %509 = vst.msk [vmem:[%s234 + $0x68] sm:$0xff] %vm495, %v472
      %510 = vst.msk [vmem:[%s234 + $0x70] sm:$0xff] %vm495, %v473
      %511 = vst.msk [vmem:[%s234 + $0x78] sm:$0xff] %vm495, %v474
      %512 = vst.msk [vmem:[%s234 + $0x80] sm:$0xff] %vm495, %v475
      %513 = vst.msk [vmem:[%s234 + $0x88] sm:$0xff] %vm495, %v476
      %514 = vst.msk [vmem:[%s234 + $0x90] sm:$0xff] %vm495, %v477
      %515 = vst.msk [vmem:[%s234 + $0x98] sm:$0xff] %vm495, %v478
      %516 = vst.msk [vmem:[%s234 + $0xa0] sm:$0xff] %vm495, %v479
      %517 = vst.msk [vmem:[%s234 + $0xa8] sm:$0xff] %vm495, %v480
      %518 = vst.msk [vmem:[%s234 + $0xb0] sm:$0xff] %vm495, %v481
      %519 = vst.msk [vmem:[%s234 + $0xb8] sm:$0xff] %vm495, %v482
      %520 = vst.msk [vmem:[%s234 + $0xc0] sm:$0xff] %vm495, %v483
      %521 = vst.msk [vmem:[%s234 + $0xc8] sm:$0xff] %vm495, %v484
      %522 = vst.msk [vmem:[%s234 + $0xd0] sm:$0xff] %vm495, %v485
      %523 = vst.msk [vmem:[%s234 + $0xd8] sm:$0xff] %vm495, %v486
      %524 = vst.msk [vmem:[%s234 + $0xe0] sm:$0xff] %vm495, %v487
      %525 = vst.msk [vmem:[%s234 + $0xe8] sm:$0xff] %vm495, %v488
      %526 = vst.msk [vmem:[%s234 + $0xf0] sm:$0xff] %vm495, %v489
      %527 = vst.msk [vmem:[%s234 + $0xf8] sm:$0xff] %vm495, %v490
      %528 = vst.msk [vmem:[%s234 + $0x100] sm:$0xff] %vm495, %v491
      %529 = vst.msk [vmem:[%s234 + $0x108] sm:$0xff] %vm495, %v492
      %530 = vst.msk [vmem:[%s234 + $0x110] sm:$0xff] %vm495, %v493
      %531 = vst.msk [vmem:[%s234 + $0x118] sm:$0xff] %vm495, %v494
      %p532 = scmp.lt.s32.totalorder %s18, 1
      %s533 = scalar_select %p532, %s18, 1
      %p534 = scmp.lt.s32.totalorder %s19, 15
      %s535 = scalar_select %p534, %s19, 15
      %s536 = smul.addr %s535, 36
      %s537 = smul.addr %s533, 576
      %s538 = sadd.s32 %s536, %s537
      %s539 = smul.addr %s538, 8
      %s540 = scalar_lea.vmem %s3, %s539
      // Predicated region
      $region33: #{up_conv_forward.3} parent=31 // pred_check
        %p541 = pneg %p126
      $region34: #{up_conv_forward.3} parent=31 // pred_check_branch
        %543 = sbr.rel (%p541) target = $region36
      $region35: #{up_conv_forward.3} parent=31 // pred_region
        _
      $region36: #{up_conv_forward.3} parent=31 // pred_fallthru
        _
    $region32: #{up_conv_forward.3} parent=5 // pred_fallthru
      _
    %p544 = scmp.le.s32.totalorder 2, %s9
    // Predicated region
    $region37: #{up_conv_forward.3} parent=5 // pred_check
      %p545 = pneg %p544
    $region38: #{up_conv_forward.3} parent=5 // pred_check_branch
      %547 = sbr.rel (%p545) target = $region40
    $region39: #{up_conv_forward.3} parent=5 // pred_region
      %s548 = ssub.s32 %s9, 2
      // Predicated region
      $region41: #{up_conv_forward.3} parent=39 // pred_check
        %p549 = pneg %p132
      $region42: #{up_conv_forward.3} parent=39 // pred_check_branch
        %551 = sbr.rel (%p549) target = $region44
      $region43: #{up_conv_forward.3} parent=39 // pred_region
        %p552 = scmp.lt.s32.totalorder %s20, 1
        %s553 = scalar_select %p552, %s20, 1
        %p554 = scmp.lt.s32.totalorder %s21, 15
        %s555 = scalar_select %p554, %s21, 15
        %s556 = smul.addr %s555, 36
        %s557 = smul.addr %s553, 576
        %s558 = sadd.s32 %s556, %s557
        %s559 = smul.addr %s558, 8
        %s560 = scalar_lea.vmem %s3, %s559
      $region44: #{up_conv_forward.3} parent=39 // pred_fallthru
        _
    $region40: #{up_conv_forward.3} parent=5 // pred_fallthru
      _
  $region6: #{up_conv_forward.3} parent=0 // loop_footer
    %s13 = sadd.s32 1, %s9
  $region7: #{up_conv_forward.3} parent=0 // loop_footer_branch
    %8 = sbr.rel target = $region3
  $region8: #{up_conv_forward.3} parent=0 // loop_exit
    _

// kernel: up_conv_forward.2
$region0: #{up_conv_forward.2}
  #allocation0 [shape = 'u32[]', space=smem, size = 0x4, offset = 0x4, fixed_abs, tag = 'smem constant byte address 0x4 - core index']
  #allocation1 [shape = 'u32[72,128]{1,0:T(1,128)}', space=vmem, size = 0x9000, scoped, tag = 'internal scratch']
  #allocation2 [shape = 'f32[288,16]{1,0:T(8,128)}', space=vmem, size = 0x24000, scoped, tag = 'scratch operand']
  %s0 = inlined_call_operand.vmem [shape: bf16[2,18,342,32], index: 0, kind: input, shape index: {}]
  %s1 = inlined_call_operand.vmem [shape: bf16[3,9,32,16], index: 1, kind: input, shape index: {}]
  %s2 = inlined_call_operand.vmem [shape: f32[1,16], index: 2, kind: input, shape index: {}]
  %s3 = inlined_call_operand.vmem [shape: f32[288,1], index: 3, kind: input, shape index: {}]
  %s4 = inlined_call_operand.vmem [shape: bf16[2,16,288,16], index: 4, kind: output, shape index: {0}]
  %s5 = inlined_call_operand.vmem [shape: f32[2,16,1,16], index: 5, kind: output, shape index: {1}]
  %s6 = inlined_call_operand.vmem [shape: f32[2,16,1,16], index: 6, kind: output, shape index: {2}]
  %7 = xla_tuple %s4, %s5, %s6
  %s8 = sld [smem:[#allocation0]]
  $region73: #{up_conv_forward.2} parent=0
    _
  %s10 = ssub.s32 1, %s8
  %s11 = scalar_select 0, %s10, %s8
  loop: start=0, step=1, limit=98
  $region2: #{up_conv_forward.2} parent=0 // loop_pre_header
    _
  $region3: #{up_conv_forward.2} parent=0 // loop_header
    %s13 = sphi 0, %s17
    %p14 = scmp.ge.s32.totalorder %s13, 98
    %s20 = sphi 0, %s39
    %s21 = sphi 0, %s35
    %s22 = sphi 0, %s31
    %s23 = sphi 0, %s20
    %s24 = sphi 0, %s21
    %s25 = sphi 0, %s22
    %s26 = sphi 0, %s23
    %s27 = sphi 0, %s24
    %s28 = sphi 0, %s25
    %s46 = sphi 0, %s48
    %s49 = sphi 0, %s46
    %s50 = sphi 0, %s49
    %s66 = sphi 0, %s50
    %s72 = sphi 0, %s74
    %s75 = sphi 0, %s72
    %s76 = sphi 0, %s75
    %s92 = sphi 0, %s76
    %s96 = sphi 0, %s96
    %s98 = sphi 0, %s96
    %s99 = sphi 0, %s98
    %s113 = sphi 0, %s99
    %s117 = sphi 0, %s117
    %s119 = sphi 0, %s117
    %s120 = sphi 0, %s119
    %s134 = sphi 0, %s120
    %s142 = sphi 0, %s144
    %s145 = sphi 0, %s142
    %s146 = sphi 0, %s145
    %s162 = sphi 0, %s146
    %s170 = sphi 0, %s172
    %s173 = sphi 0, %s170
    %s174 = sphi 0, %s173
    %s190 = sphi 0, %s174
    %s198 = sphi 0, %s200
    %s201 = sphi 0, %s198
    %s202 = sphi 0, %s201
    %s218 = sphi 0, %s202
  $region4: #{up_conv_forward.2} parent=0 // loop_header_branch
    %16 = sbr.rel (%p14) target = $region8
  $region5: #{up_conv_forward.2} parent=0 // loop_body
    %s18 = ssub.s32 %s13, 1
    %s19 = ssub.s32 %s13, 2
    %s29 = sadd.s32 1, %s22
    %p30 = scmp.ge.s32.totalorder %s29, 3
    %s31 = scalar_select %p30, 0, %s29
    %s32 = sadd.s32 1, %s21
    %s33 = scalar_select %p30, %s32, %s21
    %p34 = scmp.ge.s32.totalorder %s33, 16
    %s35 = scalar_select %p34, 0, %s33
    %s36 = sadd.s32 1, %s20
    %s37 = scalar_select %p34, %s36, %s20
    %p38 = scmp.ge.s32.totalorder %s37, 2
    %s39 = scalar_select %p38, 0, %s37
    %s40 = sadd.s32 %s21, %s22
    %s41 = sadd.s32 %s35, %s31
    %s42 = ssub.s32 %s20, %s39
    %s43 = ssub.s32 %s40, %s41
    %s44 = sor.u32 %s42, %s43
    %p45 = scmp.eq.s32.totalorder %s44, 0
    %s47 = sadd.s32 %s46, 1
    %s48 = scalar_select %p45, %s46, %s47
    %p51 = pneg %p45
    %p52 = scmp.eq.s32.totalorder %s13, 95
    %p53 = por %p51, %p52
    %p54 = scmp.ne.s32.totalorder %s46, %s49
    %p55 = scmp.eq.s32.totalorder %s13, 0
    %p56 = por %p54, %p55
    %p57 = scmp.ne.s32.totalorder %s46, %s49
    %p58 = scmp.eq.s32.totalorder %s18, 95
    %p59 = por %p57, %p58
    %p60 = scmp.ne.s32.totalorder %s49, %s50
    %p61 = scmp.eq.s32.totalorder %s18, 0
    %p62 = por %p60, %p61
    %p63 = scmp.ne.s32.totalorder %s49, %s50
    %p64 = scmp.eq.s32.totalorder %s19, 95
    %p65 = por %p63, %p64
    %p67 = scmp.ne.s32.totalorder %s50, %s66
    %p68 = scmp.eq.s32.totalorder %s19, 0
    %p69 = por %p67, %p68
    %s70 = ssub.s32 %s22, %s31
    %p71 = scmp.eq.s32.totalorder %s70, 0
    %s73 = sadd.s32 %s72, 1
    %s74 = scalar_select %p71, %s72, %s73
    %p77 = pneg %p71
    %p78 = scmp.eq.s32.totalorder %s13, 95
    %p79 = por %p77, %p78
    %p80 = scmp.ne.s32.totalorder %s72, %s75
    %p81 = scmp.eq.s32.totalorder %s13, 0
    %p82 = por %p80, %p81
    %p83 = scmp.ne.s32.totalorder %s72, %s75
    %p84 = scmp.eq.s32.totalorder %s18, 95
    %p85 = por %p83, %p84
    %p86 = scmp.ne.s32.totalorder %s75, %s76
    %p87 = scmp.eq.s32.totalorder %s18, 0
    %p88 = por %p86, %p87
    %p89 = scmp.ne.s32.totalorder %s75, %s76
    %p90 = scmp.eq.s32.totalorder %s19, 95
    %p91 = por %p89, %p90
    %p93 = scmp.ne.s32.totalorder %s76, %s92
    %p94 = scmp.eq.s32.totalorder %s19, 0
    %p95 = por %p93, %p94
    %s97 = sadd.s32 %s96, 1
    %p100 = scmp.eq.s32.totalorder %s13, 95
    %p101 = scmp.ne.s32.totalorder %s96, %s98
    %p102 = scmp.eq.s32.totalorder %s13, 0
    %p103 = por %p101, %p102
    %p104 = scmp.ne.s32.totalorder %s96, %s98
    %p105 = scmp.eq.s32.totalorder %s18, 95
    %p106 = por %p104, %p105
    %p107 = scmp.ne.s32.totalorder %s98, %s99
    %p108 = scmp.eq.s32.totalorder %s18, 0
    %p109 = por %p107, %p108
    %p110 = scmp.ne.s32.totalorder %s98, %s99
    %p111 = scmp.eq.s32.totalorder %s19, 95
    %p112 = por %p110, %p111
    %p114 = scmp.ne.s32.totalorder %s99, %s113
    %p115 = scmp.eq.s32.totalorder %s19, 0
    %p116 = por %p114, %p115
    %s118 = sadd.s32 %s117, 1
    %p121 = scmp.eq.s32.totalorder %s13, 95
    %p122 = scmp.ne.s32.totalorder %s117, %s119
    %p123 = scmp.eq.s32.totalorder %s13, 0
    %p124 = por %p122, %p123
    %p125 = scmp.ne.s32.totalorder %s117, %s119
    %p126 = scmp.eq.s32.totalorder %s18, 95
    %p127 = por %p125, %p126
    %p128 = scmp.ne.s32.totalorder %s119, %s120
    %p129 = scmp.eq.s32.totalorder %s18, 0
    %p130 = por %p128, %p129
    %p131 = scmp.ne.s32.totalorder %s119, %s120
    %p132 = scmp.eq.s32.totalorder %s19, 95
    %p133 = por %p131, %p132
    %p135 = scmp.ne.s32.totalorder %s120, %s134
    %p136 = scmp.eq.s32.totalorder %s19, 0
    %p137 = por %p135, %p136
    %s138 = ssub.s32 %s20, %s39
    %s139 = ssub.s32 %s21, %s35
    %s140 = sor.u32 %s138, %s139
    %p141 = scmp.eq.s32.totalorder %s140, 0
    %s143 = sadd.s32 %s142, 1
    %s144 = scalar_select %p141, %s142, %s143
    %p147 = pneg %p141
    %p148 = scmp.eq.s32.totalorder %s13, 95
    %p149 = por %p147, %p148
    %p150 = scmp.ne.s32.totalorder %s142, %s145
    %p151 = scmp.eq.s32.totalorder %s13, 0
    %p152 = por %p150, %p151
    %p153 = scmp.ne.s32.totalorder %s142, %s145
    %p154 = scmp.eq.s32.totalorder %s18, 95
    %p155 = por %p153, %p154
    %p156 = scmp.ne.s32.totalorder %s145, %s146
    %p157 = scmp.eq.s32.totalorder %s18, 0
    %p158 = por %p156, %p157
    %p159 = scmp.ne.s32.totalorder %s145, %s146
    %p160 = scmp.eq.s32.totalorder %s19, 95
    %p161 = por %p159, %p160
    %p163 = scmp.ne.s32.totalorder %s146, %s162
    %p164 = scmp.eq.s32.totalorder %s19, 0
    %p165 = por %p163, %p164
    %s166 = ssub.s32 %s20, %s39
    %s167 = ssub.s32 %s21, %s35
    %s168 = sor.u32 %s166, %s167
    %p169 = scmp.eq.s32.totalorder %s168, 0
    %s171 = sadd.s32 %s170, 1
    %s172 = scalar_select %p169, %s170, %s171
    %p175 = pneg %p169
    %p176 = scmp.eq.s32.totalorder %s13, 95
    %p177 = por %p175, %p176
    %p178 = scmp.ne.s32.totalorder %s170, %s173
    %p179 = scmp.eq.s32.totalorder %s13, 0
    %p180 = por %p178, %p179
    %p181 = scmp.ne.s32.totalorder %s170, %s173
    %p182 = scmp.eq.s32.totalorder %s18, 95
    %p183 = por %p181, %p182
    %p184 = scmp.ne.s32.totalorder %s173, %s174
    %p185 = scmp.eq.s32.totalorder %s18, 0
    %p186 = por %p184, %p185
    %p187 = scmp.ne.s32.totalorder %s173, %s174
    %p188 = scmp.eq.s32.totalorder %s19, 95
    %p189 = por %p187, %p188
    %p191 = scmp.ne.s32.totalorder %s174, %s190
    %p192 = scmp.eq.s32.totalorder %s19, 0
    %p193 = por %p191, %p192
    %s194 = ssub.s32 %s20, %s39
    %s195 = ssub.s32 %s21, %s35
    %s196 = sor.u32 %s194, %s195
    %p197 = scmp.eq.s32.totalorder %s196, 0
    %s199 = sadd.s32 %s198, 1
    %s200 = scalar_select %p197, %s198, %s199
    %p203 = pneg %p197
    %p204 = scmp.eq.s32.totalorder %s13, 95
    %p205 = por %p203, %p204
    %p206 = scmp.ne.s32.totalorder %s198, %s201
    %p207 = scmp.eq.s32.totalorder %s13, 0
    %p208 = por %p206, %p207
    %p209 = scmp.ne.s32.totalorder %s198, %s201
    %p210 = scmp.eq.s32.totalorder %s18, 95
    %p211 = por %p209, %p210
    %p212 = scmp.ne.s32.totalorder %s201, %s202
    %p213 = scmp.eq.s32.totalorder %s18, 0
    %p214 = por %p212, %p213
    %p215 = scmp.ne.s32.totalorder %s201, %s202
    %p216 = scmp.eq.s32.totalorder %s19, 95
    %p217 = por %p215, %p216
    %p219 = scmp.ne.s32.totalorder %s202, %s218
    %p220 = scmp.eq.s32.totalorder %s19, 0
    %p221 = por %p219, %p220
    %p222 = scmp.le.s32.totalorder 1, %s13
    %p223 = scmp.lt.s32.totalorder %s13, 97
    %p224 = pnand %p222, %p223
    %p225 = pneg %p224
    // Predicated region
    $region9: #{up_conv_forward.2} parent=5 // pred_check
      _
    $region10: #{up_conv_forward.2} parent=5 // pred_check_branch
      %227 = sbr.rel (%p224) target = $region12
    $region11: #{up_conv_forward.2} parent=5 // pred_region
      %s228 = ssub.s32 %s13, 1
      // Predicated region
      $region13: #{up_conv_forward.2} parent=11 // pred_check
        %p229 = pneg %p109
      $region14: #{up_conv_forward.2} parent=11 // pred_check_branch
        %231 = sbr.rel (%p229) target = $region16
      $region15: #{up_conv_forward.2} parent=11 // pred_region
        _
      $region16: #{up_conv_forward.2} parent=11 // pred_fallthru
        _
      // Predicated region
      $region17: #{up_conv_forward.2} parent=11 // pred_check
        %p232 = pneg %p130
      $region18: #{up_conv_forward.2} parent=11 // pred_check_branch
        %234 = sbr.rel (%p232) target = $region20
      $region19: #{up_conv_forward.2} parent=11 // pred_region
        _
      $region20: #{up_conv_forward.2} parent=11 // pred_fallthru
        _
    $region12: #{up_conv_forward.2} parent=5 // pred_fallthru
      _
    %p235 = scmp.lt.s32.totalorder %s13, 96
    // Predicated region
    $region21: #{up_conv_forward.2} parent=5 // pred_check
      %p236 = pneg %p235
    $region22: #{up_conv_forward.2} parent=5 // pred_check_branch
      %238 = sbr.rel (%p236) target = $region24
    $region23: #{up_conv_forward.2} parent=5 // pred_region
      // Predicated region
      $region25: #{up_conv_forward.2} parent=23 // pred_check
        %p239 = pneg %p56
      $region26: #{up_conv_forward.2} parent=23 // pred_check_branch
        %241 = sbr.rel (%p239) target = $region28
      $region27: #{up_conv_forward.2} parent=23 // pred_region
        %s242 = sadd.s32 %s21, %s22
        %p243 = scmp.lt.s32.totalorder %s20, 1
        %s244 = scalar_select %p243, %s20, 1
        %p245 = scmp.lt.s32.totalorder %s242, 17
        %s246 = scalar_select %p245, %s242, 17
        %s247 = smul.addr %s246, 43
        %s248 = smul.addr %s244, 774
        %s249 = sadd.s32 %s247, %s248
        %s250 = smul.addr %s249, 4
        %s251 = scalar_lea.vmem %s0, %s250
        %s252 = sadd.s32 %s21, %s22
      $region28: #{up_conv_forward.2} parent=23 // pred_fallthru
        _
      // Predicated region
      $region29: #{up_conv_forward.2} parent=23 // pred_check
        %p253 = pneg %p82
      $region30: #{up_conv_forward.2} parent=23 // pred_check_branch
        %255 = sbr.rel (%p253) target = $region32
      $region31: #{up_conv_forward.2} parent=23 // pred_region
        %p256 = scmp.lt.s32.totalorder %s22, 2
        %s257 = scalar_select %p256, %s22, 2
        %s258 = smul.addr %s257, 36
        %s259 = smul.addr %s258, 4
        %s260 = scalar_lea.vmem %s1, %s259
      $region32: #{up_conv_forward.2} parent=23 // pred_fallthru
        _
    $region24: #{up_conv_forward.2} parent=5 // pred_fallthru
      _
    %p261 = scmp.le.s32.totalorder 1, %s13
    %p262 = scmp.lt.s32.totalorder %s13, 97
    %p263 = pnand %p261, %p262
    %p264 = pneg %p263
    // Predicated region
    $region33: #{up_conv_forward.2} parent=5 // pred_check
      _
    $region34: #{up_conv_forward.2} parent=5 // pred_check_branch
      %266 = sbr.rel (%p263) target = $region36
    $region35: #{up_conv_forward.2} parent=5 // pred_region
      %s267 = ssub.s32 %s13, 1
      %s268 = sadd.s32 %s24, %s25
      %p269 = scmp.lt.s32.totalorder %s23, 1
      %s270 = scalar_select %p269, %s23, 1
      %p271 = scmp.lt.s32.totalorder %s268, 17
      %s272 = scalar_select %p271, %s268, 17
      %s273 = smul.addr %s272, 43
      %s274 = smul.addr %s270, 774
      %s275 = sadd.s32 %s273, %s274
      %s276 = smul.addr %s275, 4
      %s277 = scalar_lea.vmem %s0, %s276
      %p278 = pneg %p62
      %p279 = pneg %p59
      %p280 = scmp.lt.s32.totalorder %s25, 2
      %s281 = scalar_select %p280, %s25, 2
      %s282 = smul.addr %s281, 36
      %s283 = smul.addr %s282, 4
      %s284 = scalar_lea.vmem %s1, %s283
      %p285 = pneg %p88
      %p286 = pneg %p85
      %p287 = pneg %p109
      %p288 = pneg %p106
      %p289 = pneg %p130
      %p290 = pneg %p127
      %p291 = pneg %p158
      %p292 = pneg %p155
      %p293 = scmp.lt.s32.totalorder %s23, 1
      %s294 = scalar_select %p293, %s23, 1
      %p295 = scmp.lt.s32.totalorder %s24, 15
      %s296 = scalar_select %p295, %s24, 15
      %s297 = smul.addr %s296, 36
      %s298 = smul.addr %s294, 576
      %s299 = sadd.s32 %s297, %s298
      %s300 = smul.addr %s299, 4
      %s301 = scalar_lea.vmem %s4, %s300
      %p302 = pneg %p186
      %p303 = pneg %p183
      %p304 = scmp.lt.s32.totalorder %s23, 1
      %s305 = scalar_select %p304, %s23, 1
      %p306 = scmp.lt.s32.totalorder %s24, 15
      %s307 = scalar_select %p306, %s24, 15
      %s308 = smul.addr %s305, 16
      %s309 = sadd.s32 %s307, %s308
      %s310 = scalar_lea.vmem %s5, %s309
      %p311 = pneg %p214
      %p312 = pneg %p211
      %p313 = scmp.lt.s32.totalorder %s23, 1
      %s314 = scalar_select %p313, %s23, 1
      %p315 = scmp.lt.s32.totalorder %s24, 15
      %s316 = scalar_select %p315, %s24, 15
      %s317 = smul.addr %s314, 16
      %s318 = sadd.s32 %s316, %s317
      %s319 = scalar_lea.vmem %s6, %s318
      %s320 = sadd.s32 %s24, %s25
      %p321 = scmp.lt.s32.totalorder %s23, 1
      %s322 = scalar_select %p321, %s23, 1
      %p323 = scmp.lt.s32.totalorder %s320, 17
      %s324 = scalar_select %p323, %s320, 17
      %s325 = smul.addr %s324, 43
      %s326 = smul.addr %s322, 774
      %s327 = sadd.s32 %s325, %s326
      %s328 = smul.addr %s327, 4
      %s329 = scalar_lea.vmem %s0, %s328
      %s330 = sadd.s32 %s24, %s25
      %p331 = scmp.lt.s32.totalorder %s25, 2
      %s332 = scalar_select %p331, %s25, 2
      %s333 = smul.addr %s332, 36
      %s334 = smul.addr %s333, 4
      %s335 = scalar_lea.vmem %s1, %s334
      %p336 = scmp.lt.s32.totalorder %s23, 1
      %s337 = scalar_select %p336, %s23, 1
      %p338 = scmp.lt.s32.totalorder %s24, 15
      %s339 = scalar_select %p338, %s24, 15
      %s340 = smul.addr %s339, 36
      %s341 = smul.addr %s337, 576
      %s342 = sadd.s32 %s340, %s341
      %s343 = smul.addr %s342, 4
      %s344 = scalar_lea.vmem %s4, %s343
      %p345 = scmp.lt.s32.totalorder %s23, 1
      %s346 = scalar_select %p345, %s23, 1
      %p347 = scmp.lt.s32.totalorder %s24, 15
      %s348 = scalar_select %p347, %s24, 15
      %s349 = smul.addr %s346, 16
      %s350 = sadd.s32 %s348, %s349
      %s351 = scalar_lea.vmem %s5, %s350
      %p352 = scmp.lt.s32.totalorder %s23, 1
      %s353 = scalar_select %p352, %s23, 1
      %p354 = scmp.lt.s32.totalorder %s24, 15
      %s355 = scalar_select %p354, %s24, 15
      %s356 = smul.addr %s353, 16
      %s357 = sadd.s32 %s355, %s356
      %s358 = scalar_lea.vmem %s6, %s357
      %p360 = scmp.eq.s32.totalorder %s25, 0
      // Predicated region
      $region37: #{up_conv_forward.2} parent=35 // pred_check
        %p361 = pneg %p360
      $region38: #{up_conv_forward.2} parent=35 // pred_check_branch
        %363 = sbr.rel (%p361) target = $region40
      $region39: #{up_conv_forward.2} parent=35 // pred_region
        %v364 = vld [vmem:[%s2] sm:$0x1]
        %v366 = vperm.slane %v364, 0
        %vm368 = vcmask 130048
        %369 = vst.msk [vmem:[#allocation2] sm:$0xff] %vm368, %v366
        %370 = vst.msk [vmem:[#allocation2 + $0x8] sm:$0xff] %vm368, %v366
        %371 = vst.msk [vmem:[#allocation2 + $0x10] sm:$0xff] %vm368, %v366
        %372 = vst.msk [vmem:[#allocation2 + $0x18] sm:$0xff] %vm368, %v366
        %373 = vst.msk [vmem:[#allocation2 + $0x20] sm:$0xff] %vm368, %v366
        %374 = vst.msk [vmem:[#allocation2 + $0x28] sm:$0xff] %vm368, %v366
        %375 = vst.msk [vmem:[#allocation2 + $0x30] sm:$0xff] %vm368, %v366
        %376 = vst.msk [vmem:[#allocation2 + $0x38] sm:$0xff] %vm368, %v366
        %377 = vst.msk [vmem:[#allocation2 + $0x40] sm:$0xff] %vm368, %v366
        %378 = vst.msk [vmem:[#allocation2 + $0x48] sm:$0xff] %vm368, %v366
        %379 = vst.msk [vmem:[#allocation2 + $0x50] sm:$0xff] %vm368, %v366
        %380 = vst.msk [vmem:[#allocation2 + $0x58] sm:$0xff] %vm368, %v366
        %381 = vst.msk [vmem:[#allocation2 + $0x60] sm:$0xff] %vm368, %v366
        %382 = vst.msk [vmem:[#allocation2 + $0x68] sm:$0xff] %vm368, %v366
        %383 = vst.msk [vmem:[#allocation2 + $0x70] sm:$0xff] %vm368, %v366
        %384 = vst.msk [vmem:[#allocation2 + $0x78] sm:$0xff] %vm368, %v366
        %385 = vst.msk [vmem:[#allocation2 + $0x80] sm:$0xff] %vm368, %v366
        %386 = vst.msk [vmem:[#allocation2 + $0x88] sm:$0xff] %vm368, %v366
        %387 = vst.msk [vmem:[#allocation2 + $0x90] sm:$0xff] %vm368, %v366
        %388 = vst.msk [vmem:[#allocation2 + $0x98] sm:$0xff] %vm368, %v366
        %389 = vst.msk [vmem:[#allocation2 + $0xa0] sm:$0xff] %vm368, %v366
        %390 = vst.msk [vmem:[#allocation2 + $0xa8] sm:$0xff] %vm368, %v366
        %391 = vst.msk [vmem:[#allocation2 + $0xb0] sm:$0xff] %vm368, %v366
        %392 = vst.msk [vmem:[#allocation2 + $0xb8] sm:$0xff] %vm368, %v366
        %393 = vst.msk [vmem:[#allocation2 + $0xc0] sm:$0xff] %vm368, %v366
        %394 = vst.msk [vmem:[#allocation2 + $0xc8] sm:$0xff] %vm368, %v366
        %395 = vst.msk [vmem:[#allocation2 + $0xd0] sm:$0xff] %vm368, %v366
        %396 = vst.msk [vmem:[#allocation2 + $0xd8] sm:$0xff] %vm368, %v366
        %397 = vst.msk [vmem:[#allocation2 + $0xe0] sm:$0xff] %vm368, %v366
        %398 = vst.msk [vmem:[#allocation2 + $0xe8] sm:$0xff] %vm368, %v366
        %399 = vst.msk [vmem:[#allocation2 + $0xf0] sm:$0xff] %vm368, %v366
        %400 = vst.msk [vmem:[#allocation2 + $0xf8] sm:$0xff] %vm368, %v366
        %401 = vst.msk [vmem:[#allocation2 + $0x100] sm:$0xff] %vm368, %v366
        %402 = vst.msk [vmem:[#allocation2 + $0x108] sm:$0xff] %vm368, %v366
        %403 = vst.msk [vmem:[#allocation2 + $0x110] sm:$0xff] %vm368, %v366
        %404 = vst.msk [vmem:[#allocation2 + $0x118] sm:$0xff] %vm368, %v366
      $region40: #{up_conv_forward.2} parent=35 // pred_fallthru
        _
      %v405 = vld [vmem:[%s329] sm:$0xf]
      %v406 = vld [vmem:[%s329 + $0x4] sm:$0xf]
      %v407 = vld [vmem:[%s329 + $0x8] sm:$0xf]
      %v408 = vld [vmem:[%s329 + $0xc] sm:$0xf]
      %v409 = vld [vmem:[%s329 + $0x10] sm:$0xf]
      %v410 = vld [vmem:[%s329 + $0x14] sm:$0xf]
      %v411 = vld [vmem:[%s329 + $0x18] sm:$0xf]
      %v412 = vld [vmem:[%s329 + $0x1c] sm:$0xf]
      %v413 = vld [vmem:[%s329 + $0x20] sm:$0xf]
      %v414 = vld [vmem:[%s329 + $0x24] sm:$0xf]
      %v415 = vld [vmem:[%s329 + $0x28] sm:$0xf]
      %v416 = vld [vmem:[%s329 + $0x2c] sm:$0xf]
      %v417 = vld [vmem:[%s329 + $0x30] sm:$0xf]
      %v418 = vld [vmem:[%s329 + $0x34] sm:$0xf]
      %v419 = vld [vmem:[%s329 + $0x38] sm:$0xf]
      %v420 = vld [vmem:[%s329 + $0x3c] sm:$0xf]
      %v421 = vld [vmem:[%s329 + $0x40] sm:$0xf]
      %v422 = vld [vmem:[%s329 + $0x44] sm:$0xf]
      %v423 = vld [vmem:[%s329 + $0x48] sm:$0xf]
      %v424 = vld [vmem:[%s329 + $0x4c] sm:$0xf]
      %v425 = vld [vmem:[%s329 + $0x50] sm:$0xf]
      %v426 = vld [vmem:[%s329 + $0x54] sm:$0xf]
      %v427 = vld [vmem:[%s329 + $0x58] sm:$0xf]
      %v428 = vld [vmem:[%s329 + $0x5c] sm:$0xf]
      %v429 = vld [vmem:[%s329 + $0x60] sm:$0xf]
      %v430 = vld [vmem:[%s329 + $0x64] sm:$0xf]
      %v431 = vld [vmem:[%s329 + $0x68] sm:$0xf]
      %v432 = vld [vmem:[%s329 + $0x6c] sm:$0xf]
      %v433 = vld [vmem:[%s329 + $0x70] sm:$0xf]
      %v434 = vld [vmem:[%s329 + $0x74] sm:$0xf]
      %v435 = vld [vmem:[%s329 + $0x78] sm:$0xf]
      %v436 = vld [vmem:[%s329 + $0x7c] sm:$0xf]
      %v437 = vld [vmem:[%s329 + $0x80] sm:$0xf]
      %v438 = vld [vmem:[%s329 + $0x84] sm:$0xf]
      %v439 = vld [vmem:[%s329 + $0x88] sm:$0xf]
      %v440 = vld [vmem:[%s329 + $0x8c] sm:$0xf]
      %v441 = vld [vmem:[#allocation2] sm:$0xff]
      %v442 = vld [vmem:[#allocation2 + $0x8] sm:$0xff]
      %v443 = vld [vmem:[#allocation2 + $0x10] sm:$0xff]
      %v444 = vld [vmem:[#allocation2 + $0x18] sm:$0xff]
      %v445 = vld [vmem:[#allocation2 + $0x20] sm:$0xff]
      %v446 = vld [vmem:[#allocation2 + $0x28] sm:$0xff]
      %v447 = vld [vmem:[#allocation2 + $0x30] sm:$0xff]
      %v448 = vld [vmem:[#allocation2 + $0x38] sm:$0xff]
      %v449 = vld [vmem:[#allocation2 + $0x40] sm:$0xff]
      %v450 = vld [vmem:[#allocation2 + $0x48] sm:$0xff]
      %v451 = vld [vmem:[#allocation2 + $0x50] sm:$0xff]
      %v452 = vld [vmem:[#allocation2 + $0x58] sm:$0xff]
      %v453 = vld [vmem:[#allocation2 + $0x60] sm:$0xff]
      %v454 = vld [vmem:[#allocation2 + $0x68] sm:$0xff]
      %v455 = vld [vmem:[#allocation2 + $0x70] sm:$0xff]
      %v456 = vld [vmem:[#allocation2 + $0x78] sm:$0xff]
      %v457 = vld [vmem:[#allocation2 + $0x80] sm:$0xff]
      %v458 = vld [vmem:[#allocation2 + $0x88] sm:$0xff]
      %v459 = vld [vmem:[#allocation2 + $0x90] sm:$0xff]
      %v460 = vld [vmem:[#allocation2 + $0x98] sm:$0xff]
      %v461 = vld [vmem:[#allocation2 + $0xa0] sm:$0xff]
      %v462 = vld [vmem:[#allocation2 + $0xa8] sm:$0xff]
      %v463 = vld [vmem:[#allocation2 + $0xb0] sm:$0xff]
      %v464 = vld [vmem:[#allocation2 + $0xb8] sm:$0xff]
      %v465 = vld [vmem:[#allocation2 + $0xc0] sm:$0xff]
      %v466 = vld [vmem:[#allocation2 + $0xc8] sm:$0xff]
      %v467 = vld [vmem:[#allocation2 + $0xd0] sm:$0xff]
      %v468 = vld [vmem:[#allocation2 + $0xd8] sm:$0xff]
      %v469 = vld [vmem:[#allocation2 + $0xe0] sm:$0xff]
      %v470 = vld [vmem:[#allocation2 + $0xe8] sm:$0xff]
      %v471 = vld [vmem:[#allocation2 + $0xf0] sm:$0xff]
      %v472 = vld [vmem:[#allocation2 + $0xf8] sm:$0xff]
      %v473 = vld [vmem:[#allocation2 + $0x100] sm:$0xff]
      %v474 = vld [vmem:[#allocation2 + $0x108] sm:$0xff]
      %v475 = vld [vmem:[#allocation2 + $0x110] sm:$0xff]
      %v476 = vld [vmem:[#allocation2 + $0x118] sm:$0xff]
      %v477 = vld [vmem:[%s335] sm:$0xf]
      %v478 = vld [vmem:[%s335 + $0x4] sm:$0xf]
      %v479 = vld [vmem:[%s335 + $0x8] sm:$0xf]
      %v480 = vld [vmem:[%s335 + $0xc] sm:$0xf]
      %v517 = vunpack.c.l.b16 %v405
      %v518 = vunpack.c.l.b16 %v406
      %v519 = vunpack.c.l.b16 %v407
      %v520 = vunpack.c.l.b16 %v408
      %v521 = vunpack.c.l.b16 %v409
      %v522 = vunpack.c.l.b16 %v410
      %v523 = vunpack.c.l.b16 %v411
      %v524 = vunpack.c.l.b16 %v412
      %v525 = vunpack.c.l.b16 %v413
      %v526 = vunpack.c.l.b16 %v414
      %v527 = vunpack.c.l.b16 %v415
      %v528 = vunpack.c.l.b16 %v416
      %v529 = vunpack.c.l.b16 %v417
      %v530 = vunpack.c.l.b16 %v418
      %v531 = vunpack.c.l.b16 %v419
      %v532 = vunpack.c.l.b16 %v420
      %v533 = vunpack.c.l.b16 %v421
      %v534 = vunpack.c.l.b16 %v422
      %v535 = vunpack.c.l.b16 %v423
      %v536 = vunpack.c.l.b16 %v424
      %v537 = vunpack.c.l.b16 %v425
      %v538 = vunpack.c.l.b16 %v426
      %v539 = vunpack.c.l.b16 %v427
      %v540 = vunpack.c.l.b16 %v428
      %v541 = vunpack.c.l.b16 %v429
      %v542 = vunpack.c.l.b16 %v430
      %v543 = vunpack.c.l.b16 %v431
      %v544 = vunpack.c.l.b16 %v432
      %v545 = vunpack.c.l.b16 %v433
      %v546 = vunpack.c.l.b16 %v434
      %v547 = vunpack.c.l.b16 %v435
      %v548 = vunpack.c.l.b16 %v436
      %v549 = vunpack.c.l.b16 %v437
      %v550 = vunpack.c.l.b16 %v438
      %v551 = vunpack.c.l.b16 %v439
      %v552 = vunpack.c.l.b16 %v440
      %v553 = vpack.c.b16 %v518, %v517
      %v554 = vpack.c.b16 %v520, %v519
      %v555 = vpack.c.b16 %v522, %v521
      %v556 = vpack.c.b16 %v524, %v523
      %v557 = vpack.c.b16 %v526, %v525
      %v558 = vpack.c.b16 %v528, %v527
      %v559 = vpack.c.b16 %v530, %v529
      %v560 = vpack.c.b16 %v532, %v531
      %v561 = vpack.c.b16 %v534, %v533
      %v562 = vpack.c.b16 %v536, %v535
      %v563 = vpack.c.b16 %v538, %v537
      %v564 = vpack.c.b16 %v540, %v539
      %v565 = vpack.c.b16 %v542, %v541
      %v566 = vpack.c.b16 %v544, %v543
      %v567 = vpack.c.b16 %v546, %v545
      %v568 = vpack.c.b16 %v548, %v547
      %v569 = vpack.c.b16 %v550, %v549
      %v570 = vpack.c.b16 %v552, %v551
      %v575 = vunpack.c.l.b16 %v477
      %v576 = vunpack.c.l.b16 %v478
      %v577 = vunpack.c.l.b16 %v479
      %v578 = vunpack.c.l.b16 %v480
      %v579 = vpack.c.b16 %v576, %v575
      %v580 = vpack.c.b16 %v578, %v577
      %vm583 = vcmask 261120
      %v585 = vsel %vm583, %v553, 0
      %v588 = vsel %vm583, %v554, 0
      %v591 = vsel %vm583, %v555, 0
      %v594 = vsel %vm583, %v556, 0
      %v597 = vsel %vm583, %v557, 0
      %v600 = vsel %vm583, %v558, 0
      %v603 = vsel %vm583, %v559, 0
      %v606 = vsel %vm583, %v560, 0
      %v609 = vsel %vm583, %v561, 0
      %v612 = vsel %vm583, %v562, 0
      %v615 = vsel %vm583, %v563, 0
      %v618 = vsel %vm583, %v564, 0
      %v621 = vsel %vm583, %v565, 0
      %v624 = vsel %vm583, %v566, 0
      %v627 = vsel %vm583, %v567, 0
      %v630 = vsel %vm583, %v568, 0
      %v633 = vsel %vm583, %v569, 0
      %v636 = vsel %vm583, %v570, 0
      %638 = vmatpush.bf16.msra.mxu0 0
      %639 = vmatpush.bf16.msra.mxu0 0
      %640 = vmatpush.bf16.msra.mxu0 0
      %641 = vmatpush.bf16.msra.mxu0 0
      %642 = vmatpush.bf16.msra.mxu0 0
      %643 = vmatpush.bf16.msra.mxu0 0
      %644 = vmatpush.bf16.msra.mxu0 %v580
      %645 = vmatpush.bf16.msra.mxu0 %v579
      %646 = vmatmul.bf16.gmra.mxu0 %v585
      %v647 = vpop.f32.mrf.mxu0
      %v648 = vadd.f32 0.0, %v647
      %v649 = vpop.f32.mrf.mxu0
      %v650 = vadd.f32 0.0, %v649
      %651 = vmatmul.bf16.gmra.mxu0 %v588
      %v652 = vpop.f32.mrf.mxu0
      %v653 = vadd.f32 0.0, %v652
      %v654 = vpop.f32.mrf.mxu0
      %v655 = vadd.f32 0.0, %v654
      %656 = vmatmul.bf16.gmra.mxu0 %v591
      %v657 = vpop.f32.mrf.mxu0
      %v658 = vadd.f32 0.0, %v657
      %v659 = vpop.f32.mrf.mxu0
      %v660 = vadd.f32 0.0, %v659
      %661 = vmatmul.bf16.gmra.mxu0 %v594
      %v662 = vpop.f32.mrf.mxu0
      %v663 = vadd.f32 0.0, %v662
      %v664 = vpop.f32.mrf.mxu0
      %v665 = vadd.f32 0.0, %v664
      %666 = vmatmul.bf16.gmra.mxu0 %v597
      %v667 = vpop.f32.mrf.mxu0
      %v668 = vadd.f32 0.0, %v667
      %v669 = vpop.f32.mrf.mxu0
      %v670 = vadd.f32 0.0, %v669
      %671 = vmatmul.bf16.gmra.mxu0 %v600
      %v672 = vpop.f32.mrf.mxu0
      %v673 = vadd.f32 0.0, %v672
      %v674 = vpop.f32.mrf.mxu0
      %v675 = vadd.f32 0.0, %v674
      %676 = vmatmul.bf16.gmra.mxu0 %v603
      %v677 = vpop.f32.mrf.mxu0
      %v678 = vadd.f32 0.0, %v677
      %v679 = vpop.f32.mrf.mxu0
      %v680 = vadd.f32 0.0, %v679
      %681 = vmatmul.bf16.gmra.mxu0 %v606
      %v682 = vpop.f32.mrf.mxu0
      %v683 = vadd.f32 0.0, %v682
      %v684 = vpop.f32.mrf.mxu0
      %v685 = vadd.f32 0.0, %v684
      %686 = vmatmul.bf16.gmra.mxu0 %v609
      %v687 = vpop.f32.mrf.mxu0
      %v688 = vadd.f32 0.0, %v687
      %v689 = vpop.f32.mrf.mxu0
      %v690 = vadd.f32 0.0, %v689
      %691 = vmatmul.bf16.gmra.mxu0 %v612
      %v692 = vpop.f32.mrf.mxu0
      %v693 = vadd.f32 0.0, %v692
      %v694 = vpop.f32.mrf.mxu0
      %v695 = vadd.f32 0.0, %v694
      %696 = vmatmul.bf16.gmra.mxu0 %v615
      %v697 = vpop.f32.mrf.mxu0
      %v698 = vadd.f32 0.0, %v697
      %v699 = vpop.f32.mrf.mxu0
      %v700 = vadd.f32 0.0, %v699
      %701 = vmatmul.bf16.gmra.mxu0 %v618
      %v702 = vpop.f32.mrf.mxu0
      %v703 = vadd.f32 0.0, %v702
      %v704 = vpop.f32.mrf.mxu0
      %v705 = vadd.f32 0.0, %v704
      %706 = vmatmul.bf16.gmra.mxu0 %v621
      %v707 = vpop.f32.mrf.mxu0
      %v708 = vadd.f32 0.0, %v707
      %v709 = vpop.f32.mrf.mxu0
      %v710 = vadd.f32 0.0, %v709
      %711 = vmatmul.bf16.gmra.mxu0 %v624
      %v712 = vpop.f32.mrf.mxu0
      %v713 = vadd.f32 0.0, %v712
      %v714 = vpop.f32.mrf.mxu0
      %v715 = vadd.f32 0.0, %v714
      %716 = vmatmul.bf16.gmra.mxu0 %v627
      %v717 = vpop.f32.mrf.mxu0
      %v718 = vadd.f32 0.0, %v717
      %v719 = vpop.f32.mrf.mxu0
      %v720 = vadd.f32 0.0, %v719
      %721 = vmatmul.bf16.gmra.mxu0 %v630
      %v722 = vpop.f32.mrf.mxu0
      %v723 = vadd.f32 0.0, %v722
      %v724 = vpop.f32.mrf.mxu0
      %v725 = vadd.f32 0.0, %v724
      %726 = vmatmul.bf16.gmra.mxu0 %v633
      %v727 = vpop.f32.mrf.mxu0
      %v728 = vadd.f32 0.0, %v727
      %v729 = vpop.f32.mrf.mxu0
      %v730 = vadd.f32 0.0, %v729
      %731 = vmatmul.bf16.gmra.mxu0 %v636
      %v732 = vpop.f32.mrf.mxu0
      %v733 = vadd.f32 0.0, %v732
      %v734 = vpop.f32.mrf.mxu0
      %v735 = vadd.f32 0.0, %v734
      %736 = vdwg.mxu0
      %v737 = vadd.f32 %v441, %v648
      %v738 = vadd.f32 %v442, %v650
      %v739 = vadd.f32 %v443, %v653
      %v740 = vadd.f32 %v444, %v655
      %v741 = vadd.f32 %v445, %v658
      %v742 = vadd.f32 %v446, %v660
      %v743 = vadd.f32 %v447, %v663
      %v744 = vadd.f32 %v448, %v665
      %v745 = vadd.f32 %v449, %v668
      %v746 = vadd.f32 %v450, %v670
      %v747 = vadd.f32 %v451, %v673
      %v748 = vadd.f32 %v452, %v675
      %v749 = vadd.f32 %v453, %v678
      %v750 = vadd.f32 %v454, %v680
      %v751 = vadd.f32 %v455, %v683
      %v752 = vadd.f32 %v456, %v685
      %v753 = vadd.f32 %v457, %v688
      %v754 = vadd.f32 %v458, %v690
      %v755 = vadd.f32 %v459, %v693
      %v756 = vadd.f32 %v460, %v695
      %v757 = vadd.f32 %v461, %v698
      %v758 = vadd.f32 %v462, %v700
      %v759 = vadd.f32 %v463, %v703
      %v760 = vadd.f32 %v464, %v705
      %v761 = vadd.f32 %v465, %v708
      %v762 = vadd.f32 %v466, %v710
      %v763 = vadd.f32 %v467, %v713
      %v764 = vadd.f32 %v468, %v715
      %v765 = vadd.f32 %v469, %v718
      %v766 = vadd.f32 %v470, %v720
      %v767 = vadd.f32 %v471, %v723
      %v768 = vadd.f32 %v472, %v725
      %v769 = vadd.f32 %v473, %v728
      %v770 = vadd.f32 %v474, %v730
      %v771 = vadd.f32 %v475, %v733
      %v772 = vadd.f32 %v476, %v735
      %vm773 = vcmask 130048
      %774 = vst.msk [vmem:[#allocation2] sm:$0xff] %vm773, %v737
      %775 = vst.msk [vmem:[#allocation2 + $0x8] sm:$0xff] %vm773, %v738
      %776 = vst.msk [vmem:[#allocation2 + $0x10] sm:$0xff] %vm773, %v739
      %777 = vst.msk [vmem:[#allocation2 + $0x18] sm:$0xff] %vm773, %v740
      %778 = vst.msk [vmem:[#allocation2 + $0x20] sm:$0xff] %vm773, %v741
      %779 = vst.msk [vmem:[#allocation2 + $0x28] sm:$0xff] %vm773, %v742
      %780 = vst.msk [vmem:[#allocation2 + $0x30] sm:$0xff] %vm773, %v743
      %781 = vst.msk [vmem:[#allocation2 + $0x38] sm:$0xff] %vm773, %v744
      %782 = vst.msk [vmem:[#allocation2 + $0x40] sm:$0xff] %vm773, %v745
      %783 = vst.msk [vmem:[#allocation2 + $0x48] sm:$0xff] %vm773, %v746
      %784 = vst.msk [vmem:[#allocation2 + $0x50] sm:$0xff] %vm773, %v747
      %785 = vst.msk [vmem:[#allocation2 + $0x58] sm:$0xff] %vm773, %v748
      %786 = vst.msk [vmem:[#allocation2 + $0x60] sm:$0xff] %vm773, %v749
      %787 = vst.msk [vmem:[#allocation2 + $0x68] sm:$0xff] %vm773, %v750
      %788 = vst.msk [vmem:[#allocation2 + $0x70] sm:$0xff] %vm773, %v751
      %789 = vst.msk [vmem:[#allocation2 + $0x78] sm:$0xff] %vm773, %v752
      %790 = vst.msk [vmem:[#allocation2 + $0x80] sm:$0xff] %vm773, %v753
      %791 = vst.msk [vmem:[#allocation2 + $0x88] sm:$0xff] %vm773, %v754
      %792 = vst.msk [vmem:[#allocation2 + $0x90] sm:$0xff] %vm773, %v755
      %793 = vst.msk [vmem:[#allocation2 + $0x98] sm:$0xff] %vm773, %v756
      %794 = vst.msk [vmem:[#allocation2 + $0xa0] sm:$0xff] %vm773, %v757
      %795 = vst.msk [vmem:[#allocation2 + $0xa8] sm:$0xff] %vm773, %v758
      %796 = vst.msk [vmem:[#allocation2 + $0xb0] sm:$0xff] %vm773, %v759
      %797 = vst.msk [vmem:[#allocation2 + $0xb8] sm:$0xff] %vm773, %v760
      %798 = vst.msk [vmem:[#allocation2 + $0xc0] sm:$0xff] %vm773, %v761
      %799 = vst.msk [vmem:[#allocation2 + $0xc8] sm:$0xff] %vm773, %v762
      %800 = vst.msk [vmem:[#allocation2 + $0xd0] sm:$0xff] %vm773, %v763
      %801 = vst.msk [vmem:[#allocation2 + $0xd8] sm:$0xff] %vm773, %v764
      %802 = vst.msk [vmem:[#allocation2 + $0xe0] sm:$0xff] %vm773, %v765
      %803 = vst.msk [vmem:[#allocation2 + $0xe8] sm:$0xff] %vm773, %v766
      %804 = vst.msk [vmem:[#allocation2 + $0xf0] sm:$0xff] %vm773, %v767
      %805 = vst.msk [vmem:[#allocation2 + $0xf8] sm:$0xff] %vm773, %v768
      %806 = vst.msk [vmem:[#allocation2 + $0x100] sm:$0xff] %vm773, %v769
      %807 = vst.msk [vmem:[#allocation2 + $0x108] sm:$0xff] %vm773, %v770
      %808 = vst.msk [vmem:[#allocation2 + $0x110] sm:$0xff] %vm773, %v771
      %809 = vst.msk [vmem:[#allocation2 + $0x118] sm:$0xff] %vm773, %v772
      %v810 = vld [vmem:[%s329] sm:$0xf]
      %v811 = vld [vmem:[%s329 + $0x4] sm:$0xf]
      %v812 = vld [vmem:[%s329 + $0x8] sm:$0xf]
      %v813 = vld [vmem:[%s329 + $0xc] sm:$0xf]
      %v814 = vld [vmem:[%s329 + $0x10] sm:$0xf]
      %v815 = vld [vmem:[%s329 + $0x14] sm:$0xf]
      %v816 = vld [vmem:[%s329 + $0x18] sm:$0xf]
      %v817 = vld [vmem:[%s329 + $0x1c] sm:$0xf]
      %v818 = vld [vmem:[%s329 + $0x20] sm:$0xf]
      %v819 = vld [vmem:[%s329 + $0x24] sm:$0xf]
      %v820 = vld [vmem:[%s329 + $0x28] sm:$0xf]
      %v821 = vld [vmem:[%s329 + $0x2c] sm:$0xf]
      %v822 = vld [vmem:[%s329 + $0x30] sm:$0xf]
      %v823 = vld [vmem:[%s329 + $0x34] sm:$0xf]
      %v824 = vld [vmem:[%s329 + $0x38] sm:$0xf]
      %v825 = vld [vmem:[%s329 + $0x3c] sm:$0xf]
      %v826 = vld [vmem:[%s329 + $0x40] sm:$0xf]
      %v827 = vld [vmem:[%s329 + $0x44] sm:$0xf]
      %v828 = vld [vmem:[%s329 + $0x48] sm:$0xf]
      %v829 = vld [vmem:[%s329 + $0x4c] sm:$0xf]
      %v830 = vld [vmem:[%s329 + $0x50] sm:$0xf]
      %v831 = vld [vmem:[%s329 + $0x54] sm:$0xf]
      %v832 = vld [vmem:[%s329 + $0x58] sm:$0xf]
      %v833 = vld [vmem:[%s329 + $0x5c] sm:$0xf]
      %v834 = vld [vmem:[%s329 + $0x60] sm:$0xf]
      %v835 = vld [vmem:[%s329 + $0x64] sm:$0xf]
      %v836 = vld [vmem:[%s329 + $0x68] sm:$0xf]
      %v837 = vld [vmem:[%s329 + $0x6c] sm:$0xf]
      %v838 = vld [vmem:[%s329 + $0x70] sm:$0xf]
      %v839 = vld [vmem:[%s329 + $0x74] sm:$0xf]
      %v840 = vld [vmem:[%s329 + $0x78] sm:$0xf]
      %v841 = vld [vmem:[%s329 + $0x7c] sm:$0xf]
      %v842 = vld [vmem:[%s329 + $0x80] sm:$0xf]
      %v843 = vld [vmem:[%s329 + $0x84] sm:$0xf]
      %v844 = vld [vmem:[%s329 + $0x88] sm:$0xf]
      %v845 = vld [vmem:[%s329 + $0x8c] sm:$0xf]
      %v846 = vld [vmem:[%s329 + $0x90] sm:$0x1]
      %v847 = vld [vmem:[#allocation2] sm:$0xff]
      %v848 = vld [vmem:[#allocation2 + $0x8] sm:$0xff]
      %v849 = vld [vmem:[#allocation2 + $0x10] sm:$0xff]
      %v850 = vld [vmem:[#allocation2 + $0x18] sm:$0xff]
      %v851 = vld [vmem:[#allocation2 + $0x20] sm:$0xff]
      %v852 = vld [vmem:[#allocation2 + $0x28] sm:$0xff]
      %v853 = vld [vmem:[#allocation2 + $0x30] sm:$0xff]
      %v854 = vld [vmem:[#allocation2 + $0x38] sm:$0xff]
      %v855 = vld [vmem:[#allocation2 + $0x40] sm:$0xff]
      %v856 = vld [vmem:[#allocation2 + $0x48] sm:$0xff]
      %v857 = vld [vmem:[#allocation2 + $0x50] sm:$0xff]
      %v858 = vld [vmem:[#allocation2 + $0x58] sm:$0xff]
      %v859 = vld [vmem:[#allocation2 + $0x60] sm:$0xff]
      %v860 = vld [vmem:[#allocation2 + $0x68] sm:$0xff]
      %v861 = vld [vmem:[#allocation2 + $0x70] sm:$0xff]
      %v862 = vld [vmem:[#allocation2 + $0x78] sm:$0xff]
      %v863 = vld [vmem:[#allocation2 + $0x80] sm:$0xff]
      %v864 = vld [vmem:[#allocation2 + $0x88] sm:$0xff]
      %v865 = vld [vmem:[#allocation2 + $0x90] sm:$0xff]
      %v866 = vld [vmem:[#allocation2 + $0x98] sm:$0xff]
      %v867 = vld [vmem:[#allocation2 + $0xa0] sm:$0xff]
      %v868 = vld [vmem:[#allocation2 + $0xa8] sm:$0xff]
      %v869 = vld [vmem:[#allocation2 + $0xb0] sm:$0xff]
      %v870 = vld [vmem:[#allocation2 + $0xb8] sm:$0xff]
      %v871 = vld [vmem:[#allocation2 + $0xc0] sm:$0xff]
      %v872 = vld [vmem:[#allocation2 + $0xc8] sm:$0xff]
      %v873 = vld [vmem:[#allocation2 + $0xd0] sm:$0xff]
      %v874 = vld [vmem:[#allocation2 + $0xd8] sm:$0xff]
      %v875 = vld [vmem:[#allocation2 + $0xe0] sm:$0xff]
      %v876 = vld [vmem:[#allocation2 + $0xe8] sm:$0xff]
      %v877 = vld [vmem:[#allocation2 + $0xf0] sm:$0xff]
      %v878 = vld [vmem:[#allocation2 + $0xf8] sm:$0xff]
      %v879 = vld [vmem:[#allocation2 + $0x100] sm:$0xff]
      %v880 = vld [vmem:[#allocation2 + $0x108] sm:$0xff]
      %v881 = vld [vmem:[#allocation2 + $0x110] sm:$0xff]
      %v882 = vld [vmem:[#allocation2 + $0x118] sm:$0xff]
      %s883 = scalar_lea.vmem %s335, 16
      %v884 = vld [vmem:[%s883] sm:$0xf]
      %v885 = vld [vmem:[%s883 + $0x4] sm:$0xf]
      %v886 = vld [vmem:[%s883 + $0x8] sm:$0xf]
      %v887 = vld [vmem:[%s883 + $0xc] sm:$0xf]
      %v925 = vunpack.c.l.b16 %v810
      %v926 = vunpack.c.l.b16 %v811
      %v927 = vunpack.c.l.b16 %v812
      %v928 = vunpack.c.l.b16 %v813
      %v929 = vunpack.c.l.b16 %v814
      %v930 = vunpack.c.l.b16 %v815
      %v931 = vunpack.c.l.b16 %v816
      %v932 = vunpack.c.l.b16 %v817
      %v933 = vunpack.c.l.b16 %v818
      %v934 = vunpack.c.l.b16 %v819
      %v935 = vunpack.c.l.b16 %v820
      %v936 = vunpack.c.l.b16 %v821
      %v937 = vunpack.c.l.b16 %v822
      %v938 = vunpack.c.l.b16 %v823
      %v939 = vunpack.c.l.b16 %v824
      %v940 = vunpack.c.l.b16 %v825
      %v941 = vunpack.c.l.b16 %v826
      %v942 = vunpack.c.l.b16 %v827
      %v943 = vunpack.c.l.b16 %v828
      %v944 = vunpack.c.l.b16 %v829
      %v945 = vunpack.c.l.b16 %v830
      %v946 = vunpack.c.l.b16 %v831
      %v947 = vunpack.c.l.b16 %v832
      %v948 = vunpack.c.l.b16 %v833
      %v949 = vunpack.c.l.b16 %v834
      %v950 = vunpack.c.l.b16 %v835
      %v951 = vunpack.c.l.b16 %v836
      %v952 = vunpack.c.l.b16 %v837
      %v953 = vunpack.c.l.b16 %v838
      %v954 = vunpack.c.l.b16 %v839
      %v955 = vunpack.c.l.b16 %v840
      %v956 = vunpack.c.l.b16 %v841
      %v957 = vunpack.c.l.b16 %v842
      %v958 = vunpack.c.l.b16 %v843
      %v959 = vunpack.c.l.b16 %v844
      %v960 = vunpack.c.l.b16 %v845
      %v961 = vunpack.c.l.b16 %v846
      %v962 = vpack.c.b16 %v926, %v925
      %v963 = vpack.c.b16 %v928, %v927
      %v964 = vpack.c.b16 %v930, %v929
      %v965 = vpack.c.b16 %v932, %v931
      %v966 = vpack.c.b16 %v934, %v933
      %v967 = vpack.c.b16 %v936, %v935
      %v968 = vpack.c.b16 %v938, %v937
      %v969 = vpack.c.b16 %v940, %v939
      %v970 = vpack.c.b16 %v942, %v941
      %v971 = vpack.c.b16 %v944, %v943
      %v972 = vpack.c.b16 %v946, %v945
      %v973 = vpack.c.b16 %v948, %v947
      %v974 = vpack.c.b16 %v950, %v949
      %v975 = vpack.c.b16 %v952, %v951
      %v976 = vpack.c.b16 %v954, %v953
      %v977 = vpack.c.b16 %v956, %v955
      %v978 = vpack.c.b16 %v958, %v957
      %v979 = vpack.c.b16 %v960, %v959
      %v980 = vpack.c.b16 %v961, %v961
      %vm981 = vsmask.f32 7424
      %v983 = vshrl.u32 %v962, 16
      %v985 = vshll.u32 %v962, 16
      %v987 = vrot.slane %v985, 1
      %v988 = vor.u32 %v983, %v987
      %v990 = vshll.u32 %v963, 16
      %v992 = vrot.slane %v990, 1
      %v993 = vsel %vm981, %v988, %v992
      %v994 = vshrl.u32 %v963, 16
      %v996 = vor.u32 %v994, %v992
      %v998 = vshll.u32 %v964, 16
      %v1000 = vrot.slane %v998, 1
      %v1001 = vsel %vm981, %v996, %v1000
      %v1002 = vshrl.u32 %v964, 16
      %v1004 = vor.u32 %v1002, %v1000
      %v1006 = vshll.u32 %v965, 16
      %v1008 = vrot.slane %v1006, 1
      %v1009 = vsel %vm981, %v1004, %v1008
      %v1010 = vshrl.u32 %v965, 16
      %v1012 = vor.u32 %v1010, %v1008
      %v1014 = vshll.u32 %v966, 16
      %v1016 = vrot.slane %v1014, 1
      %v1017 = vsel %vm981, %v1012, %v1016
      %v1018 = vshrl.u32 %v966, 16
      %v1020 = vor.u32 %v1018, %v1016
      %v1022 = vshll.u32 %v967, 16
      %v1024 = vrot.slane %v1022, 1
      %v1025 = vsel %vm981, %v1020, %v1024
      %v1026 = vshrl.u32 %v967, 16
      %v1028 = vor.u32 %v1026, %v1024
      %v1030 = vshll.u32 %v968, 16
      %v1032 = vrot.slane %v1030, 1
      %v1033 = vsel %vm981, %v1028, %v1032
      %v1034 = vshrl.u32 %v968, 16
      %v1036 = vor.u32 %v1034, %v1032
      %v1038 = vshll.u32 %v969, 16
      %v1040 = vrot.slane %v1038, 1
      %v1041 = vsel %vm981, %v1036, %v1040
      %v1042 = vshrl.u32 %v969, 16
      %v1044 = vor.u32 %v1042, %v1040
      %v1046 = vshll.u32 %v970, 16
      %v1048 = vrot.slane %v1046, 1
      %v1049 = vsel %vm981, %v1044, %v1048
      %v1050 = vshrl.u32 %v970, 16
      %v1052 = vor.u32 %v1050, %v1048
      %v1054 = vshll.u32 %v971, 16
      %v1056 = vrot.slane %v1054, 1
      %v1057 = vsel %vm981, %v1052, %v1056
      %v1058 = vshrl.u32 %v971, 16
      %v1060 = vor.u32 %v1058, %v1056
      %v1062 = vshll.u32 %v972, 16
      %v1064 = vrot.slane %v1062, 1
      %v1065 = vsel %vm981, %v1060, %v1064
      %v1066 = vshrl.u32 %v972, 16
      %v1068 = vor.u32 %v1066, %v1064
      %v1070 = vshll.u32 %v973, 16
      %v1072 = vrot.slane %v1070, 1
      %v1073 = vsel %vm981, %v1068, %v1072
      %v1074 = vshrl.u32 %v973, 16
      %v1076 = vor.u32 %v1074, %v1072
      %v1078 = vshll.u32 %v974, 16
      %v1080 = vrot.slane %v1078, 1
      %v1081 = vsel %vm981, %v1076, %v1080
      %v1082 = vshrl.u32 %v974, 16
      %v1084 = vor.u32 %v1082, %v1080
      %v1086 = vshll.u32 %v975, 16
      %v1088 = vrot.slane %v1086, 1
      %v1089 = vsel %vm981, %v1084, %v1088
      %v1090 = vshrl.u32 %v975, 16
      %v1092 = vor.u32 %v1090, %v1088
      %v1094 = vshll.u32 %v976, 16
      %v1096 = vrot.slane %v1094, 1
      %v1097 = vsel %vm981, %v1092, %v1096
      %v1098 = vshrl.u32 %v976, 16
      %v1100 = vor.u32 %v1098, %v1096
      %v1102 = vshll.u32 %v977, 16
      %v1104 = vrot.slane %v1102, 1
      %v1105 = vsel %vm981, %v1100, %v1104
      %v1106 = vshrl.u32 %v977, 16
      %v1108 = vor.u32 %v1106, %v1104
      %v1110 = vshll.u32 %v978, 16
      %v1112 = vrot.slane %v1110, 1
      %v1113 = vsel %vm981, %v1108, %v1112
      %v1114 = vshrl.u32 %v978, 16
      %v1116 = vor.u32 %v1114, %v1112
      %v1118 = vshll.u32 %v979, 16
      %v1120 = vrot.slane %v1118, 1
      %v1121 = vsel %vm981, %v1116, %v1120
      %v1122 = vshrl.u32 %v979, 16
      %v1124 = vor.u32 %v1122, %v1120
      %v1126 = vshll.u32 %v980, 16
      %v1128 = vrot.slane %v1126, 1
      %v1129 = vsel %vm981, %v1124, %v1128
      %v1134 = vunpack.c.l.b16 %v884
      %v1135 = vunpack.c.l.b16 %v885
      %v1136 = vunpack.c.l.b16 %v886
      %v1137 = vunpack.c.l.b16 %v887
      %v1138 = vpack.c.b16 %v1135, %v1134
      %v1139 = vpack.c.b16 %v1137, %v1136
      %v1143 = vsel %vm583, %v993, 0
      %v1146 = vsel %vm583, %v1001, 0
      %v1149 = vsel %vm583, %v1009, 0
      %v1152 = vsel %vm583, %v1017, 0
      %v1155 = vsel %vm583, %v1025, 0
      %v1158 = vsel %vm583, %v1033, 0
      %v1161 = vsel %vm583, %v1041, 0
      %v1164 = vsel %vm583, %v1049, 0
      %v1167 = vsel %vm583, %v1057, 0
      %v1170 = vsel %vm583, %v1065, 0
      %v1173 = vsel %vm583, %v1073, 0
      %v1176 = vsel %vm583, %v1081, 0
      %v1179 = vsel %vm583, %v1089, 0
      %v1182 = vsel %vm583, %v1097, 0
      %v1185 = vsel %vm583, %v1105, 0
      %v1188 = vsel %vm583, %v1113, 0
      %v1191 = vsel %vm583, %v1121, 0
      %v1194 = vsel %vm583, %v1129, 0
      %1196 = vmatpush.bf16.msra.mxu0 0
      %1197 = vmatpush.bf16.msra.mxu0 0
      %1198 = vmatpush.bf16.msra.mxu0 0
      %1199 = vmatpush.bf16.msra.mxu0 0
      %1200 = vmatpush.bf16.msra.mxu0 0
      %1201 = vmatpush.bf16.msra.mxu0 0
      %1202 = vmatpush.bf16.msra.mxu0 %v1139
      %1203 = vmatpush.bf16.msra.mxu0 %v1138
      %1204 = vmatmul.bf16.gmra.mxu0 %v1143
      %v1205 = vpop.f32.mrf.mxu0
      %v1206 = vadd.f32 0.0, %v1205
      %v1207 = vpop.f32.mrf.mxu0
      %v1208 = vadd.f32 0.0, %v1207
      %1209 = vmatmul.bf16.gmra.mxu0 %v1146
      %v1210 = vpop.f32.mrf.mxu0
      %v1211 = vadd.f32 0.0, %v1210
      %v1212 = vpop.f32.mrf.mxu0
      %v1213 = vadd.f32 0.0, %v1212
      %1214 = vmatmul.bf16.gmra.mxu0 %v1149
      %v1215 = vpop.f32.mrf.mxu0
      %v1216 = vadd.f32 0.0, %v1215
      %v1217 = vpop.f32.mrf.mxu0
      %v1218 = vadd.f32 0.0, %v1217
      %1219 = vmatmul.bf16.gmra.mxu0 %v1152
      %v1220 = vpop.f32.mrf.mxu0
      %v1221 = vadd.f32 0.0, %v1220
      %v1222 = vpop.f32.mrf.mxu0
      %v1223 = vadd.f32 0.0, %v1222
      %1224 = vmatmul.bf16.gmra.mxu0 %v1155
      %v1225 = vpop.f32.mrf.mxu0
      %v1226 = vadd.f32 0.0, %v1225
      %v1227 = vpop.f32.mrf.mxu0
      %v1228 = vadd.f32 0.0, %v1227
      %1229 = vmatmul.bf16.gmra.mxu0 %v1158
      %v1230 = vpop.f32.mrf.mxu0
      %v1231 = vadd.f32 0.0, %v1230
      %v1232 = vpop.f32.mrf.mxu0
      %v1233 = vadd.f32 0.0, %v1232
      %1234 = vmatmul.bf16.gmra.mxu0 %v1161
      %v1235 = vpop.f32.mrf.mxu0
      %v1236 = vadd.f32 0.0, %v1235
      %v1237 = vpop.f32.mrf.mxu0
      %v1238 = vadd.f32 0.0, %v1237
      %1239 = vmatmul.bf16.gmra.mxu0 %v1164
      %v1240 = vpop.f32.mrf.mxu0
      %v1241 = vadd.f32 0.0, %v1240
      %v1242 = vpop.f32.mrf.mxu0
      %v1243 = vadd.f32 0.0, %v1242
      %1244 = vmatmul.bf16.gmra.mxu0 %v1167
      %v1245 = vpop.f32.mrf.mxu0
      %v1246 = vadd.f32 0.0, %v1245
      %v1247 = vpop.f32.mrf.mxu0
      %v1248 = vadd.f32 0.0, %v1247
      %1249 = vmatmul.bf16.gmra.mxu0 %v1170
      %v1250 = vpop.f32.mrf.mxu0
      %v1251 = vadd.f32 0.0, %v1250
      %v1252 = vpop.f32.mrf.mxu0
      %v1253 = vadd.f32 0.0, %v1252
      %1254 = vmatmul.bf16.gmra.mxu0 %v1173
      %v1255 = vpop.f32.mrf.mxu0
      %v1256 = vadd.f32 0.0, %v1255
      %v1257 = vpop.f32.mrf.mxu0
      %v1258 = vadd.f32 0.0, %v1257
      %1259 = vmatmul.bf16.gmra.mxu0 %v1176
      %v1260 = vpop.f32.mrf.mxu0
      %v1261 = vadd.f32 0.0, %v1260
      %v1262 = vpop.f32.mrf.mxu0
      %v1263 = vadd.f32 0.0, %v1262
      %1264 = vmatmul.bf16.gmra.mxu0 %v1179
      %v1265 = vpop.f32.mrf.mxu0
      %v1266 = vadd.f32 0.0, %v1265
      %v1267 = vpop.f32.mrf.mxu0
      %v1268 = vadd.f32 0.0, %v1267
      %1269 = vmatmul.bf16.gmra.mxu0 %v1182
      %v1270 = vpop.f32.mrf.mxu0
      %v1271 = vadd.f32 0.0, %v1270
      %v1272 = vpop.f32.mrf.mxu0
      %v1273 = vadd.f32 0.0, %v1272
      %1274 = vmatmul.bf16.gmra.mxu0 %v1185
      %v1275 = vpop.f32.mrf.mxu0
      %v1276 = vadd.f32 0.0, %v1275
      %v1277 = vpop.f32.mrf.mxu0
      %v1278 = vadd.f32 0.0, %v1277
      %1279 = vmatmul.bf16.gmra.mxu0 %v1188
      %v1280 = vpop.f32.mrf.mxu0
      %v1281 = vadd.f32 0.0, %v1280
      %v1282 = vpop.f32.mrf.mxu0
      %v1283 = vadd.f32 0.0, %v1282
      %1284 = vmatmul.bf16.gmra.mxu0 %v1191
      %v1285 = vpop.f32.mrf.mxu0
      %v1286 = vadd.f32 0.0, %v1285
      %v1287 = vpop.f32.mrf.mxu0
      %v1288 = vadd.f32 0.0, %v1287
      %1289 = vmatmul.bf16.gmra.mxu0 %v1194
      %v1290 = vpop.f32.mrf.mxu0
      %v1291 = vadd.f32 0.0, %v1290
      %v1292 = vpop.f32.mrf.mxu0
      %v1293 = vadd.f32 0.0, %v1292
      %1294 = vdwg.mxu0
      %v1295 = vadd.f32 %v847, %v1206
      %v1296 = vadd.f32 %v848, %v1208
      %v1297 = vadd.f32 %v849, %v1211
      %v1298 = vadd.f32 %v850, %v1213
      %v1299 = vadd.f32 %v851, %v1216
      %v1300 = vadd.f32 %v852, %v1218
      %v1301 = vadd.f32 %v853, %v1221
      %v1302 = vadd.f32 %v854, %v1223
      %v1303 = vadd.f32 %v855, %v1226
      %v1304 = vadd.f32 %v856, %v1228
      %v1305 = vadd.f32 %v857, %v1231
      %v1306 = vadd.f32 %v858, %v1233
      %v1307 = vadd.f32 %v859, %v1236
      %v1308 = vadd.f32 %v860, %v1238
      %v1309 = vadd.f32 %v861, %v1241
      %v1310 = vadd.f32 %v862, %v1243
      %v1311 = vadd.f32 %v863, %v1246
      %v1312 = vadd.f32 %v864, %v1248
      %v1313 = vadd.f32 %v865, %v1251
      %v1314 = vadd.f32 %v866, %v1253
      %v1315 = vadd.f32 %v867, %v1256
      %v1316 = vadd.f32 %v868, %v1258
      %v1317 = vadd.f32 %v869, %v1261
      %v1318 = vadd.f32 %v870, %v1263
      %v1319 = vadd.f32 %v871, %v1266
      %v1320 = vadd.f32 %v872, %v1268
      %v1321 = vadd.f32 %v873, %v1271
      %v1322 = vadd.f32 %v874, %v1273
      %v1323 = vadd.f32 %v875, %v1276
      %v1324 = vadd.f32 %v876, %v1278
      %v1325 = vadd.f32 %v877, %v1281
      %v1326 = vadd.f32 %v878, %v1283
      %v1327 = vadd.f32 %v879, %v1286
      %v1328 = vadd.f32 %v880, %v1288
      %v1329 = vadd.f32 %v881, %v1291
      %v1330 = vadd.f32 %v882, %v1293
      %1331 = vst.msk [vmem:[#allocation2] sm:$0xff] %vm773, %v1295
      %1332 = vst.msk [vmem:[#allocation2 + $0x8] sm:$0xff] %vm773, %v1296
      %1333 = vst.msk [vmem:[#allocation2 + $0x10] sm:$0xff] %vm773, %v1297
      %1334 = vst.msk [vmem:[#allocation2 + $0x18] sm:$0xff] %vm773, %v1298
      %1335 = vst.msk [vmem:[#allocation2 + $0x20] sm:$0xff] %vm773, %v1299
      %1336 = vst.msk [vmem:[#allocation2 + $0x28] sm:$0xff] %vm773, %v1300
      %1337 = vst.msk [vmem:[#allocation2 + $0x30] sm:$0xff] %vm773, %v1301
      %1338 = vst.msk [vmem:[#allocation2 + $0x38] sm:$0xff] %vm773, %v1302
      %1339 = vst.msk [vmem:[#allocation2 + $0x40] sm:$0xff] %vm773, %v1303
      %1340 = vst.msk [vmem:[#allocation2 + $0x48] sm:$0xff] %vm773, %v1304
      %1341 = vst.msk [vmem:[#allocation2 + $0x50] sm:$0xff] %vm773, %v1305
      %1342 = vst.msk [vmem:[#allocation2 + $0x58] sm:$0xff] %vm773, %v1306
      %1343 = vst.msk [vmem:[#allocation2 + $0x60] sm:$0xff] %vm773, %v1307
      %1344 = vst.msk [vmem:[#allocation2 + $0x68] sm:$0xff] %vm773, %v1308
      %1345 = vst.msk [vmem:[#allocation2 + $0x70] sm:$0xff] %vm773, %v1309
      %1346 = vst.msk [vmem:[#allocation2 + $0x78] sm:$0xff] %vm773, %v1310
      %1347 = vst.msk [vmem:[#allocation2 + $0x80] sm:$0xff] %vm773, %v1311
      %1348 = vst.msk [vmem:[#allocation2 + $0x88] sm:$0xff] %vm773, %v1312
      %1349 = vst.msk [vmem:[#allocation2 + $0x90] sm:$0xff] %vm773, %v1313
      %1350 = vst.msk [vmem:[#allocation2 + $0x98] sm:$0xff] %vm773, %v1314
      %1351 = vst.msk [vmem:[#allocation2 + $0xa0] sm:$0xff] %vm773, %v1315
      %1352 = vst.msk [vmem:[#allocation2 + $0xa8] sm:$0xff] %vm773, %v1316
      %1353 = vst.msk [vmem:[#allocation2 + $0xb0] sm:$0xff] %vm773, %v1317
      %1354 = vst.msk [vmem:[#allocation2 + $0xb8] sm:$0xff] %vm773, %v1318
      %1355 = vst.msk [vmem:[#allocation2 + $0xc0] sm:$0xff] %vm773, %v1319
      %1356 = vst.msk [vmem:[#allocation2 + $0xc8] sm:$0xff] %vm773, %v1320
      %1357 = vst.msk [vmem:[#allocation2 + $0xd0] sm:$0xff] %vm773, %v1321
      %1358 = vst.msk [vmem:[#allocation2 + $0xd8] sm:$0xff] %vm773, %v1322
      %1359 = vst.msk [vmem:[#allocation2 + $0xe0] sm:$0xff] %vm773, %v1323
      %1360 = vst.msk [vmem:[#allocation2 + $0xe8] sm:$0xff] %vm773, %v1324
      %1361 = vst.msk [vmem:[#allocation2 + $0xf0] sm:$0xff] %vm773, %v1325
      %1362 = vst.msk [vmem:[#allocation2 + $0xf8] sm:$0xff] %vm773, %v1326
      %1363 = vst.msk [vmem:[#allocation2 + $0x100] sm:$0xff] %vm773, %v1327
      %1364 = vst.msk [vmem:[#allocation2 + $0x108] sm:$0xff] %vm773, %v1328
      %1365 = vst.msk [vmem:[#allocation2 + $0x110] sm:$0xff] %vm773, %v1329
      %1366 = vst.msk [vmem:[#allocation2 + $0x118] sm:$0xff] %vm773, %v1330
      %v1367 = vld [vmem:[%s329] sm:$0xe]
      %v1368 = vld [vmem:[%s329 + $0x4] sm:$0xf]
      %v1369 = vld [vmem:[%s329 + $0x8] sm:$0xf]
      %v1370 = vld [vmem:[%s329 + $0xc] sm:$0xf]
      %v1371 = vld [vmem:[%s329 + $0x10] sm:$0xf]
      %v1372 = vld [vmem:[%s329 + $0x14] sm:$0xf]
      %v1373 = vld [vmem:[%s329 + $0x18] sm:$0xf]
      %v1374 = vld [vmem:[%s329 + $0x1c] sm:$0xf]
      %v1375 = vld [vmem:[%s329 + $0x20] sm:$0xf]
      %v1376 = vld [vmem:[%s329 + $0x24] sm:$0xf]
      %v1377 = vld [vmem:[%s329 + $0x28] sm:$0xf]
      %v1378 = vld [vmem:[%s329 + $0x2c] sm:$0xf]
      %v1379 = vld [vmem:[%s329 + $0x30] sm:$0xf]
      %v1380 = vld [vmem:[%s329 + $0x34] sm:$0xf]
      %v1381 = vld [vmem:[%s329 + $0x38] sm:$0xf]
      %v1382 = vld [vmem:[%s329 + $0x3c] sm:$0xf]
      %v1383 = vld [vmem:[%s329 + $0x40] sm:$0xf]
      %v1384 = vld [vmem:[%s329 + $0x44] sm:$0xf]
      %v1385 = vld [vmem:[%s329 + $0x48] sm:$0xf]
      %v1386 = vld [vmem:[%s329 + $0x4c] sm:$0xf]
      %v1387 = vld [vmem:[%s329 + $0x50] sm:$0xf]
      %v1388 = vld [vmem:[%s329 + $0x54] sm:$0xf]
      %v1389 = vld [vmem:[%s329 + $0x58] sm:$0xf]
      %v1390 = vld [vmem:[%s329 + $0x5c] sm:$0xf]
      %v1391 = vld [vmem:[%s329 + $0x60] sm:$0xf]
      %v1392 = vld [vmem:[%s329 + $0x64] sm:$0xf]
      %v1393 = vld [vmem:[%s329 + $0x68] sm:$0xf]
      %v1394 = vld [vmem:[%s329 + $0x6c] sm:$0xf]
      %v1395 = vld [vmem:[%s329 + $0x70] sm:$0xf]
      %v1396 = vld [vmem:[%s329 + $0x74] sm:$0xf]
      %v1397 = vld [vmem:[%s329 + $0x78] sm:$0xf]
      %v1398 = vld [vmem:[%s329 + $0x7c] sm:$0xf]
      %v1399 = vld [vmem:[%s329 + $0x80] sm:$0xf]
      %v1400 = vld [vmem:[%s329 + $0x84] sm:$0xf]
      %v1401 = vld [vmem:[%s329 + $0x88] sm:$0xf]
      %v1402 = vld [vmem:[%s329 + $0x8c] sm:$0xf]
      %v1403 = vld [vmem:[%s329 + $0x90] sm:$0x1]
      %v1404 = vld [vmem:[#allocation2] sm:$0xff]
      %v1405 = vld [vmem:[#allocation2 + $0x8] sm:$0xff]
      %v1406 = vld [vmem:[#allocation2 + $0x10] sm:$0xff]
      %v1407 = vld [vmem:[#allocation2 + $0x18] sm:$0xff]
      %v1408 = vld [vmem:[#allocation2 + $0x20] sm:$0xff]
      %v1409 = vld [vmem:[#allocation2 + $0x28] sm:$0xff]
      %v1410 = vld [vmem:[#allocation2 + $0x30] sm:$0xff]
      %v1411 = vld [vmem:[#allocation2 + $0x38] sm:$0xff]
      %v1412 = vld [vmem:[#allocation2 + $0x40] sm:$0xff]
      %v1413 = vld [vmem:[#allocation2 + $0x48] sm:$0xff]
      %v1414 = vld [vmem:[#allocation2 + $0x50] sm:$0xff]
      %v1415 = vld [vmem:[#allocation2 + $0x58] sm:$0xff]
      %v1416 = vld [vmem:[#allocation2 + $0x60] sm:$0xff]
      %v1417 = vld [vmem:[#allocation2 + $0x68] sm:$0xff]
      %v1418 = vld [vmem:[#allocation2 + $0x70] sm:$0xff]
      %v1419 = vld [vmem:[#allocation2 + $0x78] sm:$0xff]
      %v1420 = vld [vmem:[#allocation2 + $0x80] sm:$0xff]
      %v1421 = vld [vmem:[#allocation2 + $0x88] sm:$0xff]
      %v1422 = vld [vmem:[#allocation2 + $0x90] sm:$0xff]
      %v1423 = vld [vmem:[#allocation2 + $0x98] sm:$0xff]
      %v1424 = vld [vmem:[#allocation2 + $0xa0] sm:$0xff]
      %v1425 = vld [vmem:[#allocation2 + $0xa8] sm:$0xff]
      %v1426 = vld [vmem:[#allocation2 + $0xb0] sm:$0xff]
      %v1427 = vld [vmem:[#allocation2 + $0xb8] sm:$0xff]
      %v1428 = vld [vmem:[#allocation2 + $0xc0] sm:$0xff]
      %v1429 = vld [vmem:[#allocation2 + $0xc8] sm:$0xff]
      %v1430 = vld [vmem:[#allocation2 + $0xd0] sm:$0xff]
      %v1431 = vld [vmem:[#allocation2 + $0xd8] sm:$0xff]
      %v1432 = vld [vmem:[#allocation2 + $0xe0] sm:$0xff]
      %v1433 = vld [vmem:[#allocation2 + $0xe8] sm:$0xff]
      %v1434 = vld [vmem:[#allocation2 + $0xf0] sm:$0xff]
      %v1435 = vld [vmem:[#allocation2 + $0xf8] sm:$0xff]
      %v1436 = vld [vmem:[#allocation2 + $0x100] sm:$0xff]
      %v1437 = vld [vmem:[#allocation2 + $0x108] sm:$0xff]
      %v1438 = vld [vmem:[#allocation2 + $0x110] sm:$0xff]
      %v1439 = vld [vmem:[#allocation2 + $0x118] sm:$0xff]
      %s1440 = scalar_lea.vmem %s335, 32
      %v1441 = vld [vmem:[%s1440] sm:$0xf]
      %v1442 = vld [vmem:[%s1440 + $0x4] sm:$0xf]
      %v1443 = vld [vmem:[%s1440 + $0x8] sm:$0xf]
      %v1444 = vld [vmem:[%s1440 + $0xc] sm:$0xf]
      %v1482 = vunpack.c.l.b16 %v1367
      %v1483 = vunpack.c.l.b16 %v1368
      %v1484 = vunpack.c.l.b16 %v1369
      %v1485 = vunpack.c.l.b16 %v1370
      %v1486 = vunpack.c.l.b16 %v1371
      %v1487 = vunpack.c.l.b16 %v1372
      %v1488 = vunpack.c.l.b16 %v1373
      %v1489 = vunpack.c.l.b16 %v1374
      %v1490 = vunpack.c.l.b16 %v1375
      %v1491 = vunpack.c.l.b16 %v1376
      %v1492 = vunpack.c.l.b16 %v1377
      %v1493 = vunpack.c.l.b16 %v1378
      %v1494 = vunpack.c.l.b16 %v1379
      %v1495 = vunpack.c.l.b16 %v1380
      %v1496 = vunpack.c.l.b16 %v1381
      %v1497 = vunpack.c.l.b16 %v1382
      %v1498 = vunpack.c.l.b16 %v1383
      %v1499 = vunpack.c.l.b16 %v1384
      %v1500 = vunpack.c.l.b16 %v1385
      %v1501 = vunpack.c.l.b16 %v1386
      %v1502 = vunpack.c.l.b16 %v1387
      %v1503 = vunpack.c.l.b16 %v1388
      %v1504 = vunpack.c.l.b16 %v1389
      %v1505 = vunpack.c.l.b16 %v1390
      %v1506 = vunpack.c.l.b16 %v1391
      %v1507 = vunpack.c.l.b16 %v1392
      %v1508 = vunpack.c.l.b16 %v1393
      %v1509 = vunpack.c.l.b16 %v1394
      %v1510 = vunpack.c.l.b16 %v1395
      %v1511 = vunpack.c.l.b16 %v1396
      %v1512 = vunpack.c.l.b16 %v1397
      %v1513 = vunpack.c.l.b16 %v1398
      %v1514 = vunpack.c.l.b16 %v1399
      %v1515 = vunpack.c.l.b16 %v1400
      %v1516 = vunpack.c.l.b16 %v1401
      %v1517 = vunpack.c.l.b16 %v1402
      %v1518 = vunpack.c.l.b16 %v1403
      %v1519 = vpack.c.b16 %v1483, %v1482
      %v1520 = vpack.c.b16 %v1485, %v1484
      %v1521 = vpack.c.b16 %v1487, %v1486
      %v1522 = vpack.c.b16 %v1489, %v1488
      %v1523 = vpack.c.b16 %v1491, %v1490
      %v1524 = vpack.c.b16 %v1493, %v1492
      %v1525 = vpack.c.b16 %v1495, %v1494
      %v1526 = vpack.c.b16 %v1497, %v1496
      %v1527 = vpack.c.b16 %v1499, %v1498
      %v1528 = vpack.c.b16 %v1501, %v1500
      %v1529 = vpack.c.b16 %v1503, %v1502
      %v1530 = vpack.c.b16 %v1505, %v1504
      %v1531 = vpack.c.b16 %v1507, %v1506
      %v1532 = vpack.c.b16 %v1509, %v1508
      %v1533 = vpack.c.b16 %v1511, %v1510
      %v1534 = vpack.c.b16 %v1513, %v1512
      %v1535 = vpack.c.b16 %v1515, %v1514
      %v1536 = vpack.c.b16 %v1517, %v1516
      %v1537 = vpack.c.b16 %v1518, %v1518
      %vm1538 = vcmask 1046528
      %v1539 = vrot.slane %v1519, 1
      %v1540 = vrot.slane %v1520, 1
      %v1541 = vsel %vm1538, %v1539, %v1540
      %v1542 = vrot.slane %v1521, 1
      %v1543 = vsel %vm1538, %v1540, %v1542
      %v1544 = vrot.slane %v1522, 1
      %v1545 = vsel %vm1538, %v1542, %v1544
      %v1546 = vrot.slane %v1523, 1
      %v1547 = vsel %vm1538, %v1544, %v1546
      %v1548 = vrot.slane %v1524, 1
      %v1549 = vsel %vm1538, %v1546, %v1548
      %v1550 = vrot.slane %v1525, 1
      %v1551 = vsel %vm1538, %v1548, %v1550
      %v1552 = vrot.slane %v1526, 1
      %v1553 = vsel %vm1538, %v1550, %v1552
      %v1554 = vrot.slane %v1527, 1
      %v1555 = vsel %vm1538, %v1552, %v1554
      %v1556 = vrot.slane %v1528, 1
      %v1557 = vsel %vm1538, %v1554, %v1556
      %v1558 = vrot.slane %v1529, 1
      %v1559 = vsel %vm1538, %v1556, %v1558
      %v1560 = vrot.slane %v1530, 1
      %v1561 = vsel %vm1538, %v1558, %v1560
      %v1562 = vrot.slane %v1531, 1
      %v1563 = vsel %vm1538, %v1560, %v1562
      %v1564 = vrot.slane %v1532, 1
      %v1565 = vsel %vm1538, %v1562, %v1564
      %v1566 = vrot.slane %v1533, 1
      %v1567 = vsel %vm1538, %v1564, %v1566
      %v1568 = vrot.slane %v1534, 1
      %v1569 = vsel %vm1538, %v1566, %v1568
      %v1570 = vrot.slane %v1535, 1
      %v1571 = vsel %vm1538, %v1568, %v1570
      %v1572 = vrot.slane %v1536, 1
      %v1573 = vsel %vm1538, %v1570, %v1572
      %v1574 = vrot.slane %v1537, 1
      %v1575 = vsel %vm1538, %v1572, %v1574
      %v1580 = vunpack.c.l.b16 %v1441
      %v1581 = vunpack.c.l.b16 %v1442
      %v1582 = vunpack.c.l.b16 %v1443
      %v1583 = vunpack.c.l.b16 %v1444
      %v1584 = vpack.c.b16 %v1581, %v1580
      %v1585 = vpack.c.b16 %v1583, %v1582
      %v1589 = vsel %vm583, %v1541, 0
      %v1592 = vsel %vm583, %v1543, 0
      %v1595 = vsel %vm583, %v1545, 0
      %v1598 = vsel %vm583, %v1547, 0
      %v1601 = vsel %vm583, %v1549, 0
      %v1604 = vsel %vm583, %v1551, 0
      %v1607 = vsel %vm583, %v1553, 0
      %v1610 = vsel %vm583, %v1555, 0
      %v1613 = vsel %vm583, %v1557, 0
      %v1616 = vsel %vm583, %v1559, 0
      %v1619 = vsel %vm583, %v1561, 0
      %v1622 = vsel %vm583, %v1563, 0
      %v1625 = vsel %vm583, %v1565, 0
      %v1628 = vsel %vm583, %v1567, 0
      %v1631 = vsel %vm583, %v1569, 0
      %v1634 = vsel %vm583, %v1571, 0
      %v1637 = vsel %vm583, %v1573, 0
      %v1640 = vsel %vm583, %v1575, 0
      %1642 = vmatpush.bf16.msra.mxu0 0
      %1643 = vmatpush.bf16.msra.mxu0 0
      %1644 = vmatpush.bf16.msra.mxu0 0
      %1645 = vmatpush.bf16.msra.mxu0 0
      %1646 = vmatpush.bf16.msra.mxu0 0
      %1647 = vmatpush.bf16.msra.mxu0 0
      %1648 = vmatpush.bf16.msra.mxu0 %v1585
      %1649 = vmatpush.bf16.msra.mxu0 %v1584
      %1650 = vmatmul.bf16.gmra.mxu0 %v1589
      %v1651 = vpop.f32.mrf.mxu0
      %v1652 = vadd.f32 0.0, %v1651
      %v1653 = vpop.f32.mrf.mxu0
      %v1654 = vadd.f32 0.0, %v1653
      %1655 = vmatmul.bf16.gmra.mxu0 %v1592
      %v1656 = vpop.f32.mrf.mxu0
      %v1657 = vadd.f32 0.0, %v1656
      %v1658 = vpop.f32.mrf.mxu0
      %v1659 = vadd.f32 0.0, %v1658
      %1660 = vmatmul.bf16.gmra.mxu0 %v1595
      %v1661 = vpop.f32.mrf.mxu0
      %v1662 = vadd.f32 0.0, %v1661
      %v1663 = vpop.f32.mrf.mxu0
      %v1664 = vadd.f32 0.0, %v1663
      %1665 = vmatmul.bf16.gmra.mxu0 %v1598
      %v1666 = vpop.f32.mrf.mxu0
      %v1667 = vadd.f32 0.0, %v1666
      %v1668 = vpop.f32.mrf.mxu0
      %v1669 = vadd.f32 0.0, %v1668
      %1670 = vmatmul.bf16.gmra.mxu0 %v1601
      %v1671 = vpop.f32.mrf.mxu0
      %v1672 = vadd.f32 0.0, %v1671
      %v1673 = vpop.f32.mrf.mxu0
      %v1674 = vadd.f32 0.0, %v1673
      %1675 = vmatmul.bf16.gmra.mxu0 %v1604
      %v1676 = vpop.f32.mrf.mxu0
      %v1677 = vadd.f32 0.0, %v1676
      %v1678 = vpop.f32.mrf.mxu0
      %v1679 = vadd.f32 0.0, %v1678
      %1680 = vmatmul.bf16.gmra.mxu0 %v1607
      %v1681 = vpop.f32.mrf.mxu0
      %v1682 = vadd.f32 0.0, %v1681
      %v1683 = vpop.f32.mrf.mxu0
      %v1684 = vadd.f32 0.0, %v1683
      %1685 = vmatmul.bf16.gmra.mxu0 %v1610
      %v1686 = vpop.f32.mrf.mxu0
      %v1687 = vadd.f32 0.0, %v1686
      %v1688 = vpop.f32.mrf.mxu0
      %v1689 = vadd.f32 0.0, %v1688
      %1690 = vmatmul.bf16.gmra.mxu0 %v1613
      %v1691 = vpop.f32.mrf.mxu0
      %v1692 = vadd.f32 0.0, %v1691
      %v1693 = vpop.f32.mrf.mxu0
      %v1694 = vadd.f32 0.0, %v1693
      %1695 = vmatmul.bf16.gmra.mxu0 %v1616
      %v1696 = vpop.f32.mrf.mxu0
      %v1697 = vadd.f32 0.0, %v1696
      %v1698 = vpop.f32.mrf.mxu0
      %v1699 = vadd.f32 0.0, %v1698
      %1700 = vmatmul.bf16.gmra.mxu0 %v1619
      %v1701 = vpop.f32.mrf.mxu0
      %v1702 = vadd.f32 0.0, %v1701
      %v1703 = vpop.f32.mrf.mxu0
      %v1704 = vadd.f32 0.0, %v1703
      %1705 = vmatmul.bf16.gmra.mxu0 %v1622
      %v1706 = vpop.f32.mrf.mxu0
      %v1707 = vadd.f32 0.0, %v1706
      %v1708 = vpop.f32.mrf.mxu0
      %v1709 = vadd.f32 0.0, %v1708
      %1710 = vmatmul.bf16.gmra.mxu0 %v1625
      %v1711 = vpop.f32.mrf.mxu0
      %v1712 = vadd.f32 0.0, %v1711
      %v1713 = vpop.f32.mrf.mxu0
      %v1714 = vadd.f32 0.0, %v1713
      %1715 = vmatmul.bf16.gmra.mxu0 %v1628
      %v1716 = vpop.f32.mrf.mxu0
      %v1717 = vadd.f32 0.0, %v1716
      %v1718 = vpop.f32.mrf.mxu0
      %v1719 = vadd.f32 0.0, %v1718
      %1720 = vmatmul.bf16.gmra.mxu0 %v1631
      %v1721 = vpop.f32.mrf.mxu0
      %v1722 = vadd.f32 0.0, %v1721
      %v1723 = vpop.f32.mrf.mxu0
      %v1724 = vadd.f32 0.0, %v1723
      %1725 = vmatmul.bf16.gmra.mxu0 %v1634
      %v1726 = vpop.f32.mrf.mxu0
      %v1727 = vadd.f32 0.0, %v1726
      %v1728 = vpop.f32.mrf.mxu0
      %v1729 = vadd.f32 0.0, %v1728
      %1730 = vmatmul.bf16.gmra.mxu0 %v1637
      %v1731 = vpop.f32.mrf.mxu0
      %v1732 = vadd.f32 0.0, %v1731
      %v1733 = vpop.f32.mrf.mxu0
      %v1734 = vadd.f32 0.0, %v1733
      %1735 = vmatmul.bf16.gmra.mxu0 %v1640
      %v1736 = vpop.f32.mrf.mxu0
      %v1737 = vadd.f32 0.0, %v1736
      %v1738 = vpop.f32.mrf.mxu0
      %v1739 = vadd.f32 0.0, %v1738
      %1740 = vdwg.mxu0
      %v1741 = vadd.f32 %v1404, %v1652
      %v1742 = vadd.f32 %v1405, %v1654
      %v1743 = vadd.f32 %v1406, %v1657
      %v1744 = vadd.f32 %v1407, %v1659
      %v1745 = vadd.f32 %v1408, %v1662
      %v1746 = vadd.f32 %v1409, %v1664
      %v1747 = vadd.f32 %v1410, %v1667
      %v1748 = vadd.f32 %v1411, %v1669
      %v1749 = vadd.f32 %v1412, %v1672
      %v1750 = vadd.f32 %v1413, %v1674
      %v1751 = vadd.f32 %v1414, %v1677
      %v1752 = vadd.f32 %v1415, %v1679
      %v1753 = vadd.f32 %v1416, %v1682
      %v1754 = vadd.f32 %v1417, %v1684
      %v1755 = vadd.f32 %v1418, %v1687
      %v1756 = vadd.f32 %v1419, %v1689
      %v1757 = vadd.f32 %v1420, %v1692
      %v1758 = vadd.f32 %v1421, %v1694
      %v1759 = vadd.f32 %v1422, %v1697
      %v1760 = vadd.f32 %v1423, %v1699
      %v1761 = vadd.f32 %v1424, %v1702
      %v1762 = vadd.f32 %v1425, %v1704
      %v1763 = vadd.f32 %v1426, %v1707
      %v1764 = vadd.f32 %v1427, %v1709
      %v1765 = vadd.f32 %v1428, %v1712
      %v1766 = vadd.f32 %v1429, %v1714
      %v1767 = vadd.f32 %v1430, %v1717
      %v1768 = vadd.f32 %v1431, %v1719
      %v1769 = vadd.f32 %v1432, %v1722
      %v1770 = vadd.f32 %v1433, %v1724
      %v1771 = vadd.f32 %v1434, %v1727
      %v1772 = vadd.f32 %v1435, %v1729
      %v1773 = vadd.f32 %v1436, %v1732
      %v1774 = vadd.f32 %v1437, %v1734
      %v1775 = vadd.f32 %v1438, %v1737
      %v1776 = vadd.f32 %v1439, %v1739
      %1777 = vst.msk [vmem:[#allocation2] sm:$0xff] %vm773, %v1741
      %1778 = vst.msk [vmem:[#allocation2 + $0x8] sm:$0xff] %vm773, %v1742
      %1779 = vst.msk [vmem:[#allocation2 + $0x10] sm:$0xff] %vm773, %v1743
      %1780 = vst.msk [vmem:[#allocation2 + $0x18] sm:$0xff] %vm773, %v1744
      %1781 = vst.msk [vmem:[#allocation2 + $0x20] sm:$0xff] %vm773, %v1745
      %1782 = vst.msk [vmem:[#allocation2 + $0x28] sm:$0xff] %vm773, %v1746
      %1783 = vst.msk [vmem:[#allocation2 + $0x30] sm:$0xff] %vm773, %v1747
      %1784 = vst.msk [vmem:[#allocation2 + $0x38] sm:$0xff] %vm773, %v1748
      %1785 = vst.msk [vmem:[#allocation2 + $0x40] sm:$0xff] %vm773, %v1749
      %1786 = vst.msk [vmem:[#allocation2 + $0x48] sm:$0xff] %vm773, %v1750
      %1787 = vst.msk [vmem:[#allocation2 + $0x50] sm:$0xff] %vm773, %v1751
      %1788 = vst.msk [vmem:[#allocation2 + $0x58] sm:$0xff] %vm773, %v1752
      %1789 = vst.msk [vmem:[#allocation2 + $0x60] sm:$0xff] %vm773, %v1753
      %1790 = vst.msk [vmem:[#allocation2 + $0x68] sm:$0xff] %vm773, %v1754
      %1791 = vst.msk [vmem:[#allocation2 + $0x70] sm:$0xff] %vm773, %v1755
      %1792 = vst.msk [vmem:[#allocation2 + $0x78] sm:$0xff] %vm773, %v1756
      %1793 = vst.msk [vmem:[#allocation2 + $0x80] sm:$0xff] %vm773, %v1757
      %1794 = vst.msk [vmem:[#allocation2 + $0x88] sm:$0xff] %vm773, %v1758
      %1795 = vst.msk [vmem:[#allocation2 + $0x90] sm:$0xff] %vm773, %v1759
      %1796 = vst.msk [vmem:[#allocation2 + $0x98] sm:$0xff] %vm773, %v1760
      %1797 = vst.msk [vmem:[#allocation2 + $0xa0] sm:$0xff] %vm773, %v1761
      %1798 = vst.msk [vmem:[#allocation2 + $0xa8] sm:$0xff] %vm773, %v1762
      %1799 = vst.msk [vmem:[#allocation2 + $0xb0] sm:$0xff] %vm773, %v1763
      %1800 = vst.msk [vmem:[#allocation2 + $0xb8] sm:$0xff] %vm773, %v1764
      %1801 = vst.msk [vmem:[#allocation2 + $0xc0] sm:$0xff] %vm773, %v1765
      %1802 = vst.msk [vmem:[#allocation2 + $0xc8] sm:$0xff] %vm773, %v1766
      %1803 = vst.msk [vmem:[#allocation2 + $0xd0] sm:$0xff] %vm773, %v1767
      %1804 = vst.msk [vmem:[#allocation2 + $0xd8] sm:$0xff] %vm773, %v1768
      %1805 = vst.msk [vmem:[#allocation2 + $0xe0] sm:$0xff] %vm773, %v1769
      %1806 = vst.msk [vmem:[#allocation2 + $0xe8] sm:$0xff] %vm773, %v1770
      %1807 = vst.msk [vmem:[#allocation2 + $0xf0] sm:$0xff] %vm773, %v1771
      %1808 = vst.msk [vmem:[#allocation2 + $0xf8] sm:$0xff] %vm773, %v1772
      %1809 = vst.msk [vmem:[#allocation2 + $0x100] sm:$0xff] %vm773, %v1773
      %1810 = vst.msk [vmem:[#allocation2 + $0x108] sm:$0xff] %vm773, %v1774
      %1811 = vst.msk [vmem:[#allocation2 + $0x110] sm:$0xff] %vm773, %v1775
      %1812 = vst.msk [vmem:[#allocation2 + $0x118] sm:$0xff] %vm773, %v1776
      %v1813 = vld [vmem:[%s329 + $0x8] sm:$0xe]
      %v1814 = vld [vmem:[%s329 + $0xc] sm:$0xf]
      %v1815 = vld [vmem:[%s329 + $0x10] sm:$0xf]
      %v1816 = vld [vmem:[%s329 + $0x14] sm:$0xf]
      %v1817 = vld [vmem:[%s329 + $0x18] sm:$0xf]
      %v1818 = vld [vmem:[%s329 + $0x1c] sm:$0xf]
      %v1819 = vld [vmem:[%s329 + $0x20] sm:$0xf]
      %v1820 = vld [vmem:[%s329 + $0x24] sm:$0xf]
      %v1821 = vld [vmem:[%s329 + $0x28] sm:$0xf]
      %v1822 = vld [vmem:[%s329 + $0x2c] sm:$0xf]
      %v1823 = vld [vmem:[%s329 + $0x30] sm:$0xf]
      %v1824 = vld [vmem:[%s329 + $0x34] sm:$0xf]
      %v1825 = vld [vmem:[%s329 + $0x38] sm:$0xf]
      %v1826 = vld [vmem:[%s329 + $0x3c] sm:$0xf]
      %v1827 = vld [vmem:[%s329 + $0x40] sm:$0xf]
      %v1828 = vld [vmem:[%s329 + $0x44] sm:$0xf]
      %v1829 = vld [vmem:[%s329 + $0x48] sm:$0xf]
      %v1830 = vld [vmem:[%s329 + $0x4c] sm:$0xf]
      %v1831 = vld [vmem:[%s329 + $0x50] sm:$0xf]
      %v1832 = vld [vmem:[%s329 + $0x54] sm:$0xf]
      %v1833 = vld [vmem:[%s329 + $0x58] sm:$0xf]
      %v1834 = vld [vmem:[%s329 + $0x5c] sm:$0xf]
      %v1835 = vld [vmem:[%s329 + $0x60] sm:$0xf]
      %v1836 = vld [vmem:[%s329 + $0x64] sm:$0xf]
      %v1837 = vld [vmem:[%s329 + $0x68] sm:$0xf]
      %v1838 = vld [vmem:[%s329 + $0x6c] sm:$0xf]
      %v1839 = vld [vmem:[%s329 + $0x70] sm:$0xf]
      %v1840 = vld [vmem:[%s329 + $0x74] sm:$0xf]
      %v1841 = vld [vmem:[%s329 + $0x78] sm:$0xf]
      %v1842 = vld [vmem:[%s329 + $0x7c] sm:$0xf]
      %v1843 = vld [vmem:[%s329 + $0x80] sm:$0xf]
      %v1844 = vld [vmem:[%s329 + $0x84] sm:$0xf]
      %v1845 = vld [vmem:[%s329 + $0x88] sm:$0xf]
      %v1846 = vld [vmem:[%s329 + $0x8c] sm:$0xf]
      %v1847 = vld [vmem:[%s329 + $0x90] sm:$0xf]
      %v1848 = vld [vmem:[%s329 + $0x94] sm:$0xf]
      %v1849 = vld [vmem:[%s329 + $0x98] sm:$0x1]
      %v1850 = vld [vmem:[#allocation2] sm:$0xff]
      %v1851 = vld [vmem:[#allocation2 + $0x8] sm:$0xff]
      %v1852 = vld [vmem:[#allocation2 + $0x10] sm:$0xff]
      %v1853 = vld [vmem:[#allocation2 + $0x18] sm:$0xff]
      %v1854 = vld [vmem:[#allocation2 + $0x20] sm:$0xff]
      %v1855 = vld [vmem:[#allocation2 + $0x28] sm:$0xff]
      %v1856 = vld [vmem:[#allocation2 + $0x30] sm:$0xff]
      %v1857 = vld [vmem:[#allocation2 + $0x38] sm:$0xff]
      %v1858 = vld [vmem:[#allocation2 + $0x40] sm:$0xff]
      %v1859 = vld [vmem:[#allocation2 + $0x48] sm:$0xff]
      %v1860 = vld [vmem:[#allocation2 + $0x50] sm:$0xff]
      %v1861 = vld [vmem:[#allocation2 + $0x58] sm:$0xff]
      %v1862 = vld [vmem:[#allocation2 + $0x60] sm:$0xff]
      %v1863 = vld [vmem:[#allocation2 + $0x68] sm:$0xff]
      %v1864 = vld [vmem:[#allocation2 + $0x70] sm:$0xff]
      %v1865 = vld [vmem:[#allocation2 + $0x78] sm:$0xff]
      %v1866 = vld [vmem:[#allocation2 + $0x80] sm:$0xff]
      %v1867 = vld [vmem:[#allocation2 + $0x88] sm:$0xff]
      %v1868 = vld [vmem:[#allocation2 + $0x90] sm:$0xff]
      %v1869 = vld [vmem:[#allocation2 + $0x98] sm:$0xff]
      %v1870 = vld [vmem:[#allocation2 + $0xa0] sm:$0xff]
      %v1871 = vld [vmem:[#allocation2 + $0xa8] sm:$0xff]
      %v1872 = vld [vmem:[#allocation2 + $0xb0] sm:$0xff]
      %v1873 = vld [vmem:[#allocation2 + $0xb8] sm:$0xff]
      %v1874 = vld [vmem:[#allocation2 + $0xc0] sm:$0xff]
      %v1875 = vld [vmem:[#allocation2 + $0xc8] sm:$0xff]
      %v1876 = vld [vmem:[#allocation2 + $0xd0] sm:$0xff]
      %v1877 = vld [vmem:[#allocation2 + $0xd8] sm:$0xff]
      %v1878 = vld [vmem:[#allocation2 + $0xe0] sm:$0xff]
      %v1879 = vld [vmem:[#allocation2 + $0xe8] sm:$0xff]
      %v1880 = vld [vmem:[#allocation2 + $0xf0] sm:$0xff]
      %v1881 = vld [vmem:[#allocation2 + $0xf8] sm:$0xff]
      %v1882 = vld [vmem:[#allocation2 + $0x100] sm:$0xff]
      %v1883 = vld [vmem:[#allocation2 + $0x108] sm:$0xff]
      %v1884 = vld [vmem:[#allocation2 + $0x110] sm:$0xff]
      %v1885 = vld [vmem:[#allocation2 + $0x118] sm:$0xff]
      %s1886 = scalar_lea.vmem %s335, 48
      %v1887 = vld [vmem:[%s1886] sm:$0xf]
      %v1888 = vld [vmem:[%s1886 + $0x4] sm:$0xf]
      %v1889 = vld [vmem:[%s1886 + $0x8] sm:$0xf]
      %v1890 = vld [vmem:[%s1886 + $0xc] sm:$0xf]
      %v1928 = vunpack.c.l.b16 %v1813
      %v1929 = vunpack.c.l.b16 %v1814
      %v1930 = vunpack.c.l.b16 %v1815
      %v1931 = vunpack.c.l.b16 %v1816
      %v1932 = vunpack.c.l.b16 %v1817
      %v1933 = vunpack.c.l.b16 %v1818
      %v1934 = vunpack.c.l.b16 %v1819
      %v1935 = vunpack.c.l.b16 %v1820
      %v1936 = vunpack.c.l.b16 %v1821
      %v1937 = vunpack.c.l.b16 %v1822
      %v1938 = vunpack.c.l.b16 %v1823
      %v1939 = vunpack.c.l.b16 %v1824
      %v1940 = vunpack.c.l.b16 %v1825
      %v1941 = vunpack.c.l.b16 %v1826
      %v1942 = vunpack.c.l.b16 %v1827
      %v1943 = vunpack.c.l.b16 %v1828
      %v1944 = vunpack.c.l.b16 %v1829
      %v1945 = vunpack.c.l.b16 %v1830
      %v1946 = vunpack.c.l.b16 %v1831
      %v1947 = vunpack.c.l.b16 %v1832
      %v1948 = vunpack.c.l.b16 %v1833
      %v1949 = vunpack.c.l.b16 %v1834
      %v1950 = vunpack.c.l.b16 %v1835
      %v1951 = vunpack.c.l.b16 %v1836
      %v1952 = vunpack.c.l.b16 %v1837
      %v1953 = vunpack.c.l.b16 %v1838
      %v1954 = vunpack.c.l.b16 %v1839
      %v1955 = vunpack.c.l.b16 %v1840
      %v1956 = vunpack.c.l.b16 %v1841
      %v1957 = vunpack.c.l.b16 %v1842
      %v1958 = vunpack.c.l.b16 %v1843
      %v1959 = vunpack.c.l.b16 %v1844
      %v1960 = vunpack.c.l.b16 %v1845
      %v1961 = vunpack.c.l.b16 %v1846
      %v1962 = vunpack.c.l.b16 %v1847
      %v1963 = vunpack.c.l.b16 %v1848
      %v1964 = vunpack.c.l.b16 %v1849
      %v1965 = vpack.c.b16 %v1929, %v1928
      %v1966 = vpack.c.b16 %v1931, %v1930
      %v1967 = vpack.c.b16 %v1933, %v1932
      %v1968 = vpack.c.b16 %v1935, %v1934
      %v1969 = vpack.c.b16 %v1937, %v1936
      %v1970 = vpack.c.b16 %v1939, %v1938
      %v1971 = vpack.c.b16 %v1941, %v1940
      %v1972 = vpack.c.b16 %v1943, %v1942
      %v1973 = vpack.c.b16 %v1945, %v1944
      %v1974 = vpack.c.b16 %v1947, %v1946
      %v1975 = vpack.c.b16 %v1949, %v1948
      %v1976 = vpack.c.b16 %v1951, %v1950
      %v1977 = vpack.c.b16 %v1953, %v1952
      %v1978 = vpack.c.b16 %v1955, %v1954
      %v1979 = vpack.c.b16 %v1957, %v1956
      %v1980 = vpack.c.b16 %v1959, %v1958
      %v1981 = vpack.c.b16 %v1961, %v1960
      %v1982 = vpack.c.b16 %v1963, %v1962
      %v1983 = vpack.c.b16 %v1964, %v1964
      %v1984 = vrot.slane %v1965, 1
      %v1985 = vrot.slane %v1966, 1
      %v1986 = vsel %vm1538, %v1984, %v1985
      %v1987 = vrot.slane %v1967, 1
      %v1988 = vsel %vm1538, %v1985, %v1987
      %v1989 = vrot.slane %v1968, 1
      %v1990 = vsel %vm1538, %v1987, %v1989
      %v1991 = vrot.slane %v1969, 1
      %v1992 = vsel %vm1538, %v1989, %v1991
      %v1993 = vrot.slane %v1970, 1
      %v1994 = vsel %vm1538, %v1991, %v1993
      %v1995 = vrot.slane %v1971, 1
      %v1996 = vsel %vm1538, %v1993, %v1995
      %v1997 = vrot.slane %v1972, 1
      %v1998 = vsel %vm1538, %v1995, %v1997
      %v1999 = vrot.slane %v1973, 1
      %v2000 = vsel %vm1538, %v1997, %v1999
      %v2001 = vrot.slane %v1974, 1
      %v2002 = vsel %vm1538, %v1999, %v2001
      %v2003 = vrot.slane %v1975, 1
      %v2004 = vsel %vm1538, %v2001, %v2003
      %v2005 = vrot.slane %v1976, 1
      %v2006 = vsel %vm1538, %v2003, %v2005
      %v2007 = vrot.slane %v1977, 1
      %v2008 = vsel %vm1538, %v2005, %v2007
      %v2009 = vrot.slane %v1978, 1
      %v2010 = vsel %vm1538, %v2007, %v2009
      %v2011 = vrot.slane %v1979, 1
      %v2012 = vsel %vm1538, %v2009, %v2011
      %v2013 = vrot.slane %v1980, 1
      %v2014 = vsel %vm1538, %v2011, %v2013
      %v2015 = vrot.slane %v1981, 1
      %v2016 = vsel %vm1538, %v2013, %v2015
      %v2017 = vrot.slane %v1982, 1
      %v2018 = vsel %vm1538, %v2015, %v2017
      %v2019 = vrot.slane %v1983, 1
      %v2020 = vsel %vm1538, %v2017, %v2019
      %v2025 = vunpack.c.l.b16 %v1887
      %v2026 = vunpack.c.l.b16 %v1888
      %v2027 = vunpack.c.l.b16 %v1889
      %v2028 = vunpack.c.l.b16 %v1890
      %v2029 = vpack.c.b16 %v2026, %v2025
      %v2030 = vpack.c.b16 %v2028, %v2027
      %v2034 = vsel %vm583, %v1986, 0
      %v2037 = vsel %vm583, %v1988, 0
      %v2040 = vsel %vm583, %v1990, 0
      %v2043 = vsel %vm583, %v1992, 0
      %v2046 = vsel %vm583, %v1994, 0
      %v2049 = vsel %vm583, %v1996, 0
      %v2052 = vsel %vm583, %v1998, 0
      %v2055 = vsel %vm583, %v2000, 0
      %v2058 = vsel %vm583, %v2002, 0
      %v2061 = vsel %vm583, %v2004, 0
      %v2064 = vsel %vm583, %v2006, 0
      %v2067 = vsel %vm583, %v2008, 0
      %v2070 = vsel %vm583, %v2010, 0
      %v2073 = vsel %vm583, %v2012, 0
      %v2076 = vsel %vm583, %v2014, 0
      %v2079 = vsel %vm583, %v2016, 0
      %v2082 = vsel %vm583, %v2018, 0
      %v2085 = vsel %vm583, %v2020, 0
      %2087 = vmatpush.bf16.msra.mxu0 0
      %2088 = vmatpush.bf16.msra.mxu0 0
      %2089 = vmatpush.bf16.msra.mxu0 0
      %2090 = vmatpush.bf16.msra.mxu0 0
      %2091 = vmatpush.bf16.msra.mxu0 0
      %2092 = vmatpush.bf16.msra.mxu0 0
      %2093 = vmatpush.bf16.msra.mxu0 %v2030
      %2094 = vmatpush.bf16.msra.mxu0 %v2029
      %2095 = vmatmul.bf16.gmra.mxu0 %v2034
      %v2096 = vpop.f32.mrf.mxu0
      %v2097 = vadd.f32 0.0, %v2096
      %v2098 = vpop.f32.mrf.mxu0
      %v2099 = vadd.f32 0.0, %v2098
      %2100 = vmatmul.bf16.gmra.mxu0 %v2037
      %v2101 = vpop.f32.mrf.mxu0
      %v2102 = vadd.f32 0.0, %v2101
      %v2103 = vpop.f32.mrf.mxu0
      %v2104 = vadd.f32 0.0, %v2103
      %2105 = vmatmul.bf16.gmra.mxu0 %v2040
      %v2106 = vpop.f32.mrf.mxu0
      %v2107 = vadd.f32 0.0, %v2106
      %v2108 = vpop.f32.mrf.mxu0
      %v2109 = vadd.f32 0.0, %v2108
      %2110 = vmatmul.bf16.gmra.mxu0 %v2043
      %v2111 = vpop.f32.mrf.mxu0
      %v2112 = vadd.f32 0.0, %v2111
      %v2113 = vpop.f32.mrf.mxu0
      %v2114 = vadd.f32 0.0, %v2113
      %2115 = vmatmul.bf16.gmra.mxu0 %v2046
      %v2116 = vpop.f32.mrf.mxu0
      %v2117 = vadd.f32 0.0, %v2116
      %v2118 = vpop.f32.mrf.mxu0
      %v2119 = vadd.f32 0.0, %v2118
      %2120 = vmatmul.bf16.gmra.mxu0 %v2049
      %v2121 = vpop.f32.mrf.mxu0
      %v2122 = vadd.f32 0.0, %v2121
      %v2123 = vpop.f32.mrf.mxu0
      %v2124 = vadd.f32 0.0, %v2123
      %2125 = vmatmul.bf16.gmra.mxu0 %v2052
      %v2126 = vpop.f32.mrf.mxu0
      %v2127 = vadd.f32 0.0, %v2126
      %v2128 = vpop.f32.mrf.mxu0
      %v2129 = vadd.f32 0.0, %v2128
      %2130 = vmatmul.bf16.gmra.mxu0 %v2055
      %v2131 = vpop.f32.mrf.mxu0
      %v2132 = vadd.f32 0.0, %v2131
      %v2133 = vpop.f32.mrf.mxu0
      %v2134 = vadd.f32 0.0, %v2133
      %2135 = vmatmul.bf16.gmra.mxu0 %v2058
      %v2136 = vpop.f32.mrf.mxu0
      %v2137 = vadd.f32 0.0, %v2136
      %v2138 = vpop.f32.mrf.mxu0
      %v2139 = vadd.f32 0.0, %v2138
      %2140 = vmatmul.bf16.gmra.mxu0 %v2061
      %v2141 = vpop.f32.mrf.mxu0
      %v2142 = vadd.f32 0.0, %v2141
      %v2143 = vpop.f32.mrf.mxu0
      %v2144 = vadd.f32 0.0, %v2143
      %2145 = vmatmul.bf16.gmra.mxu0 %v2064
      %v2146 = vpop.f32.mrf.mxu0
      %v2147 = vadd.f32 0.0, %v2146
      %v2148 = vpop.f32.mrf.mxu0
      %v2149 = vadd.f32 0.0, %v2148
      %2150 = vmatmul.bf16.gmra.mxu0 %v2067
      %v2151 = vpop.f32.mrf.mxu0
      %v2152 = vadd.f32 0.0, %v2151
      %v2153 = vpop.f32.mrf.mxu0
      %v2154 = vadd.f32 0.0, %v2153
      %2155 = vmatmul.bf16.gmra.mxu0 %v2070
      %v2156 = vpop.f32.mrf.mxu0
      %v2157 = vadd.f32 0.0, %v2156
      %v2158 = vpop.f32.mrf.mxu0
      %v2159 = vadd.f32 0.0, %v2158
      %2160 = vmatmul.bf16.gmra.mxu0 %v2073
      %v2161 = vpop.f32.mrf.mxu0
      %v2162 = vadd.f32 0.0, %v2161
      %v2163 = vpop.f32.mrf.mxu0
      %v2164 = vadd.f32 0.0, %v2163
      %2165 = vmatmul.bf16.gmra.mxu0 %v2076
      %v2166 = vpop.f32.mrf.mxu0
      %v2167 = vadd.f32 0.0, %v2166
      %v2168 = vpop.f32.mrf.mxu0
      %v2169 = vadd.f32 0.0, %v2168
      %2170 = vmatmul.bf16.gmra.mxu0 %v2079
      %v2171 = vpop.f32.mrf.mxu0
      %v2172 = vadd.f32 0.0, %v2171
      %v2173 = vpop.f32.mrf.mxu0
      %v2174 = vadd.f32 0.0, %v2173
      %2175 = vmatmul.bf16.gmra.mxu0 %v2082
      %v2176 = vpop.f32.mrf.mxu0
      %v2177 = vadd.f32 0.0, %v2176
      %v2178 = vpop.f32.mrf.mxu0
      %v2179 = vadd.f32 0.0, %v2178
      %2180 = vmatmul.bf16.gmra.mxu0 %v2085
      %v2181 = vpop.f32.mrf.mxu0
      %v2182 = vadd.f32 0.0, %v2181
      %v2183 = vpop.f32.mrf.mxu0
      %v2184 = vadd.f32 0.0, %v2183
      %2185 = vdwg.mxu0
      %v2186 = vadd.f32 %v1850, %v2097
      %v2187 = vadd.f32 %v1851, %v2099
      %v2188 = vadd.f32 %v1852, %v2102
      %v2189 = vadd.f32 %v1853, %v2104
      %v2190 = vadd.f32 %v1854, %v2107
      %v2191 = vadd.f32 %v1855, %v2109
      %v2192 = vadd.f32 %v1856, %v2112
      %v2193 = vadd.f32 %v1857, %v2114
      %v2194 = vadd.f32 %v1858, %v2117
      %v2195 = vadd.f32 %v1859, %v2119
      %v2196 = vadd.f32 %v1860, %v2122
      %v2197 = vadd.f32 %v1861, %v2124
      %v2198 = vadd.f32 %v1862, %v2127
      %v2199 = vadd.f32 %v1863, %v2129
      %v2200 = vadd.f32 %v1864, %v2132
      %v2201 = vadd.f32 %v1865, %v2134
      %v2202 = vadd.f32 %v1866, %v2137
      %v2203 = vadd.f32 %v1867, %v2139
      %v2204 = vadd.f32 %v1868, %v2142
      %v2205 = vadd.f32 %v1869, %v2144
      %v2206 = vadd.f32 %v1870, %v2147
      %v2207 = vadd.f32 %v1871, %v2149
      %v2208 = vadd.f32 %v1872, %v2152
      %v2209 = vadd.f32 %v1873, %v2154
      %v2210 = vadd.f32 %v1874, %v2157
      %v2211 = vadd.f32 %v1875, %v2159
      %v2212 = vadd.f32 %v1876, %v2162
      %v2213 = vadd.f32 %v1877, %v2164
      %v2214 = vadd.f32 %v1878, %v2167
      %v2215 = vadd.f32 %v1879, %v2169
      %v2216 = vadd.f32 %v1880, %v2172
      %v2217 = vadd.f32 %v1881, %v2174
      %v2218 = vadd.f32 %v1882, %v2177
      %v2219 = vadd.f32 %v1883, %v2179
      %v2220 = vadd.f32 %v1884, %v2182
      %v2221 = vadd.f32 %v1885, %v2184
      %2222 = vst.msk [vmem:[#allocation2] sm:$0xff] %vm773, %v2186
      %2223 = vst.msk [vmem:[#allocation2 + $0x8] sm:$0xff] %vm773, %v2187
      %2224 = vst.msk [vmem:[#allocation2 + $0x10] sm:$0xff] %vm773, %v2188
      %2225 = vst.msk [vmem:[#allocation2 + $0x18] sm:$0xff] %vm773, %v2189
      %2226 = vst.msk [vmem:[#allocation2 + $0x20] sm:$0xff] %vm773, %v2190
      %2227 = vst.msk [vmem:[#allocation2 + $0x28] sm:$0xff] %vm773, %v2191
      %2228 = vst.msk [vmem:[#allocation2 + $0x30] sm:$0xff] %vm773, %v2192
      %2229 = vst.msk [vmem:[#allocation2 + $0x38] sm:$0xff] %vm773, %v2193
      %2230 = vst.msk [vmem:[#allocation2 + $0x40] sm:$0xff] %vm773, %v2194
      %2231 = vst.msk [vmem:[#allocation2 + $0x48] sm:$0xff] %vm773, %v2195
      %2232 = vst.msk [vmem:[#allocation2 + $0x50] sm:$0xff] %vm773, %v2196
      %2233 = vst.msk [vmem:[#allocation2 + $0x58] sm:$0xff] %vm773, %v2197
      %2234 = vst.msk [vmem:[#allocation2 + $0x60] sm:$0xff] %vm773, %v2198
      %2235 = vst.msk [vmem:[#allocation2 + $0x68] sm:$0xff] %vm773, %v2199
      %2236 = vst.msk [vmem:[#allocation2 + $0x70] sm:$0xff] %vm773, %v2200
      %2237 = vst.msk [vmem:[#allocation2 + $0x78] sm:$0xff] %vm773, %v2201
      %2238 = vst.msk [vmem:[#allocation2 + $0x80] sm:$0xff] %vm773, %v2202
      %2239 = vst.msk [vmem:[#allocation2 + $0x88] sm:$0xff] %vm773, %v2203
      %2240 = vst.msk [vmem:[#allocation2 + $0x90] sm:$0xff] %vm773, %v2204
      %2241 = vst.msk [vmem:[#allocation2 + $0x98] sm:$0xff] %vm773, %v2205
      %2242 = vst.msk [vmem:[#allocation2 + $0xa0] sm:$0xff] %vm773, %v2206
      %2243 = vst.msk [vmem:[#allocation2 + $0xa8] sm:$0xff] %vm773, %v2207
      %2244 = vst.msk [vmem:[#allocation2 + $0xb0] sm:$0xff] %vm773, %v2208
      %2245 = vst.msk [vmem:[#allocation2 + $0xb8] sm:$0xff] %vm773, %v2209
      %2246 = vst.msk [vmem:[#allocation2 + $0xc0] sm:$0xff] %vm773, %v2210
      %2247 = vst.msk [vmem:[#allocation2 + $0xc8] sm:$0xff] %vm773, %v2211
      %2248 = vst.msk [vmem:[#allocation2 + $0xd0] sm:$0xff] %vm773, %v2212
      %2249 = vst.msk [vmem:[#allocation2 + $0xd8] sm:$0xff] %vm773, %v2213
      %2250 = vst.msk [vmem:[#allocation2 + $0xe0] sm:$0xff] %vm773, %v2214
      %2251 = vst.msk [vmem:[#allocation2 + $0xe8] sm:$0xff] %vm773, %v2215
      %2252 = vst.msk [vmem:[#allocation2 + $0xf0] sm:$0xff] %vm773, %v2216
      %2253 = vst.msk [vmem:[#allocation2 + $0xf8] sm:$0xff] %vm773, %v2217
      %2254 = vst.msk [vmem:[#allocation2 + $0x100] sm:$0xff] %vm773, %v2218
      %2255 = vst.msk [vmem:[#allocation2 + $0x108] sm:$0xff] %vm773, %v2219
      %2256 = vst.msk [vmem:[#allocation2 + $0x110] sm:$0xff] %vm773, %v2220
      %2257 = vst.msk [vmem:[#allocation2 + $0x118] sm:$0xff] %vm773, %v2221
      %v2258 = vld [vmem:[%s329 + $0x8] sm:$0xe]
      %v2259 = vld [vmem:[%s329 + $0xc] sm:$0xf]
      %v2260 = vld [vmem:[%s329 + $0x10] sm:$0xf]
      %v2261 = vld [vmem:[%s329 + $0x14] sm:$0xf]
      %v2262 = vld [vmem:[%s329 + $0x18] sm:$0xf]
      %v2263 = vld [vmem:[%s329 + $0x1c] sm:$0xf]
      %v2264 = vld [vmem:[%s329 + $0x20] sm:$0xf]
      %v2265 = vld [vmem:[%s329 + $0x24] sm:$0xf]
      %v2266 = vld [vmem:[%s329 + $0x28] sm:$0xf]
      %v2267 = vld [vmem:[%s329 + $0x2c] sm:$0xf]
      %v2268 = vld [vmem:[%s329 + $0x30] sm:$0xf]
      %v2269 = vld [vmem:[%s329 + $0x34] sm:$0xf]
      %v2270 = vld [vmem:[%s329 + $0x38] sm:$0xf]
      %v2271 = vld [vmem:[%s329 + $0x3c] sm:$0xf]
      %v2272 = vld [vmem:[%s329 + $0x40] sm:$0xf]
      %v2273 = vld [vmem:[%s329 + $0x44] sm:$0xf]
      %v2274 = vld [vmem:[%s329 + $0x48] sm:$0xf]
      %v2275 = vld [vmem:[%s329 + $0x4c] sm:$0xf]
      %v2276 = vld [vmem:[%s329 + $0x50] sm:$0xf]
      %v2277 = vld [vmem:[%s329 + $0x54] sm:$0xf]
      %v2278 = vld [vmem:[%s329 + $0x58] sm:$0xf]
      %v2279 = vld [vmem:[%s329 + $0x5c] sm:$0xf]
      %v2280 = vld [vmem:[%s329 + $0x60] sm:$0xf]
      %v2281 = vld [vmem:[%s329 + $0x64] sm:$0xf]
      %v2282 = vld [vmem:[%s329 + $0x68] sm:$0xf]
      %v2283 = vld [vmem:[%s329 + $0x6c] sm:$0xf]
      %v2284 = vld [vmem:[%s329 + $0x70] sm:$0xf]
      %v2285 = vld [vmem:[%s329 + $0x74] sm:$0xf]
      %v2286 = vld [vmem:[%s329 + $0x78] sm:$0xf]
      %v2287 = vld [vmem:[%s329 + $0x7c] sm:$0xf]
      %v2288 = vld [vmem:[%s329 + $0x80] sm:$0xf]
      %v2289 = vld [vmem:[%s329 + $0x84] sm:$0xf]
      %v2290 = vld [vmem:[%s329 + $0x88] sm:$0xf]
      %v2291 = vld [vmem:[%s329 + $0x8c] sm:$0xf]
      %v2292 = vld [vmem:[%s329 + $0x90] sm:$0xf]
      %v2293 = vld [vmem:[%s329 + $0x94] sm:$0xf]
      %v2294 = vld [vmem:[%s329 + $0x98] sm:$0x3]
      %v2295 = vld [vmem:[#allocation2] sm:$0xff]
      %v2296 = vld [vmem:[#allocation2 + $0x8] sm:$0xff]
      %v2297 = vld [vmem:[#allocation2 + $0x10] sm:$0xff]
      %v2298 = vld [vmem:[#allocation2 + $0x18] sm:$0xff]
      %v2299 = vld [vmem:[#allocation2 + $0x20] sm:$0xff]
      %v2300 = vld [vmem:[#allocation2 + $0x28] sm:$0xff]
      %v2301 = vld [vmem:[#allocation2 + $0x30] sm:$0xff]
      %v2302 = vld [vmem:[#allocation2 + $0x38] sm:$0xff]
      %v2303 = vld [vmem:[#allocation2 + $0x40] sm:$0xff]
      %v2304 = vld [vmem:[#allocation2 + $0x48] sm:$0xff]
      %v2305 = vld [vmem:[#allocation2 + $0x50] sm:$0xff]
      %v2306 = vld [vmem:[#allocation2 + $0x58] sm:$0xff]
      %v2307 = vld [vmem:[#allocation2 + $0x60] sm:$0xff]
      %v2308 = vld [vmem:[#allocation2 + $0x68] sm:$0xff]
      %v2309 = vld [vmem:[#allocation2 + $0x70] sm:$0xff]
      %v2310 = vld [vmem:[#allocation2 + $0x78] sm:$0xff]
      %v2311 = vld [vmem:[#allocation2 + $0x80] sm:$0xff]
      %v2312 = vld [vmem:[#allocation2 + $0x88] sm:$0xff]
      %v2313 = vld [vmem:[#allocation2 + $0x90] sm:$0xff]
      %v2314 = vld [vmem:[#allocation2 + $0x98] sm:$0xff]
      %v2315 = vld [vmem:[#allocation2 + $0xa0] sm:$0xff]
      %v2316 = vld [vmem:[#allocation2 + $0xa8] sm:$0xff]
      %v2317 = vld [vmem:[#allocation2 + $0xb0] sm:$0xff]
      %v2318 = vld [vmem:[#allocation2 + $0xb8] sm:$0xff]
      %v2319 = vld [vmem:[#allocation2 + $0xc0] sm:$0xff]
      %v2320 = vld [vmem:[#allocation2 + $0xc8] sm:$0xff]
      %v2321 = vld [vmem:[#allocation2 + $0xd0] sm:$0xff]
      %v2322 = vld [vmem:[#allocation2 + $0xd8] sm:$0xff]
      %v2323 = vld [vmem:[#allocation2 + $0xe0] sm:$0xff]
      %v2324 = vld [vmem:[#allocation2 + $0xe8] sm:$0xff]
      %v2325 = vld [vmem:[#allocation2 + $0xf0] sm:$0xff]
      %v2326 = vld [vmem:[#allocation2 + $0xf8] sm:$0xff]
      %v2327 = vld [vmem:[#allocation2 + $0x100] sm:$0xff]
      %v2328 = vld [vmem:[#allocation2 + $0x108] sm:$0xff]
      %v2329 = vld [vmem:[#allocation2 + $0x110] sm:$0xff]
      %v2330 = vld [vmem:[#allocation2 + $0x118] sm:$0xff]
      %s2331 = scalar_lea.vmem %s335, 64
      %v2332 = vld [vmem:[%s2331] sm:$0xf]
      %v2333 = vld [vmem:[%s2331 + $0x4] sm:$0xf]
      %v2334 = vld [vmem:[%s2331 + $0x8] sm:$0xf]
      %v2335 = vld [vmem:[%s2331 + $0xc] sm:$0xf]
      %v2373 = vunpack.c.l.b16 %v2258
      %v2374 = vunpack.c.l.b16 %v2259
      %v2375 = vunpack.c.l.b16 %v2260
      %v2376 = vunpack.c.l.b16 %v2261
      %v2377 = vunpack.c.l.b16 %v2262
      %v2378 = vunpack.c.l.b16 %v2263
      %v2379 = vunpack.c.l.b16 %v2264
      %v2380 = vunpack.c.l.b16 %v2265
      %v2381 = vunpack.c.l.b16 %v2266
      %v2382 = vunpack.c.l.b16 %v2267
      %v2383 = vunpack.c.l.b16 %v2268
      %v2384 = vunpack.c.l.b16 %v2269
      %v2385 = vunpack.c.l.b16 %v2270
      %v2386 = vunpack.c.l.b16 %v2271
      %v2387 = vunpack.c.l.b16 %v2272
      %v2388 = vunpack.c.l.b16 %v2273
      %v2389 = vunpack.c.l.b16 %v2274
      %v2390 = vunpack.c.l.b16 %v2275
      %v2391 = vunpack.c.l.b16 %v2276
      %v2392 = vunpack.c.l.b16 %v2277
      %v2393 = vunpack.c.l.b16 %v2278
      %v2394 = vunpack.c.l.b16 %v2279
      %v2395 = vunpack.c.l.b16 %v2280
      %v2396 = vunpack.c.l.b16 %v2281
      %v2397 = vunpack.c.l.b16 %v2282
      %v2398 = vunpack.c.l.b16 %v2283
      %v2399 = vunpack.c.l.b16 %v2284
      %v2400 = vunpack.c.l.b16 %v2285
      %v2401 = vunpack.c.l.b16 %v2286
      %v2402 = vunpack.c.l.b16 %v2287
      %v2403 = vunpack.c.l.b16 %v2288
      %v2404 = vunpack.c.l.b16 %v2289
      %v2405 = vunpack.c.l.b16 %v2290
      %v2406 = vunpack.c.l.b16 %v2291
      %v2407 = vunpack.c.l.b16 %v2292
      %v2408 = vunpack.c.l.b16 %v2293
      %v2409 = vunpack.c.l.b16 %v2294
      %v2410 = vpack.c.b16 %v2374, %v2373
      %v2411 = vpack.c.b16 %v2376, %v2375
      %v2412 = vpack.c.b16 %v2378, %v2377
      %v2413 = vpack.c.b16 %v2380, %v2379
      %v2414 = vpack.c.b16 %v2382, %v2381
      %v2415 = vpack.c.b16 %v2384, %v2383
      %v2416 = vpack.c.b16 %v2386, %v2385
      %v2417 = vpack.c.b16 %v2388, %v2387
      %v2418 = vpack.c.b16 %v2390, %v2389
      %v2419 = vpack.c.b16 %v2392, %v2391
      %v2420 = vpack.c.b16 %v2394, %v2393
      %v2421 = vpack.c.b16 %v2396, %v2395
      %v2422 = vpack.c.b16 %v2398, %v2397
      %v2423 = vpack.c.b16 %v2400, %v2399
      %v2424 = vpack.c.b16 %v2402, %v2401
      %v2425 = vpack.c.b16 %v2404, %v2403
      %v2426 = vpack.c.b16 %v2406, %v2405
      %v2427 = vpack.c.b16 %v2408, %v2407
      %v2428 = vpack.c.b16 %v2409, %v2409
      %vm2429 = vsmask.f32 6400
      %v2431 = vshrl.u32 %v2410, 16
      %v2433 = vrot.slane %v2431, 1
      %v2434 = vshll.u32 %v2410, 16
      %v2436 = vrot.slane %v2434, 2
      %v2437 = vor.u32 %v2433, %v2436
      %v2439 = vshrl.u32 %v2411, 16
      %v2441 = vrot.slane %v2439, 1
      %v2442 = vshll.u32 %v2411, 16
      %v2444 = vrot.slane %v2442, 2
      %v2445 = vor.u32 %v2441, %v2444
      %v2446 = vsel %vm2429, %v2437, %v2445
      %v2448 = vshrl.u32 %v2412, 16
      %v2450 = vrot.slane %v2448, 1
      %v2451 = vshll.u32 %v2412, 16
      %v2453 = vrot.slane %v2451, 2
      %v2454 = vor.u32 %v2450, %v2453
      %v2455 = vsel %vm2429, %v2445, %v2454
      %v2457 = vshrl.u32 %v2413, 16
      %v2459 = vrot.slane %v2457, 1
      %v2460 = vshll.u32 %v2413, 16
      %v2462 = vrot.slane %v2460, 2
      %v2463 = vor.u32 %v2459, %v2462
      %v2464 = vsel %vm2429, %v2454, %v2463
      %v2466 = vshrl.u32 %v2414, 16
      %v2468 = vrot.slane %v2466, 1
      %v2469 = vshll.u32 %v2414, 16
      %v2471 = vrot.slane %v2469, 2
      %v2472 = vor.u32 %v2468, %v2471
      %v2473 = vsel %vm2429, %v2463, %v2472
      %v2475 = vshrl.u32 %v2415, 16
      %v2477 = vrot.slane %v2475, 1
      %v2478 = vshll.u32 %v2415, 16
      %v2480 = vrot.slane %v2478, 2
      %v2481 = vor.u32 %v2477, %v2480
      %v2482 = vsel %vm2429, %v2472, %v2481
      %v2484 = vshrl.u32 %v2416, 16
      %v2486 = vrot.slane %v2484, 1
      %v2487 = vshll.u32 %v2416, 16
      %v2489 = vrot.slane %v2487, 2
      %v2490 = vor.u32 %v2486, %v2489
      %v2491 = vsel %vm2429, %v2481, %v2490
      %v2493 = vshrl.u32 %v2417, 16
      %v2495 = vrot.slane %v2493, 1
      %v2496 = vshll.u32 %v2417, 16
      %v2498 = vrot.slane %v2496, 2
      %v2499 = vor.u32 %v2495, %v2498
      %v2500 = vsel %vm2429, %v2490, %v2499
      %v2502 = vshrl.u32 %v2418, 16
      %v2504 = vrot.slane %v2502, 1
      %v2505 = vshll.u32 %v2418, 16
      %v2507 = vrot.slane %v2505, 2
      %v2508 = vor.u32 %v2504, %v2507
      %v2509 = vsel %vm2429, %v2499, %v2508
      %v2511 = vshrl.u32 %v2419, 16
      %v2513 = vrot.slane %v2511, 1
      %v2514 = vshll.u32 %v2419, 16
      %v2516 = vrot.slane %v2514, 2
      %v2517 = vor.u32 %v2513, %v2516
      %v2518 = vsel %vm2429, %v2508, %v2517
      %v2520 = vshrl.u32 %v2420, 16
      %v2522 = vrot.slane %v2520, 1
      %v2523 = vshll.u32 %v2420, 16
      %v2525 = vrot.slane %v2523, 2
      %v2526 = vor.u32 %v2522, %v2525
      %v2527 = vsel %vm2429, %v2517, %v2526
      %v2529 = vshrl.u32 %v2421, 16
      %v2531 = vrot.slane %v2529, 1
      %v2532 = vshll.u32 %v2421, 16
      %v2534 = vrot.slane %v2532, 2
      %v2535 = vor.u32 %v2531, %v2534
      %v2536 = vsel %vm2429, %v2526, %v2535
      %v2538 = vshrl.u32 %v2422, 16
      %v2540 = vrot.slane %v2538, 1
      %v2541 = vshll.u32 %v2422, 16
      %v2543 = vrot.slane %v2541, 2
      %v2544 = vor.u32 %v2540, %v2543
      %v2545 = vsel %vm2429, %v2535, %v2544
      %v2547 = vshrl.u32 %v2423, 16
      %v2549 = vrot.slane %v2547, 1
      %v2550 = vshll.u32 %v2423, 16
      %v2552 = vrot.slane %v2550, 2
      %v2553 = vor.u32 %v2549, %v2552
      %v2554 = vsel %vm2429, %v2544, %v2553
      %v2556 = vshrl.u32 %v2424, 16
      %v2558 = vrot.slane %v2556, 1
      %v2559 = vshll.u32 %v2424, 16
      %v2561 = vrot.slane %v2559, 2
      %v2562 = vor.u32 %v2558, %v2561
      %v2563 = vsel %vm2429, %v2553, %v2562
      %v2565 = vshrl.u32 %v2425, 16
      %v2567 = vrot.slane %v2565, 1
      %v2568 = vshll.u32 %v2425, 16
      %v2570 = vrot.slane %v2568, 2
      %v2571 = vor.u32 %v2567, %v2570
      %v2572 = vsel %vm2429, %v2562, %v2571
      %v2574 = vshrl.u32 %v2426, 16
      %v2576 = vrot.slane %v2574, 1
      %v2577 = vshll.u32 %v2426, 16
      %v2579 = vrot.slane %v2577, 2
      %v2580 = vor.u32 %v2576, %v2579
      %v2581 = vsel %vm2429, %v2571, %v2580
      %v2583 = vshrl.u32 %v2427, 16
      %v2585 = vrot.slane %v2583, 1
      %v2586 = vshll.u32 %v2427, 16
      %v2588 = vrot.slane %v2586, 2
      %v2589 = vor.u32 %v2585, %v2588
      %v2590 = vsel %vm2429, %v2580, %v2589
      %v2592 = vshrl.u32 %v2428, 16
      %v2594 = vrot.slane %v2592, 1
      %v2595 = vshll.u32 %v2428, 16
      %v2597 = vrot.slane %v2595, 2
      %v2598 = vor.u32 %v2594, %v2597
      %v2599 = vsel %vm2429, %v2589, %v2598
      %v2604 = vunpack.c.l.b16 %v2332
      %v2605 = vunpack.c.l.b16 %v2333
      %v2606 = vunpack.c.l.b16 %v2334
      %v2607 = vunpack.c.l.b16 %v2335
      %v2608 = vpack.c.b16 %v2605, %v2604
      %v2609 = vpack.c.b16 %v2607, %v2606
      %v2613 = vsel %vm583, %v2446, 0
      %v2616 = vsel %vm583, %v2455, 0
      %v2619 = vsel %vm583, %v2464, 0
      %v2622 = vsel %vm583, %v2473, 0
      %v2625 = vsel %vm583, %v2482, 0
      %v2628 = vsel %vm583, %v2491, 0
      %v2631 = vsel %vm583, %v2500, 0
      %v2634 = vsel %vm583, %v2509, 0
      %v2637 = vsel %vm583, %v2518, 0
      %v2640 = vsel %vm583, %v2527, 0
      %v2643 = vsel %vm583, %v2536, 0
      %v2646 = vsel %vm583, %v2545, 0
      %v2649 = vsel %vm583, %v2554, 0
      %v2652 = vsel %vm583, %v2563, 0
      %v2655 = vsel %vm583, %v2572, 0
      %v2658 = vsel %vm583, %v2581, 0
      %v2661 = vsel %vm583, %v2590, 0
      %v2664 = vsel %vm583, %v2599, 0
      %2666 = vmatpush.bf16.msra.mxu0 0
      %2667 = vmatpush.bf16.msra.mxu0 0
      %2668 = vmatpush.bf16.msra.mxu0 0
      %2669 = vmatpush.bf16.msra.mxu0 0
      %2670 = vmatpush.bf16.msra.mxu0 0
      %2671 = vmatpush.bf16.msra.mxu0 0
      %2672 = vmatpush.bf16.msra.mxu0 %v2609
      %2673 = vmatpush.bf16.msra.mxu0 %v2608
      %2674 = vmatmul.bf16.gmra.mxu0 %v2613
      %v2675 = vpop.f32.mrf.mxu0
      %v2676 = vadd.f32 0.0, %v2675
      %v2677 = vpop.f32.mrf.mxu0
      %v2678 = vadd.f32 0.0, %v2677
      %2679 = vmatmul.bf16.gmra.mxu0 %v2616
      %v2680 = vpop.f32.mrf.mxu0
      %v2681 = vadd.f32 0.0, %v2680
      %v2682 = vpop.f32.mrf.mxu0
      %v2683 = vadd.f32 0.0, %v2682
      %2684 = vmatmul.bf16.gmra.mxu0 %v2619
      %v2685 = vpop.f32.mrf.mxu0
      %v2686 = vadd.f32 0.0, %v2685
      %v2687 = vpop.f32.mrf.mxu0
      %v2688 = vadd.f32 0.0, %v2687
      %2689 = vmatmul.bf16.gmra.mxu0 %v2622
      %v2690 = vpop.f32.mrf.mxu0
      %v2691 = vadd.f32 0.0, %v2690
      %v2692 = vpop.f32.mrf.mxu0
      %v2693 = vadd.f32 0.0, %v2692
      %2694 = vmatmul.bf16.gmra.mxu0 %v2625
      %v2695 = vpop.f32.mrf.mxu0
      %v2696 = vadd.f32 0.0, %v2695
      %v2697 = vpop.f32.mrf.mxu0
      %v2698 = vadd.f32 0.0, %v2697
      %2699 = vmatmul.bf16.gmra.mxu0 %v2628
      %v2700 = vpop.f32.mrf.mxu0
      %v2701 = vadd.f32 0.0, %v2700
      %v2702 = vpop.f32.mrf.mxu0
      %v2703 = vadd.f32 0.0, %v2702
      %2704 = vmatmul.bf16.gmra.mxu0 %v2631
      %v2705 = vpop.f32.mrf.mxu0
      %v2706 = vadd.f32 0.0, %v2705
      %v2707 = vpop.f32.mrf.mxu0
      %v2708 = vadd.f32 0.0, %v2707
      %2709 = vmatmul.bf16.gmra.mxu0 %v2634
      %v2710 = vpop.f32.mrf.mxu0
      %v2711 = vadd.f32 0.0, %v2710
      %v2712 = vpop.f32.mrf.mxu0
      %v2713 = vadd.f32 0.0, %v2712
      %2714 = vmatmul.bf16.gmra.mxu0 %v2637
      %v2715 = vpop.f32.mrf.mxu0
      %v2716 = vadd.f32 0.0, %v2715
      %v2717 = vpop.f32.mrf.mxu0
      %v2718 = vadd.f32 0.0, %v2717
      %2719 = vmatmul.bf16.gmra.mxu0 %v2640
      %v2720 = vpop.f32.mrf.mxu0
      %v2721 = vadd.f32 0.0, %v2720
      %v2722 = vpop.f32.mrf.mxu0
      %v2723 = vadd.f32 0.0, %v2722
      %2724 = vmatmul.bf16.gmra.mxu0 %v2643
      %v2725 = vpop.f32.mrf.mxu0
      %v2726 = vadd.f32 0.0, %v2725
      %v2727 = vpop.f32.mrf.mxu0
      %v2728 = vadd.f32 0.0, %v2727
      %2729 = vmatmul.bf16.gmra.mxu0 %v2646
      %v2730 = vpop.f32.mrf.mxu0
      %v2731 = vadd.f32 0.0, %v2730
      %v2732 = vpop.f32.mrf.mxu0
      %v2733 = vadd.f32 0.0, %v2732
      %2734 = vmatmul.bf16.gmra.mxu0 %v2649
      %v2735 = vpop.f32.mrf.mxu0
      %v2736 = vadd.f32 0.0, %v2735
      %v2737 = vpop.f32.mrf.mxu0
      %v2738 = vadd.f32 0.0, %v2737
      %2739 = vmatmul.bf16.gmra.mxu0 %v2652
      %v2740 = vpop.f32.mrf.mxu0
      %v2741 = vadd.f32 0.0, %v2740
      %v2742 = vpop.f32.mrf.mxu0
      %v2743 = vadd.f32 0.0, %v2742
      %2744 = vmatmul.bf16.gmra.mxu0 %v2655
      %v2745 = vpop.f32.mrf.mxu0
      %v2746 = vadd.f32 0.0, %v2745
      %v2747 = vpop.f32.mrf.mxu0
      %v2748 = vadd.f32 0.0, %v2747
      %2749 = vmatmul.bf16.gmra.mxu0 %v2658
      %v2750 = vpop.f32.mrf.mxu0
      %v2751 = vadd.f32 0.0, %v2750
      %v2752 = vpop.f32.mrf.mxu0
      %v2753 = vadd.f32 0.0, %v2752
      %2754 = vmatmul.bf16.gmra.mxu0 %v2661
      %v2755 = vpop.f32.mrf.mxu0
      %v2756 = vadd.f32 0.0, %v2755
      %v2757 = vpop.f32.mrf.mxu0
      %v2758 = vadd.f32 0.0, %v2757
      %2759 = vmatmul.bf16.gmra.mxu0 %v2664
      %v2760 = vpop.f32.mrf.mxu0
      %v2761 = vadd.f32 0.0, %v2760
      %v2762 = vpop.f32.mrf.mxu0
      %v2763 = vadd.f32 0.0, %v2762
      %2764 = vdwg.mxu0
      %v2765 = vadd.f32 %v2295, %v2676
      %v2766 = vadd.f32 %v2296, %v2678
      %v2767 = vadd.f32 %v2297, %v2681
      %v2768 = vadd.f32 %v2298, %v2683
      %v2769 = vadd.f32 %v2299, %v2686
      %v2770 = vadd.f32 %v2300, %v2688
      %v2771 = vadd.f32 %v2301, %v2691
      %v2772 = vadd.f32 %v2302, %v2693
      %v2773 = vadd.f32 %v2303, %v2696
      %v2774 = vadd.f32 %v2304, %v2698
      %v2775 = vadd.f32 %v2305, %v2701
      %v2776 = vadd.f32 %v2306, %v2703
      %v2777 = vadd.f32 %v2307, %v2706
      %v2778 = vadd.f32 %v2308, %v2708
      %v2779 = vadd.f32 %v2309, %v2711
      %v2780 = vadd.f32 %v2310, %v2713
      %v2781 = vadd.f32 %v2311, %v2716
      %v2782 = vadd.f32 %v2312, %v2718
      %v2783 = vadd.f32 %v2313, %v2721
      %v2784 = vadd.f32 %v2314, %v2723
      %v2785 = vadd.f32 %v2315, %v2726
      %v2786 = vadd.f32 %v2316, %v2728
      %v2787 = vadd.f32 %v2317, %v2731
      %v2788 = vadd.f32 %v2318, %v2733
      %v2789 = vadd.f32 %v2319, %v2736
      %v2790 = vadd.f32 %v2320, %v2738
      %v2791 = vadd.f32 %v2321, %v2741
      %v2792 = vadd.f32 %v2322, %v2743
      %v2793 = vadd.f32 %v2323, %v2746
      %v2794 = vadd.f32 %v2324, %v2748
      %v2795 = vadd.f32 %v2325, %v2751
      %v2796 = vadd.f32 %v2326, %v2753
      %v2797 = vadd.f32 %v2327, %v2756
      %v2798 = vadd.f32 %v2328, %v2758
      %v2799 = vadd.f32 %v2329, %v2761
      %v2800 = vadd.f32 %v2330, %v2763
      %2801 = vst.msk [vmem:[#allocation2] sm:$0xff] %vm773, %v2765
      %2802 = vst.msk [vmem:[#allocation2 + $0x8] sm:$0xff] %vm773, %v2766
      %2803 = vst.msk [vmem:[#allocation2 + $0x10] sm:$0xff] %vm773, %v2767
      %2804 = vst.msk [vmem:[#allocation2 + $0x18] sm:$0xff] %vm773, %v2768
      %2805 = vst.msk [vmem:[#allocation2 + $0x20] sm:$0xff] %vm773, %v2769
      %2806 = vst.msk [vmem:[#allocation2 + $0x28] sm:$0xff] %vm773, %v2770
      %2807 = vst.msk [vmem:[#allocation2 + $0x30] sm:$0xff] %vm773, %v2771
      %2808 = vst.msk [vmem:[#allocation2 + $0x38] sm:$0xff] %vm773, %v2772
      %2809 = vst.msk [vmem:[#allocation2 + $0x40] sm:$0xff] %vm773, %v2773
      %2810 = vst.msk [vmem:[#allocation2 + $0x48] sm:$0xff] %vm773, %v2774
      %2811 = vst.msk [vmem:[#allocation2 + $0x50] sm:$0xff] %vm773, %v2775
      %2812 = vst.msk [vmem:[#allocation2 + $0x58] sm:$0xff] %vm773, %v2776
      %2813 = vst.msk [vmem:[#allocation2 + $0x60] sm:$0xff] %vm773, %v2777
      %2814 = vst.msk [vmem:[#allocation2 + $0x68] sm:$0xff] %vm773, %v2778
      %2815 = vst.msk [vmem:[#allocation2 + $0x70] sm:$0xff] %vm773, %v2779
      %2816 = vst.msk [vmem:[#allocation2 + $0x78] sm:$0xff] %vm773, %v2780
      %2817 = vst.msk [vmem:[#allocation2 + $0x80] sm:$0xff] %vm773, %v2781
      %2818 = vst.msk [vmem:[#allocation2 + $0x88] sm:$0xff] %vm773, %v2782
      %2819 = vst.msk [vmem:[#allocation2 + $0x90] sm:$0xff] %vm773, %v2783
      %2820 = vst.msk [vmem:[#allocation2 + $0x98] sm:$0xff] %vm773, %v2784
      %2821 = vst.msk [vmem:[#allocation2 + $0xa0] sm:$0xff] %vm773, %v2785
      %2822 = vst.msk [vmem:[#allocation2 + $0xa8] sm:$0xff] %vm773, %v2786
      %2823 = vst.msk [vmem:[#allocation2 + $0xb0] sm:$0xff] %vm773, %v2787
      %2824 = vst.msk [vmem:[#allocation2 + $0xb8] sm:$0xff] %vm773, %v2788
      %2825 = vst.msk [vmem:[#allocation2 + $0xc0] sm:$0xff] %vm773, %v2789
      %2826 = vst.msk [vmem:[#allocation2 + $0xc8] sm:$0xff] %vm773, %v2790
      %2827 = vst.msk [vmem:[#allocation2 + $0xd0] sm:$0xff] %vm773, %v2791
      %2828 = vst.msk [vmem:[#allocation2 + $0xd8] sm:$0xff] %vm773, %v2792
      %2829 = vst.msk [vmem:[#allocation2 + $0xe0] sm:$0xff] %vm773, %v2793
      %2830 = vst.msk [vmem:[#allocation2 + $0xe8] sm:$0xff] %vm773, %v2794
      %2831 = vst.msk [vmem:[#allocation2 + $0xf0] sm:$0xff] %vm773, %v2795
      %2832 = vst.msk [vmem:[#allocation2 + $0xf8] sm:$0xff] %vm773, %v2796
      %2833 = vst.msk [vmem:[#allocation2 + $0x100] sm:$0xff] %vm773, %v2797
      %2834 = vst.msk [vmem:[#allocation2 + $0x108] sm:$0xff] %vm773, %v2798
      %2835 = vst.msk [vmem:[#allocation2 + $0x110] sm:$0xff] %vm773, %v2799
      %2836 = vst.msk [vmem:[#allocation2 + $0x118] sm:$0xff] %vm773, %v2800
      %v2837 = vld [vmem:[%s329 + $0x8] sm:$0xc]
      %v2838 = vld [vmem:[%s329 + $0xc] sm:$0xf]
      %v2839 = vld [vmem:[%s329 + $0x10] sm:$0xf]
      %v2840 = vld [vmem:[%s329 + $0x14] sm:$0xf]
      %v2841 = vld [vmem:[%s329 + $0x18] sm:$0xf]
      %v2842 = vld [vmem:[%s329 + $0x1c] sm:$0xf]
      %v2843 = vld [vmem:[%s329 + $0x20] sm:$0xf]
      %v2844 = vld [vmem:[%s329 + $0x24] sm:$0xf]
      %v2845 = vld [vmem:[%s329 + $0x28] sm:$0xf]
      %v2846 = vld [vmem:[%s329 + $0x2c] sm:$0xf]
      %v2847 = vld [vmem:[%s329 + $0x30] sm:$0xf]
      %v2848 = vld [vmem:[%s329 + $0x34] sm:$0xf]
      %v2849 = vld [vmem:[%s329 + $0x38] sm:$0xf]
      %v2850 = vld [vmem:[%s329 + $0x3c] sm:$0xf]
      %v2851 = vld [vmem:[%s329 + $0x40] sm:$0xf]
      %v2852 = vld [vmem:[%s329 + $0x44] sm:$0xf]
      %v2853 = vld [vmem:[%s329 + $0x48] sm:$0xf]
      %v2854 = vld [vmem:[%s329 + $0x4c] sm:$0xf]
      %v2855 = vld [vmem:[%s329 + $0x50] sm:$0xf]
      %v2856 = vld [vmem:[%s329 + $0x54] sm:$0xf]
      %v2857 = vld [vmem:[%s329 + $0x58] sm:$0xf]
      %v2858 = vld [vmem:[%s329 + $0x5c] sm:$0xf]
      %v2859 = vld [vmem:[%s329 + $0x60] sm:$0xf]
      %v2860 = vld [vmem:[%s329 + $0x64] sm:$0xf]
      %v2861 = vld [vmem:[%s329 + $0x68] sm:$0xf]
      %v2862 = vld [vmem:[%s329 + $0x6c] sm:$0xf]
      %v2863 = vld [vmem:[%s329 + $0x70] sm:$0xf]
      %v2864 = vld [vmem:[%s329 + $0x74] sm:$0xf]
      %v2865 = vld [vmem:[%s329 + $0x78] sm:$0xf]
      %v2866 = vld [vmem:[%s329 + $0x7c] sm:$0xf]
      %v2867 = vld [vmem:[%s329 + $0x80] sm:$0xf]
      %v2868 = vld [vmem:[%s329 + $0x84] sm:$0xf]
      %v2869 = vld [vmem:[%s329 + $0x88] sm:$0xf]
      %v2870 = vld [vmem:[%s329 + $0x8c] sm:$0xf]
      %v2871 = vld [vmem:[%s329 + $0x90] sm:$0xf]
      %v2872 = vld [vmem:[%s329 + $0x94] sm:$0xf]
      %v2873 = vld [vmem:[%s329 + $0x98] sm:$0x3]
      %v2874 = vld [vmem:[#allocation2] sm:$0xff]
      %v2875 = vld [vmem:[#allocation2 + $0x8] sm:$0xff]
      %v2876 = vld [vmem:[#allocation2 + $0x10] sm:$0xff]
      %v2877 = vld [vmem:[#allocation2 + $0x18] sm:$0xff]
      %v2878 = vld [vmem:[#allocation2 + $0x20] sm:$0xff]
      %v2879 = vld [vmem:[#allocation2 + $0x28] sm:$0xff]
      %v2880 = vld [vmem:[#allocation2 + $0x30] sm:$0xff]
      %v2881 = vld [vmem:[#allocation2 + $0x38] sm:$0xff]
      %v2882 = vld [vmem:[#allocation2 + $0x40] sm:$0xff]
      %v2883 = vld [vmem:[#allocation2 + $0x48] sm:$0xff]
      %v2884 = vld [vmem:[#allocation2 + $0x50] sm:$0xff]
      %v2885 = vld [vmem:[#allocation2 + $0x58] sm:$0xff]
      %v2886 = vld [vmem:[#allocation2 + $0x60] sm:$0xff]
      %v2887 = vld [vmem:[#allocation2 + $0x68] sm:$0xff]
      %v2888 = vld [vmem:[#allocation2 + $0x70] sm:$0xff]
      %v2889 = vld [vmem:[#allocation2 + $0x78] sm:$0xff]
      %v2890 = vld [vmem:[#allocation2 + $0x80] sm:$0xff]
      %v2891 = vld [vmem:[#allocation2 + $0x88] sm:$0xff]
      %v2892 = vld [vmem:[#allocation2 + $0x90] sm:$0xff]
      %v2893 = vld [vmem:[#allocation2 + $0x98] sm:$0xff]
      %v2894 = vld [vmem:[#allocation2 + $0xa0] sm:$0xff]
      %v2895 = vld [vmem:[#allocation2 + $0xa8] sm:$0xff]
      %v2896 = vld [vmem:[#allocation2 + $0xb0] sm:$0xff]
      %v2897 = vld [vmem:[#allocation2 + $0xb8] sm:$0xff]
      %v2898 = vld [vmem:[#allocation2 + $0xc0] sm:$0xff]
      %v2899 = vld [vmem:[#allocation2 + $0xc8] sm:$0xff]
      %v2900 = vld [vmem:[#allocation2 + $0xd0] sm:$0xff]
      %v2901 = vld [vmem:[#allocation2 + $0xd8] sm:$0xff]
      %v2902 = vld [vmem:[#allocation2 + $0xe0] sm:$0xff]
      %v2903 = vld [vmem:[#allocation2 + $0xe8] sm:$0xff]
      %v2904 = vld [vmem:[#allocation2 + $0xf0] sm:$0xff]
      %v2905 = vld [vmem:[#allocation2 + $0xf8] sm:$0xff]
      %v2906 = vld [vmem:[#allocation2 + $0x100] sm:$0xff]
      %v2907 = vld [vmem:[#allocation2 + $0x108] sm:$0xff]
      %v2908 = vld [vmem:[#allocation2 + $0x110] sm:$0xff]
      %v2909 = vld [vmem:[#allocation2 + $0x118] sm:$0xff]
      %s2910 = scalar_lea.vmem %s335, 80
      %v2911 = vld [vmem:[%s2910] sm:$0xf]
      %v2912 = vld [vmem:[%s2910 + $0x4] sm:$0xf]
      %v2913 = vld [vmem:[%s2910 + $0x8] sm:$0xf]
      %v2914 = vld [vmem:[%s2910 + $0xc] sm:$0xf]
      %v2952 = vunpack.c.l.b16 %v2837
      %v2953 = vunpack.c.l.b16 %v2838
      %v2954 = vunpack.c.l.b16 %v2839
      %v2955 = vunpack.c.l.b16 %v2840
      %v2956 = vunpack.c.l.b16 %v2841
      %v2957 = vunpack.c.l.b16 %v2842
      %v2958 = vunpack.c.l.b16 %v2843
      %v2959 = vunpack.c.l.b16 %v2844
      %v2960 = vunpack.c.l.b16 %v2845
      %v2961 = vunpack.c.l.b16 %v2846
      %v2962 = vunpack.c.l.b16 %v2847
      %v2963 = vunpack.c.l.b16 %v2848
      %v2964 = vunpack.c.l.b16 %v2849
      %v2965 = vunpack.c.l.b16 %v2850
      %v2966 = vunpack.c.l.b16 %v2851
      %v2967 = vunpack.c.l.b16 %v2852
      %v2968 = vunpack.c.l.b16 %v2853
      %v2969 = vunpack.c.l.b16 %v2854
      %v2970 = vunpack.c.l.b16 %v2855
      %v2971 = vunpack.c.l.b16 %v2856
      %v2972 = vunpack.c.l.b16 %v2857
      %v2973 = vunpack.c.l.b16 %v2858
      %v2974 = vunpack.c.l.b16 %v2859
      %v2975 = vunpack.c.l.b16 %v2860
      %v2976 = vunpack.c.l.b16 %v2861
      %v2977 = vunpack.c.l.b16 %v2862
      %v2978 = vunpack.c.l.b16 %v2863
      %v2979 = vunpack.c.l.b16 %v2864
      %v2980 = vunpack.c.l.b16 %v2865
      %v2981 = vunpack.c.l.b16 %v2866
      %v2982 = vunpack.c.l.b16 %v2867
      %v2983 = vunpack.c.l.b16 %v2868
      %v2984 = vunpack.c.l.b16 %v2869
      %v2985 = vunpack.c.l.b16 %v2870
      %v2986 = vunpack.c.l.b16 %v2871
      %v2987 = vunpack.c.l.b16 %v2872
      %v2988 = vunpack.c.l.b16 %v2873
      %v2989 = vpack.c.b16 %v2953, %v2952
      %v2990 = vpack.c.b16 %v2955, %v2954
      %v2991 = vpack.c.b16 %v2957, %v2956
      %v2992 = vpack.c.b16 %v2959, %v2958
      %v2993 = vpack.c.b16 %v2961, %v2960
      %v2994 = vpack.c.b16 %v2963, %v2962
      %v2995 = vpack.c.b16 %v2965, %v2964
      %v2996 = vpack.c.b16 %v2967, %v2966
      %v2997 = vpack.c.b16 %v2969, %v2968
      %v2998 = vpack.c.b16 %v2971, %v2970
      %v2999 = vpack.c.b16 %v2973, %v2972
      %v3000 = vpack.c.b16 %v2975, %v2974
      %v3001 = vpack.c.b16 %v2977, %v2976
      %v3002 = vpack.c.b16 %v2979, %v2978
      %v3003 = vpack.c.b16 %v2981, %v2980
      %v3004 = vpack.c.b16 %v2983, %v2982
      %v3005 = vpack.c.b16 %v2985, %v2984
      %v3006 = vpack.c.b16 %v2987, %v2986
      %v3007 = vpack.c.b16 %v2988, %v2988
      %vm3008 = vcmask 1045504
      %v3009 = vrot.slane %v2989, 2
      %v3010 = vrot.slane %v2990, 2
      %v3011 = vsel %vm3008, %v3009, %v3010
      %v3012 = vrot.slane %v2991, 2
      %v3013 = vsel %vm3008, %v3010, %v3012
      %v3014 = vrot.slane %v2992, 2
      %v3015 = vsel %vm3008, %v3012, %v3014
      %v3016 = vrot.slane %v2993, 2
      %v3017 = vsel %vm3008, %v3014, %v3016
      %v3018 = vrot.slane %v2994, 2
      %v3019 = vsel %vm3008, %v3016, %v3018
      %v3020 = vrot.slane %v2995, 2
      %v3021 = vsel %vm3008, %v3018, %v3020
      %v3022 = vrot.slane %v2996, 2
      %v3023 = vsel %vm3008, %v3020, %v3022
      %v3024 = vrot.slane %v2997, 2
      %v3025 = vsel %vm3008, %v3022, %v3024
      %v3026 = vrot.slane %v2998, 2
      %v3027 = vsel %vm3008, %v3024, %v3026
      %v3028 = vrot.slane %v2999, 2
      %v3029 = vsel %vm3008, %v3026, %v3028
      %v3030 = vrot.slane %v3000, 2
      %v3031 = vsel %vm3008, %v3028, %v3030
      %v3032 = vrot.slane %v3001, 2
      %v3033 = vsel %vm3008, %v3030, %v3032
      %v3034 = vrot.slane %v3002, 2
      %v3035 = vsel %vm3008, %v3032, %v3034
      %v3036 = vrot.slane %v3003, 2
      %v3037 = vsel %vm3008, %v3034, %v3036
      %v3038 = vrot.slane %v3004, 2
      %v3039 = vsel %vm3008, %v3036, %v3038
      %v3040 = vrot.slane %v3005, 2
      %v3041 = vsel %vm3008, %v3038, %v3040
      %v3042 = vrot.slane %v3006, 2
      %v3043 = vsel %vm3008, %v3040, %v3042
      %v3044 = vrot.slane %v3007, 2
      %v3045 = vsel %vm3008, %v3042, %v3044
      %v3050 = vunpack.c.l.b16 %v2911
      %v3051 = vunpack.c.l.b16 %v2912
      %v3052 = vunpack.c.l.b16 %v2913
      %v3053 = vunpack.c.l.b16 %v2914
      %v3054 = vpack.c.b16 %v3051, %v3050
      %v3055 = vpack.c.b16 %v3053, %v3052
      %v3059 = vsel %vm583, %v3011, 0
      %v3062 = vsel %vm583, %v3013, 0
      %v3065 = vsel %vm583, %v3015, 0
      %v3068 = vsel %vm583, %v3017, 0
      %v3071 = vsel %vm583, %v3019, 0
      %v3074 = vsel %vm583, %v3021, 0
      %v3077 = vsel %vm583, %v3023, 0
      %v3080 = vsel %vm583, %v3025, 0
      %v3083 = vsel %vm583, %v3027, 0
      %v3086 = vsel %vm583, %v3029, 0
      %v3089 = vsel %vm583, %v3031, 0
      %v3092 = vsel %vm583, %v3033, 0
      %v3095 = vsel %vm583, %v3035, 0
      %v3098 = vsel %vm583, %v3037, 0
      %v3101 = vsel %vm583, %v3039, 0
      %v3104 = vsel %vm583, %v3041, 0
      %v3107 = vsel %vm583, %v3043, 0
      %v3110 = vsel %vm583, %v3045, 0
      %3112 = vmatpush.bf16.msra.mxu0 0
      %3113 = vmatpush.bf16.msra.mxu0 0
      %3114 = vmatpush.bf16.msra.mxu0 0
      %3115 = vmatpush.bf16.msra.mxu0 0
      %3116 = vmatpush.bf16.msra.mxu0 0
      %3117 = vmatpush.bf16.msra.mxu0 0
      %3118 = vmatpush.bf16.msra.mxu0 %v3055
      %3119 = vmatpush.bf16.msra.mxu0 %v3054
      %3120 = vmatmul.bf16.gmra.mxu0 %v3059
      %v3121 = vpop.f32.mrf.mxu0
      %v3122 = vadd.f32 0.0, %v3121
      %v3123 = vpop.f32.mrf.mxu0
      %v3124 = vadd.f32 0.0, %v3123
      %3125 = vmatmul.bf16.gmra.mxu0 %v3062
      %v3126 = vpop.f32.mrf.mxu0
      %v3127 = vadd.f32 0.0, %v3126
      %v3128 = vpop.f32.mrf.mxu0
      %v3129 = vadd.f32 0.0, %v3128
      %3130 = vmatmul.bf16.gmra.mxu0 %v3065
      %v3131 = vpop.f32.mrf.mxu0
      %v3132 = vadd.f32 0.0, %v3131
      %v3133 = vpop.f32.mrf.mxu0
      %v3134 = vadd.f32 0.0, %v3133
      %3135 = vmatmul.bf16.gmra.mxu0 %v3068
      %v3136 = vpop.f32.mrf.mxu0
      %v3137 = vadd.f32 0.0, %v3136
      %v3138 = vpop.f32.mrf.mxu0
      %v3139 = vadd.f32 0.0, %v3138
      %3140 = vmatmul.bf16.gmra.mxu0 %v3071
      %v3141 = vpop.f32.mrf.mxu0
      %v3142 = vadd.f32 0.0, %v3141
      %v3143 = vpop.f32.mrf.mxu0
      %v3144 = vadd.f32 0.0, %v3143
      %3145 = vmatmul.bf16.gmra.mxu0 %v3074
      %v3146 = vpop.f32.mrf.mxu0
      %v3147 = vadd.f32 0.0, %v3146
      %v3148 = vpop.f32.mrf.mxu0
      %v3149 = vadd.f32 0.0, %v3148
      %3150 = vmatmul.bf16.gmra.mxu0 %v3077
      %v3151 = vpop.f32.mrf.mxu0
      %v3152 = vadd.f32 0.0, %v3151
      %v3153 = vpop.f32.mrf.mxu0
      %v3154 = vadd.f32 0.0, %v3153
      %3155 = vmatmul.bf16.gmra.mxu0 %v3080
      %v3156 = vpop.f32.mrf.mxu0
      %v3157 = vadd.f32 0.0, %v3156
      %v3158 = vpop.f32.mrf.mxu0
      %v3159 = vadd.f32 0.0, %v3158
      %3160 = vmatmul.bf16.gmra.mxu0 %v3083
      %v3161 = vpop.f32.mrf.mxu0
      %v3162 = vadd.f32 0.0, %v3161
      %v3163 = vpop.f32.mrf.mxu0
      %v3164 = vadd.f32 0.0, %v3163
      %3165 = vmatmul.bf16.gmra.mxu0 %v3086
      %v3166 = vpop.f32.mrf.mxu0
      %v3167 = vadd.f32 0.0, %v3166
      %v3168 = vpop.f32.mrf.mxu0
      %v3169 = vadd.f32 0.0, %v3168
      %3170 = vmatmul.bf16.gmra.mxu0 %v3089
      %v3171 = vpop.f32.mrf.mxu0
      %v3172 = vadd.f32 0.0, %v3171
      %v3173 = vpop.f32.mrf.mxu0
      %v3174 = vadd.f32 0.0, %v3173
      %3175 = vmatmul.bf16.gmra.mxu0 %v3092
      %v3176 = vpop.f32.mrf.mxu0
      %v3177 = vadd.f32 0.0, %v3176
      %v3178 = vpop.f32.mrf.mxu0
      %v3179 = vadd.f32 0.0, %v3178
      %3180 = vmatmul.bf16.gmra.mxu0 %v3095
      %v3181 = vpop.f32.mrf.mxu0
      %v3182 = vadd.f32 0.0, %v3181
      %v3183 = vpop.f32.mrf.mxu0
      %v3184 = vadd.f32 0.0, %v3183
      %3185 = vmatmul.bf16.gmra.mxu0 %v3098
      %v3186 = vpop.f32.mrf.mxu0
      %v3187 = vadd.f32 0.0, %v3186
      %v3188 = vpop.f32.mrf.mxu0
      %v3189 = vadd.f32 0.0, %v3188
      %3190 = vmatmul.bf16.gmra.mxu0 %v3101
      %v3191 = vpop.f32.mrf.mxu0
      %v3192 = vadd.f32 0.0, %v3191
      %v3193 = vpop.f32.mrf.mxu0
      %v3194 = vadd.f32 0.0, %v3193
      %3195 = vmatmul.bf16.gmra.mxu0 %v3104
      %v3196 = vpop.f32.mrf.mxu0
      %v3197 = vadd.f32 0.0, %v3196
      %v3198 = vpop.f32.mrf.mxu0
      %v3199 = vadd.f32 0.0, %v3198
      %3200 = vmatmul.bf16.gmra.mxu0 %v3107
      %v3201 = vpop.f32.mrf.mxu0
      %v3202 = vadd.f32 0.0, %v3201
      %v3203 = vpop.f32.mrf.mxu0
      %v3204 = vadd.f32 0.0, %v3203
      %3205 = vmatmul.bf16.gmra.mxu0 %v3110
      %v3206 = vpop.f32.mrf.mxu0
      %v3207 = vadd.f32 0.0, %v3206
      %v3208 = vpop.f32.mrf.mxu0
      %v3209 = vadd.f32 0.0, %v3208
      %3210 = vdwg.mxu0
      %v3211 = vadd.f32 %v2874, %v3122
      %v3212 = vadd.f32 %v2875, %v3124
      %v3213 = vadd.f32 %v2876, %v3127
      %v3214 = vadd.f32 %v2877, %v3129
      %v3215 = vadd.f32 %v2878, %v3132
      %v3216 = vadd.f32 %v2879, %v3134
      %v3217 = vadd.f32 %v2880, %v3137
      %v3218 = vadd.f32 %v2881, %v3139
      %v3219 = vadd.f32 %v2882, %v3142
      %v3220 = vadd.f32 %v2883, %v3144
      %v3221 = vadd.f32 %v2884, %v3147
      %v3222 = vadd.f32 %v2885, %v3149
      %v3223 = vadd.f32 %v2886, %v3152
      %v3224 = vadd.f32 %v2887, %v3154
      %v3225 = vadd.f32 %v2888, %v3157
      %v3226 = vadd.f32 %v2889, %v3159
      %v3227 = vadd.f32 %v2890, %v3162
      %v3228 = vadd.f32 %v2891, %v3164
      %v3229 = vadd.f32 %v2892, %v3167
      %v3230 = vadd.f32 %v2893, %v3169
      %v3231 = vadd.f32 %v2894, %v3172
      %v3232 = vadd.f32 %v2895, %v3174
      %v3233 = vadd.f32 %v2896, %v3177
      %v3234 = vadd.f32 %v2897, %v3179
      %v3235 = vadd.f32 %v2898, %v3182
      %v3236 = vadd.f32 %v2899, %v3184
      %v3237 = vadd.f32 %v2900, %v3187
      %v3238 = vadd.f32 %v2901, %v3189
      %v3239 = vadd.f32 %v2902, %v3192
      %v3240 = vadd.f32 %v2903, %v3194
      %v3241 = vadd.f32 %v2904, %v3197
      %v3242 = vadd.f32 %v2905, %v3199
      %v3243 = vadd.f32 %v2906, %v3202
      %v3244 = vadd.f32 %v2907, %v3204
      %v3245 = vadd.f32 %v2908, %v3207
      %v3246 = vadd.f32 %v2909, %v3209
      %3247 = vst.msk [vmem:[#allocation2] sm:$0xff] %vm773, %v3211
      %3248 = vst.msk [vmem:[#allocation2 + $0x8] sm:$0xff] %vm773, %v3212
      %3249 = vst.msk [vmem:[#allocation2 + $0x10] sm:$0xff] %vm773, %v3213
      %3250 = vst.msk [vmem:[#allocation2 + $0x18] sm:$0xff] %vm773, %v3214
      %3251 = vst.msk [vmem:[#allocation2 + $0x20] sm:$0xff] %vm773, %v3215
      %3252 = vst.msk [vmem:[#allocation2 + $0x28] sm:$0xff] %vm773, %v3216
      %3253 = vst.msk [vmem:[#allocation2 + $0x30] sm:$0xff] %vm773, %v3217
      %3254 = vst.msk [vmem:[#allocation2 + $0x38] sm:$0xff] %vm773, %v3218
      %3255 = vst.msk [vmem:[#allocation2 + $0x40] sm:$0xff] %vm773, %v3219
      %3256 = vst.msk [vmem:[#allocation2 + $0x48] sm:$0xff] %vm773, %v3220
      %3257 = vst.msk [vmem:[#allocation2 + $0x50] sm:$0xff] %vm773, %v3221
      %3258 = vst.msk [vmem:[#allocation2 + $0x58] sm:$0xff] %vm773, %v3222
      %3259 = vst.msk [vmem:[#allocation2 + $0x60] sm:$0xff] %vm773, %v3223
      %3260 = vst.msk [vmem:[#allocation2 + $0x68] sm:$0xff] %vm773, %v3224
      %3261 = vst.msk [vmem:[#allocation2 + $0x70] sm:$0xff] %vm773, %v3225
      %3262 = vst.msk [vmem:[#allocation2 + $0x78] sm:$0xff] %vm773, %v3226
      %3263 = vst.msk [vmem:[#allocation2 + $0x80] sm:$0xff] %vm773, %v3227
      %3264 = vst.msk [vmem:[#allocation2 + $0x88] sm:$0xff] %vm773, %v3228
      %3265 = vst.msk [vmem:[#allocation2 + $0x90] sm:$0xff] %vm773, %v3229
      %3266 = vst.msk [vmem:[#allocation2 + $0x98] sm:$0xff] %vm773, %v3230
      %3267 = vst.msk [vmem:[#allocation2 + $0xa0] sm:$0xff] %vm773, %v3231
      %3268 = vst.msk [vmem:[#allocation2 + $0xa8] sm:$0xff] %vm773, %v3232
      %3269 = vst.msk [vmem:[#allocation2 + $0xb0] sm:$0xff] %vm773, %v3233
      %3270 = vst.msk [vmem:[#allocation2 + $0xb8] sm:$0xff] %vm773, %v3234
      %3271 = vst.msk [vmem:[#allocation2 + $0xc0] sm:$0xff] %vm773, %v3235
      %3272 = vst.msk [vmem:[#allocation2 + $0xc8] sm:$0xff] %vm773, %v3236
      %3273 = vst.msk [vmem:[#allocation2 + $0xd0] sm:$0xff] %vm773, %v3237
      %3274 = vst.msk [vmem:[#allocation2 + $0xd8] sm:$0xff] %vm773, %v3238
      %3275 = vst.msk [vmem:[#allocation2 + $0xe0] sm:$0xff] %vm773, %v3239
      %3276 = vst.msk [vmem:[#allocation2 + $0xe8] sm:$0xff] %vm773, %v3240
      %3277 = vst.msk [vmem:[#allocation2 + $0xf0] sm:$0xff] %vm773, %v3241
      %3278 = vst.msk [vmem:[#allocation2 + $0xf8] sm:$0xff] %vm773, %v3242
      %3279 = vst.msk [vmem:[#allocation2 + $0x100] sm:$0xff] %vm773, %v3243
      %3280 = vst.msk [vmem:[#allocation2 + $0x108] sm:$0xff] %vm773, %v3244
      %3281 = vst.msk [vmem:[#allocation2 + $0x110] sm:$0xff] %vm773, %v3245
      %3282 = vst.msk [vmem:[#allocation2 + $0x118] sm:$0xff] %vm773, %v3246
      %v3283 = vld [vmem:[%s329 + $0x10] sm:$0xc]
      %v3284 = vld [vmem:[%s329 + $0x14] sm:$0xf]
      %v3285 = vld [vmem:[%s329 + $0x18] sm:$0xf]
      %v3286 = vld [vmem:[%s329 + $0x1c] sm:$0xf]
      %v3287 = vld [vmem:[%s329 + $0x20] sm:$0xf]
      %v3288 = vld [vmem:[%s329 + $0x24] sm:$0xf]
      %v3289 = vld [vmem:[%s329 + $0x28] sm:$0xf]
      %v3290 = vld [vmem:[%s329 + $0x2c] sm:$0xf]
      %v3291 = vld [vmem:[%s329 + $0x30] sm:$0xf]
      %v3292 = vld [vmem:[%s329 + $0x34] sm:$0xf]
      %v3293 = vld [vmem:[%s329 + $0x38] sm:$0xf]
      %v3294 = vld [vmem:[%s329 + $0x3c] sm:$0xf]
      %v3295 = vld [vmem:[%s329 + $0x40] sm:$0xf]
      %v3296 = vld [vmem:[%s329 + $0x44] sm:$0xf]
      %v3297 = vld [vmem:[%s329 + $0x48] sm:$0xf]
      %v3298 = vld [vmem:[%s329 + $0x4c] sm:$0xf]
      %v3299 = vld [vmem:[%s329 + $0x50] sm:$0xf]
      %v3300 = vld [vmem:[%s329 + $0x54] sm:$0xf]
      %v3301 = vld [vmem:[%s329 + $0x58] sm:$0xf]
      %v3302 = vld [vmem:[%s329 + $0x5c] sm:$0xf]
      %v3303 = vld [vmem:[%s329 + $0x60] sm:$0xf]
      %v3304 = vld [vmem:[%s329 + $0x64] sm:$0xf]
      %v3305 = vld [vmem:[%s329 + $0x68] sm:$0xf]
      %v3306 = vld [vmem:[%s329 + $0x6c] sm:$0xf]
      %v3307 = vld [vmem:[%s329 + $0x70] sm:$0xf]
      %v3308 = vld [vmem:[%s329 + $0x74] sm:$0xf]
      %v3309 = vld [vmem:[%s329 + $0x78] sm:$0xf]
      %v3310 = vld [vmem:[%s329 + $0x7c] sm:$0xf]
      %v3311 = vld [vmem:[%s329 + $0x80] sm:$0xf]
      %v3312 = vld [vmem:[%s329 + $0x84] sm:$0xf]
      %v3313 = vld [vmem:[%s329 + $0x88] sm:$0xf]
      %v3314 = vld [vmem:[%s329 + $0x8c] sm:$0xf]
      %v3315 = vld [vmem:[%s329 + $0x90] sm:$0xf]
      %v3316 = vld [vmem:[%s329 + $0x94] sm:$0xf]
      %v3317 = vld [vmem:[%s329 + $0x98] sm:$0xf]
      %v3318 = vld [vmem:[%s329 + $0x9c] sm:$0xf]
      %v3319 = vld [vmem:[%s329 + $0xa0] sm:$0x3]
      %v3320 = vld [vmem:[#allocation2] sm:$0xff]
      %v3321 = vld [vmem:[#allocation2 + $0x8] sm:$0xff]
      %v3322 = vld [vmem:[#allocation2 + $0x10] sm:$0xff]
      %v3323 = vld [vmem:[#allocation2 + $0x18] sm:$0xff]
      %v3324 = vld [vmem:[#allocation2 + $0x20] sm:$0xff]
      %v3325 = vld [vmem:[#allocation2 + $0x28] sm:$0xff]
      %v3326 = vld [vmem:[#allocation2 + $0x30] sm:$0xff]
      %v3327 = vld [vmem:[#allocation2 + $0x38] sm:$0xff]
      %v3328 = vld [vmem:[#allocation2 + $0x40] sm:$0xff]
      %v3329 = vld [vmem:[#allocation2 + $0x48] sm:$0xff]
      %v3330 = vld [vmem:[#allocation2 + $0x50] sm:$0xff]
      %v3331 = vld [vmem:[#allocation2 + $0x58] sm:$0xff]
      %v3332 = vld [vmem:[#allocation2 + $0x60] sm:$0xff]
      %v3333 = vld [vmem:[#allocation2 + $0x68] sm:$0xff]
      %v3334 = vld [vmem:[#allocation2 + $0x70] sm:$0xff]
      %v3335 = vld [vmem:[#allocation2 + $0x78] sm:$0xff]
      %v3336 = vld [vmem:[#allocation2 + $0x80] sm:$0xff]
      %v3337 = vld [vmem:[#allocation2 + $0x88] sm:$0xff]
      %v3338 = vld [vmem:[#allocation2 + $0x90] sm:$0xff]
      %v3339 = vld [vmem:[#allocation2 + $0x98] sm:$0xff]
      %v3340 = vld [vmem:[#allocation2 + $0xa0] sm:$0xff]
      %v3341 = vld [vmem:[#allocation2 + $0xa8] sm:$0xff]
      %v3342 = vld [vmem:[#allocation2 + $0xb0] sm:$0xff]
      %v3343 = vld [vmem:[#allocation2 + $0xb8] sm:$0xff]
      %v3344 = vld [vmem:[#allocation2 + $0xc0] sm:$0xff]
      %v3345 = vld [vmem:[#allocation2 + $0xc8] sm:$0xff]
      %v3346 = vld [vmem:[#allocation2 + $0xd0] sm:$0xff]
      %v3347 = vld [vmem:[#allocation2 + $0xd8] sm:$0xff]
      %v3348 = vld [vmem:[#allocation2 + $0xe0] sm:$0xff]
      %v3349 = vld [vmem:[#allocation2 + $0xe8] sm:$0xff]
      %v3350 = vld [vmem:[#allocation2 + $0xf0] sm:$0xff]
      %v3351 = vld [vmem:[#allocation2 + $0xf8] sm:$0xff]
      %v3352 = vld [vmem:[#allocation2 + $0x100] sm:$0xff]
      %v3353 = vld [vmem:[#allocation2 + $0x108] sm:$0xff]
      %v3354 = vld [vmem:[#allocation2 + $0x110] sm:$0xff]
      %v3355 = vld [vmem:[#allocation2 + $0x118] sm:$0xff]
      %s3356 = scalar_lea.vmem %s335, 96
      %v3357 = vld [vmem:[%s3356] sm:$0xf]
      %v3358 = vld [vmem:[%s3356 + $0x4] sm:$0xf]
      %v3359 = vld [vmem:[%s3356 + $0x8] sm:$0xf]
      %v3360 = vld [vmem:[%s3356 + $0xc] sm:$0xf]
      %v3398 = vunpack.c.l.b16 %v3283
      %v3399 = vunpack.c.l.b16 %v3284
      %v3400 = vunpack.c.l.b16 %v3285
      %v3401 = vunpack.c.l.b16 %v3286
      %v3402 = vunpack.c.l.b16 %v3287
      %v3403 = vunpack.c.l.b16 %v3288
      %v3404 = vunpack.c.l.b16 %v3289
      %v3405 = vunpack.c.l.b16 %v3290
      %v3406 = vunpack.c.l.b16 %v3291
      %v3407 = vunpack.c.l.b16 %v3292
      %v3408 = vunpack.c.l.b16 %v3293
      %v3409 = vunpack.c.l.b16 %v3294
      %v3410 = vunpack.c.l.b16 %v3295
      %v3411 = vunpack.c.l.b16 %v3296
      %v3412 = vunpack.c.l.b16 %v3297
      %v3413 = vunpack.c.l.b16 %v3298
      %v3414 = vunpack.c.l.b16 %v3299
      %v3415 = vunpack.c.l.b16 %v3300
      %v3416 = vunpack.c.l.b16 %v3301
      %v3417 = vunpack.c.l.b16 %v3302
      %v3418 = vunpack.c.l.b16 %v3303
      %v3419 = vunpack.c.l.b16 %v3304
      %v3420 = vunpack.c.l.b16 %v3305
      %v3421 = vunpack.c.l.b16 %v3306
      %v3422 = vunpack.c.l.b16 %v3307
      %v3423 = vunpack.c.l.b16 %v3308
      %v3424 = vunpack.c.l.b16 %v3309
      %v3425 = vunpack.c.l.b16 %v3310
      %v3426 = vunpack.c.l.b16 %v3311
      %v3427 = vunpack.c.l.b16 %v3312
      %v3428 = vunpack.c.l.b16 %v3313
      %v3429 = vunpack.c.l.b16 %v3314
      %v3430 = vunpack.c.l.b16 %v3315
      %v3431 = vunpack.c.l.b16 %v3316
      %v3432 = vunpack.c.l.b16 %v3317
      %v3433 = vunpack.c.l.b16 %v3318
      %v3434 = vunpack.c.l.b16 %v3319
      %v3435 = vpack.c.b16 %v3399, %v3398
      %v3436 = vpack.c.b16 %v3401, %v3400
      %v3437 = vpack.c.b16 %v3403, %v3402
      %v3438 = vpack.c.b16 %v3405, %v3404
      %v3439 = vpack.c.b16 %v3407, %v3406
      %v3440 = vpack.c.b16 %v3409, %v3408
      %v3441 = vpack.c.b16 %v3411, %v3410
      %v3442 = vpack.c.b16 %v3413, %v3412
      %v3443 = vpack.c.b16 %v3415, %v3414
      %v3444 = vpack.c.b16 %v3417, %v3416
      %v3445 = vpack.c.b16 %v3419, %v3418
      %v3446 = vpack.c.b16 %v3421, %v3420
      %v3447 = vpack.c.b16 %v3423, %v3422
      %v3448 = vpack.c.b16 %v3425, %v3424
      %v3449 = vpack.c.b16 %v3427, %v3426
      %v3450 = vpack.c.b16 %v3429, %v3428
      %v3451 = vpack.c.b16 %v3431, %v3430
      %v3452 = vpack.c.b16 %v3433, %v3432
      %v3453 = vpack.c.b16 %v3434, %v3434
      %v3454 = vrot.slane %v3435, 2
      %v3455 = vrot.slane %v3436, 2
      %v3456 = vsel %vm3008, %v3454, %v3455
      %v3457 = vrot.slane %v3437, 2
      %v3458 = vsel %vm3008, %v3455, %v3457
      %v3459 = vrot.slane %v3438, 2
      %v3460 = vsel %vm3008, %v3457, %v3459
      %v3461 = vrot.slane %v3439, 2
      %v3462 = vsel %vm3008, %v3459, %v3461
      %v3463 = vrot.slane %v3440, 2
      %v3464 = vsel %vm3008, %v3461, %v3463
      %v3465 = vrot.slane %v3441, 2
      %v3466 = vsel %vm3008, %v3463, %v3465
      %v3467 = vrot.slane %v3442, 2
      %v3468 = vsel %vm3008, %v3465, %v3467
      %v3469 = vrot.slane %v3443, 2
      %v3470 = vsel %vm3008, %v3467, %v3469
      %v3471 = vrot.slane %v3444, 2
      %v3472 = vsel %vm3008, %v3469, %v3471
      %v3473 = vrot.slane %v3445, 2
      %v3474 = vsel %vm3008, %v3471, %v3473
      %v3475 = vrot.slane %v3446, 2
      %v3476 = vsel %vm3008, %v3473, %v3475
      %v3477 = vrot.slane %v3447, 2
      %v3478 = vsel %vm3008, %v3475, %v3477
      %v3479 = vrot.slane %v3448, 2
      %v3480 = vsel %vm3008, %v3477, %v3479
      %v3481 = vrot.slane %v3449, 2
      %v3482 = vsel %vm3008, %v3479, %v3481
      %v3483 = vrot.slane %v3450, 2
      %v3484 = vsel %vm3008, %v3481, %v3483
      %v3485 = vrot.slane %v3451, 2
      %v3486 = vsel %vm3008, %v3483, %v3485
      %v3487 = vrot.slane %v3452, 2
      %v3488 = vsel %vm3008, %v3485, %v3487
      %v3489 = vrot.slane %v3453, 2
      %v3490 = vsel %vm3008, %v3487, %v3489
      %v3495 = vunpack.c.l.b16 %v3357
      %v3496 = vunpack.c.l.b16 %v3358
      %v3497 = vunpack.c.l.b16 %v3359
      %v3498 = vunpack.c.l.b16 %v3360
      %v3499 = vpack.c.b16 %v3496, %v3495
      %v3500 = vpack.c.b16 %v3498, %v3497
      %v3504 = vsel %vm583, %v3456, 0
      %v3507 = vsel %vm583, %v3458, 0
      %v3510 = vsel %vm583, %v3460, 0
      %v3513 = vsel %vm583, %v3462, 0
      %v3516 = vsel %vm583, %v3464, 0
      %v3519 = vsel %vm583, %v3466, 0
      %v3522 = vsel %vm583, %v3468, 0
      %v3525 = vsel %vm583, %v3470, 0
      %v3528 = vsel %vm583, %v3472, 0
      %v3531 = vsel %vm583, %v3474, 0
      %v3534 = vsel %vm583, %v3476, 0
      %v3537 = vsel %vm583, %v3478, 0
      %v3540 = vsel %vm583, %v3480, 0
      %v3543 = vsel %vm583, %v3482, 0
      %v3546 = vsel %vm583, %v3484, 0
      %v3549 = vsel %vm583, %v3486, 0
      %v3552 = vsel %vm583, %v3488, 0
      %v3555 = vsel %vm583, %v3490, 0
      %3557 = vmatpush.bf16.msra.mxu0 0
      %3558 = vmatpush.bf16.msra.mxu0 0
      %3559 = vmatpush.bf16.msra.mxu0 0
      %3560 = vmatpush.bf16.msra.mxu0 0
      %3561 = vmatpush.bf16.msra.mxu0 0
      %3562 = vmatpush.bf16.msra.mxu0 0
      %3563 = vmatpush.bf16.msra.mxu0 %v3500
      %3564 = vmatpush.bf16.msra.mxu0 %v3499
      %3565 = vmatmul.bf16.gmra.mxu0 %v3504
      %v3566 = vpop.f32.mrf.mxu0
      %v3567 = vadd.f32 0.0, %v3566
      %v3568 = vpop.f32.mrf.mxu0
      %v3569 = vadd.f32 0.0, %v3568
      %3570 = vmatmul.bf16.gmra.mxu0 %v3507
      %v3571 = vpop.f32.mrf.mxu0
      %v3572 = vadd.f32 0.0, %v3571
      %v3573 = vpop.f32.mrf.mxu0
      %v3574 = vadd.f32 0.0, %v3573
      %3575 = vmatmul.bf16.gmra.mxu0 %v3510
      %v3576 = vpop.f32.mrf.mxu0
      %v3577 = vadd.f32 0.0, %v3576
      %v3578 = vpop.f32.mrf.mxu0
      %v3579 = vadd.f32 0.0, %v3578
      %3580 = vmatmul.bf16.gmra.mxu0 %v3513
      %v3581 = vpop.f32.mrf.mxu0
      %v3582 = vadd.f32 0.0, %v3581
      %v3583 = vpop.f32.mrf.mxu0
      %v3584 = vadd.f32 0.0, %v3583
      %3585 = vmatmul.bf16.gmra.mxu0 %v3516
      %v3586 = vpop.f32.mrf.mxu0
      %v3587 = vadd.f32 0.0, %v3586
      %v3588 = vpop.f32.mrf.mxu0
      %v3589 = vadd.f32 0.0, %v3588
      %3590 = vmatmul.bf16.gmra.mxu0 %v3519
      %v3591 = vpop.f32.mrf.mxu0
      %v3592 = vadd.f32 0.0, %v3591
      %v3593 = vpop.f32.mrf.mxu0
      %v3594 = vadd.f32 0.0, %v3593
      %3595 = vmatmul.bf16.gmra.mxu0 %v3522
      %v3596 = vpop.f32.mrf.mxu0
      %v3597 = vadd.f32 0.0, %v3596
      %v3598 = vpop.f32.mrf.mxu0
      %v3599 = vadd.f32 0.0, %v3598
      %3600 = vmatmul.bf16.gmra.mxu0 %v3525
      %v3601 = vpop.f32.mrf.mxu0
      %v3602 = vadd.f32 0.0, %v3601
      %v3603 = vpop.f32.mrf.mxu0
      %v3604 = vadd.f32 0.0, %v3603
      %3605 = vmatmul.bf16.gmra.mxu0 %v3528
      %v3606 = vpop.f32.mrf.mxu0
      %v3607 = vadd.f32 0.0, %v3606
      %v3608 = vpop.f32.mrf.mxu0
      %v3609 = vadd.f32 0.0, %v3608
      %3610 = vmatmul.bf16.gmra.mxu0 %v3531
      %v3611 = vpop.f32.mrf.mxu0
      %v3612 = vadd.f32 0.0, %v3611
      %v3613 = vpop.f32.mrf.mxu0
      %v3614 = vadd.f32 0.0, %v3613
      %3615 = vmatmul.bf16.gmra.mxu0 %v3534
      %v3616 = vpop.f32.mrf.mxu0
      %v3617 = vadd.f32 0.0, %v3616
      %v3618 = vpop.f32.mrf.mxu0
      %v3619 = vadd.f32 0.0, %v3618
      %3620 = vmatmul.bf16.gmra.mxu0 %v3537
      %v3621 = vpop.f32.mrf.mxu0
      %v3622 = vadd.f32 0.0, %v3621
      %v3623 = vpop.f32.mrf.mxu0
      %v3624 = vadd.f32 0.0, %v3623
      %3625 = vmatmul.bf16.gmra.mxu0 %v3540
      %v3626 = vpop.f32.mrf.mxu0
      %v3627 = vadd.f32 0.0, %v3626
      %v3628 = vpop.f32.mrf.mxu0
      %v3629 = vadd.f32 0.0, %v3628
      %3630 = vmatmul.bf16.gmra.mxu0 %v3543
      %v3631 = vpop.f32.mrf.mxu0
      %v3632 = vadd.f32 0.0, %v3631
      %v3633 = vpop.f32.mrf.mxu0
      %v3634 = vadd.f32 0.0, %v3633
      %3635 = vmatmul.bf16.gmra.mxu0 %v3546
      %v3636 = vpop.f32.mrf.mxu0
      %v3637 = vadd.f32 0.0, %v3636
      %v3638 = vpop.f32.mrf.mxu0
      %v3639 = vadd.f32 0.0, %v3638
      %3640 = vmatmul.bf16.gmra.mxu0 %v3549
      %v3641 = vpop.f32.mrf.mxu0
      %v3642 = vadd.f32 0.0, %v3641
      %v3643 = vpop.f32.mrf.mxu0
      %v3644 = vadd.f32 0.0, %v3643
      %3645 = vmatmul.bf16.gmra.mxu0 %v3552
      %v3646 = vpop.f32.mrf.mxu0
      %v3647 = vadd.f32 0.0, %v3646
      %v3648 = vpop.f32.mrf.mxu0
      %v3649 = vadd.f32 0.0, %v3648
      %3650 = vmatmul.bf16.gmra.mxu0 %v3555
      %v3651 = vpop.f32.mrf.mxu0
      %v3652 = vadd.f32 0.0, %v3651
      %v3653 = vpop.f32.mrf.mxu0
      %v3654 = vadd.f32 0.0, %v3653
      %3655 = vdwg.mxu0
      %v3656 = vadd.f32 %v3320, %v3567
      %v3657 = vadd.f32 %v3321, %v3569
      %v3658 = vadd.f32 %v3322, %v3572
      %v3659 = vadd.f32 %v3323, %v3574
      %v3660 = vadd.f32 %v3324, %v3577
      %v3661 = vadd.f32 %v3325, %v3579
      %v3662 = vadd.f32 %v3326, %v3582
      %v3663 = vadd.f32 %v3327, %v3584
      %v3664 = vadd.f32 %v3328, %v3587
      %v3665 = vadd.f32 %v3329, %v3589
      %v3666 = vadd.f32 %v3330, %v3592
      %v3667 = vadd.f32 %v3331, %v3594
      %v3668 = vadd.f32 %v3332, %v3597
      %v3669 = vadd.f32 %v3333, %v3599
      %v3670 = vadd.f32 %v3334, %v3602
      %v3671 = vadd.f32 %v3335, %v3604
      %v3672 = vadd.f32 %v3336, %v3607
      %v3673 = vadd.f32 %v3337, %v3609
      %v3674 = vadd.f32 %v3338, %v3612
      %v3675 = vadd.f32 %v3339, %v3614
      %v3676 = vadd.f32 %v3340, %v3617
      %v3677 = vadd.f32 %v3341, %v3619
      %v3678 = vadd.f32 %v3342, %v3622
      %v3679 = vadd.f32 %v3343, %v3624
      %v3680 = vadd.f32 %v3344, %v3627
      %v3681 = vadd.f32 %v3345, %v3629
      %v3682 = vadd.f32 %v3346, %v3632
      %v3683 = vadd.f32 %v3347, %v3634
      %v3684 = vadd.f32 %v3348, %v3637
      %v3685 = vadd.f32 %v3349, %v3639
      %v3686 = vadd.f32 %v3350, %v3642
      %v3687 = vadd.f32 %v3351, %v3644
      %v3688 = vadd.f32 %v3352, %v3647
      %v3689 = vadd.f32 %v3353, %v3649
      %v3690 = vadd.f32 %v3354, %v3652
      %v3691 = vadd.f32 %v3355, %v3654
      %3692 = vst.msk [vmem:[#allocation2] sm:$0xff] %vm773, %v3656
      %3693 = vst.msk [vmem:[#allocation2 + $0x8] sm:$0xff] %vm773, %v3657
      %3694 = vst.msk [vmem:[#allocation2 + $0x10] sm:$0xff] %vm773, %v3658
      %3695 = vst.msk [vmem:[#allocation2 + $0x18] sm:$0xff] %vm773, %v3659
      %3696 = vst.msk [vmem:[#allocation2 + $0x20] sm:$0xff] %vm773, %v3660
      %3697 = vst.msk [vmem:[#allocation2 + $0x28] sm:$0xff] %vm773, %v3661
      %3698 = vst.msk [vmem:[#allocation2 + $0x30] sm:$0xff] %vm773, %v3662
      %3699 = vst.msk [vmem:[#allocation2 + $0x38] sm:$0xff] %vm773, %v3663
      %3700 = vst.msk [vmem:[#allocation2 + $0x40] sm:$0xff] %vm773, %v3664
      %3701 = vst.msk [vmem:[#allocation2 + $0x48] sm:$0xff] %vm773, %v3665
      %3702 = vst.msk [vmem:[#allocation2 + $0x50] sm:$0xff] %vm773, %v3666
      %3703 = vst.msk [vmem:[#allocation2 + $0x58] sm:$0xff] %vm773, %v3667
      %3704 = vst.msk [vmem:[#allocation2 + $0x60] sm:$0xff] %vm773, %v3668
      %3705 = vst.msk [vmem:[#allocation2 + $0x68] sm:$0xff] %vm773, %v3669
      %3706 = vst.msk [vmem:[#allocation2 + $0x70] sm:$0xff] %vm773, %v3670
      %3707 = vst.msk [vmem:[#allocation2 + $0x78] sm:$0xff] %vm773, %v3671
      %3708 = vst.msk [vmem:[#allocation2 + $0x80] sm:$0xff] %vm773, %v3672
      %3709 = vst.msk [vmem:[#allocation2 + $0x88] sm:$0xff] %vm773, %v3673
      %3710 = vst.msk [vmem:[#allocation2 + $0x90] sm:$0xff] %vm773, %v3674
      %3711 = vst.msk [vmem:[#allocation2 + $0x98] sm:$0xff] %vm773, %v3675
      %3712 = vst.msk [vmem:[#allocation2 + $0xa0] sm:$0xff] %vm773, %v3676
      %3713 = vst.msk [vmem:[#allocation2 + $0xa8] sm:$0xff] %vm773, %v3677
      %3714 = vst.msk [vmem:[#allocation2 + $0xb0] sm:$0xff] %vm773, %v3678
      %3715 = vst.msk [vmem:[#allocation2 + $0xb8] sm:$0xff] %vm773, %v3679
      %3716 = vst.msk [vmem:[#allocation2 + $0xc0] sm:$0xff] %vm773, %v3680
      %3717 = vst.msk [vmem:[#allocation2 + $0xc8] sm:$0xff] %vm773, %v3681
      %3718 = vst.msk [vmem:[#allocation2 + $0xd0] sm:$0xff] %vm773, %v3682
      %3719 = vst.msk [vmem:[#allocation2 + $0xd8] sm:$0xff] %vm773, %v3683
      %3720 = vst.msk [vmem:[#allocation2 + $0xe0] sm:$0xff] %vm773, %v3684
      %3721 = vst.msk [vmem:[#allocation2 + $0xe8] sm:$0xff] %vm773, %v3685
      %3722 = vst.msk [vmem:[#allocation2 + $0xf0] sm:$0xff] %vm773, %v3686
      %3723 = vst.msk [vmem:[#allocation2 + $0xf8] sm:$0xff] %vm773, %v3687
      %3724 = vst.msk [vmem:[#allocation2 + $0x100] sm:$0xff] %vm773, %v3688
      %3725 = vst.msk [vmem:[#allocation2 + $0x108] sm:$0xff] %vm773, %v3689
      %3726 = vst.msk [vmem:[#allocation2 + $0x110] sm:$0xff] %vm773, %v3690
      %3727 = vst.msk [vmem:[#allocation2 + $0x118] sm:$0xff] %vm773, %v3691
      %v3728 = vld [vmem:[%s329 + $0x10] sm:$0xc]
      %v3729 = vld [vmem:[%s329 + $0x14] sm:$0xf]
      %v3730 = vld [vmem:[%s329 + $0x18] sm:$0xf]
      %v3731 = vld [vmem:[%s329 + $0x1c] sm:$0xf]
      %v3732 = vld [vmem:[%s329 + $0x20] sm:$0xf]
      %v3733 = vld [vmem:[%s329 + $0x24] sm:$0xf]
      %v3734 = vld [vmem:[%s329 + $0x28] sm:$0xf]
      %v3735 = vld [vmem:[%s329 + $0x2c] sm:$0xf]
      %v3736 = vld [vmem:[%s329 + $0x30] sm:$0xf]
      %v3737 = vld [vmem:[%s329 + $0x34] sm:$0xf]
      %v3738 = vld [vmem:[%s329 + $0x38] sm:$0xf]
      %v3739 = vld [vmem:[%s329 + $0x3c] sm:$0xf]
      %v3740 = vld [vmem:[%s329 + $0x40] sm:$0xf]
      %v3741 = vld [vmem:[%s329 + $0x44] sm:$0xf]
      %v3742 = vld [vmem:[%s329 + $0x48] sm:$0xf]
      %v3743 = vld [vmem:[%s329 + $0x4c] sm:$0xf]
      %v3744 = vld [vmem:[%s329 + $0x50] sm:$0xf]
      %v3745 = vld [vmem:[%s329 + $0x54] sm:$0xf]
      %v3746 = vld [vmem:[%s329 + $0x58] sm:$0xf]
      %v3747 = vld [vmem:[%s329 + $0x5c] sm:$0xf]
      %v3748 = vld [vmem:[%s329 + $0x60] sm:$0xf]
      %v3749 = vld [vmem:[%s329 + $0x64] sm:$0xf]
      %v3750 = vld [vmem:[%s329 + $0x68] sm:$0xf]
      %v3751 = vld [vmem:[%s329 + $0x6c] sm:$0xf]
      %v3752 = vld [vmem:[%s329 + $0x70] sm:$0xf]
      %v3753 = vld [vmem:[%s329 + $0x74] sm:$0xf]
      %v3754 = vld [vmem:[%s329 + $0x78] sm:$0xf]
      %v3755 = vld [vmem:[%s329 + $0x7c] sm:$0xf]
      %v3756 = vld [vmem:[%s329 + $0x80] sm:$0xf]
      %v3757 = vld [vmem:[%s329 + $0x84] sm:$0xf]
      %v3758 = vld [vmem:[%s329 + $0x88] sm:$0xf]
      %v3759 = vld [vmem:[%s329 + $0x8c] sm:$0xf]
      %v3760 = vld [vmem:[%s329 + $0x90] sm:$0xf]
      %v3761 = vld [vmem:[%s329 + $0x94] sm:$0xf]
      %v3762 = vld [vmem:[%s329 + $0x98] sm:$0xf]
      %v3763 = vld [vmem:[%s329 + $0x9c] sm:$0xf]
      %v3764 = vld [vmem:[%s329 + $0xa0] sm:$0x7]
      %v3765 = vld [vmem:[#allocation2] sm:$0xff]
      %v3766 = vld [vmem:[#allocation2 + $0x8] sm:$0xff]
      %v3767 = vld [vmem:[#allocation2 + $0x10] sm:$0xff]
      %v3768 = vld [vmem:[#allocation2 + $0x18] sm:$0xff]
      %v3769 = vld [vmem:[#allocation2 + $0x20] sm:$0xff]
      %v3770 = vld [vmem:[#allocation2 + $0x28] sm:$0xff]
      %v3771 = vld [vmem:[#allocation2 + $0x30] sm:$0xff]
      %v3772 = vld [vmem:[#allocation2 + $0x38] sm:$0xff]
      %v3773 = vld [vmem:[#allocation2 + $0x40] sm:$0xff]
      %v3774 = vld [vmem:[#allocation2 + $0x48] sm:$0xff]
      %v3775 = vld [vmem:[#allocation2 + $0x50] sm:$0xff]
      %v3776 = vld [vmem:[#allocation2 + $0x58] sm:$0xff]
      %v3777 = vld [vmem:[#allocation2 + $0x60] sm:$0xff]
      %v3778 = vld [vmem:[#allocation2 + $0x68] sm:$0xff]
      %v3779 = vld [vmem:[#allocation2 + $0x70] sm:$0xff]
      %v3780 = vld [vmem:[#allocation2 + $0x78] sm:$0xff]
      %v3781 = vld [vmem:[#allocation2 + $0x80] sm:$0xff]
      %v3782 = vld [vmem:[#allocation2 + $0x88] sm:$0xff]
      %v3783 = vld [vmem:[#allocation2 + $0x90] sm:$0xff]
      %v3784 = vld [vmem:[#allocation2 + $0x98] sm:$0xff]
      %v3785 = vld [vmem:[#allocation2 + $0xa0] sm:$0xff]
      %v3786 = vld [vmem:[#allocation2 + $0xa8] sm:$0xff]
      %v3787 = vld [vmem:[#allocation2 + $0xb0] sm:$0xff]
      %v3788 = vld [vmem:[#allocation2 + $0xb8] sm:$0xff]
      %v3789 = vld [vmem:[#allocation2 + $0xc0] sm:$0xff]
      %v3790 = vld [vmem:[#allocation2 + $0xc8] sm:$0xff]
      %v3791 = vld [vmem:[#allocation2 + $0xd0] sm:$0xff]
      %v3792 = vld [vmem:[#allocation2 + $0xd8] sm:$0xff]
      %v3793 = vld [vmem:[#allocation2 + $0xe0] sm:$0xff]
      %v3794 = vld [vmem:[#allocation2 + $0xe8] sm:$0xff]
      %v3795 = vld [vmem:[#allocation2 + $0xf0] sm:$0xff]
      %v3796 = vld [vmem:[#allocation2 + $0xf8] sm:$0xff]
      %v3797 = vld [vmem:[#allocation2 + $0x100] sm:$0xff]
      %v3798 = vld [vmem:[#allocation2 + $0x108] sm:$0xff]
      %v3799 = vld [vmem:[#allocation2 + $0x110] sm:$0xff]
      %v3800 = vld [vmem:[#allocation2 + $0x118] sm:$0xff]
      %s3801 = scalar_lea.vmem %s335, 112
      %v3802 = vld [vmem:[%s3801] sm:$0xf]
      %v3803 = vld [vmem:[%s3801 + $0x4] sm:$0xf]
      %v3804 = vld [vmem:[%s3801 + $0x8] sm:$0xf]
      %v3805 = vld [vmem:[%s3801 + $0xc] sm:$0xf]
      %v3843 = vunpack.c.l.b16 %v3728
      %v3844 = vunpack.c.l.b16 %v3729
      %v3845 = vunpack.c.l.b16 %v3730
      %v3846 = vunpack.c.l.b16 %v3731
      %v3847 = vunpack.c.l.b16 %v3732
      %v3848 = vunpack.c.l.b16 %v3733
      %v3849 = vunpack.c.l.b16 %v3734
      %v3850 = vunpack.c.l.b16 %v3735
      %v3851 = vunpack.c.l.b16 %v3736
      %v3852 = vunpack.c.l.b16 %v3737
      %v3853 = vunpack.c.l.b16 %v3738
      %v3854 = vunpack.c.l.b16 %v3739
      %v3855 = vunpack.c.l.b16 %v3740
      %v3856 = vunpack.c.l.b16 %v3741
      %v3857 = vunpack.c.l.b16 %v3742
      %v3858 = vunpack.c.l.b16 %v3743
      %v3859 = vunpack.c.l.b16 %v3744
      %v3860 = vunpack.c.l.b16 %v3745
      %v3861 = vunpack.c.l.b16 %v3746
      %v3862 = vunpack.c.l.b16 %v3747
      %v3863 = vunpack.c.l.b16 %v3748
      %v3864 = vunpack.c.l.b16 %v3749
      %v3865 = vunpack.c.l.b16 %v3750
      %v3866 = vunpack.c.l.b16 %v3751
      %v3867 = vunpack.c.l.b16 %v3752
      %v3868 = vunpack.c.l.b16 %v3753
      %v3869 = vunpack.c.l.b16 %v3754
      %v3870 = vunpack.c.l.b16 %v3755
      %v3871 = vunpack.c.l.b16 %v3756
      %v3872 = vunpack.c.l.b16 %v3757
      %v3873 = vunpack.c.l.b16 %v3758
      %v3874 = vunpack.c.l.b16 %v3759
      %v3875 = vunpack.c.l.b16 %v3760
      %v3876 = vunpack.c.l.b16 %v3761
      %v3877 = vunpack.c.l.b16 %v3762
      %v3878 = vunpack.c.l.b16 %v3763
      %v3879 = vunpack.c.l.b16 %v3764
      %v3880 = vpack.c.b16 %v3844, %v3843
      %v3881 = vpack.c.b16 %v3846, %v3845
      %v3882 = vpack.c.b16 %v3848, %v3847
      %v3883 = vpack.c.b16 %v3850, %v3849
      %v3884 = vpack.c.b16 %v3852, %v3851
      %v3885 = vpack.c.b16 %v3854, %v3853
      %v3886 = vpack.c.b16 %v3856, %v3855
      %v3887 = vpack.c.b16 %v3858, %v3857
      %v3888 = vpack.c.b16 %v3860, %v3859
      %v3889 = vpack.c.b16 %v3862, %v3861
      %v3890 = vpack.c.b16 %v3864, %v3863
      %v3891 = vpack.c.b16 %v3866, %v3865
      %v3892 = vpack.c.b16 %v3868, %v3867
      %v3893 = vpack.c.b16 %v3870, %v3869
      %v3894 = vpack.c.b16 %v3872, %v3871
      %v3895 = vpack.c.b16 %v3874, %v3873
      %v3896 = vpack.c.b16 %v3876, %v3875
      %v3897 = vpack.c.b16 %v3878, %v3877
      %v3898 = vpack.c.b16 %v3879, %v3879
      %vm3899 = vsmask.f32 5376
      %v3901 = vshrl.u32 %v3880, 16
      %v3903 = vrot.slane %v3901, 2
      %v3904 = vshll.u32 %v3880, 16
      %v3906 = vrot.slane %v3904, 3
      %v3907 = vor.u32 %v3903, %v3906
      %v3909 = vshrl.u32 %v3881, 16
      %v3911 = vrot.slane %v3909, 2
      %v3912 = vshll.u32 %v3881, 16
      %v3914 = vrot.slane %v3912, 3
      %v3915 = vor.u32 %v3911, %v3914
      %v3916 = vsel %vm3899, %v3907, %v3915
      %v3918 = vshrl.u32 %v3882, 16
      %v3920 = vrot.slane %v3918, 2
      %v3921 = vshll.u32 %v3882, 16
      %v3923 = vrot.slane %v3921, 3
      %v3924 = vor.u32 %v3920, %v3923
      %v3925 = vsel %vm3899, %v3915, %v3924
      %v3927 = vshrl.u32 %v3883, 16
      %v3929 = vrot.slane %v3927, 2
      %v3930 = vshll.u32 %v3883, 16
      %v3932 = vrot.slane %v3930, 3
      %v3933 = vor.u32 %v3929, %v3932
      %v3934 = vsel %vm3899, %v3924, %v3933
      %v3936 = vshrl.u32 %v3884, 16
      %v3938 = vrot.slane %v3936, 2
      %v3939 = vshll.u32 %v3884, 16
      %v3941 = vrot.slane %v3939, 3
      %v3942 = vor.u32 %v3938, %v3941
      %v3943 = vsel %vm3899, %v3933, %v3942
      %v3945 = vshrl.u32 %v3885, 16
      %v3947 = vrot.slane %v3945, 2
      %v3948 = vshll.u32 %v3885, 16
      %v3950 = vrot.slane %v3948, 3
      %v3951 = vor.u32 %v3947, %v3950
      %v3952 = vsel %vm3899, %v3942, %v3951
      %v3954 = vshrl.u32 %v3886, 16
      %v3956 = vrot.slane %v3954, 2
      %v3957 = vshll.u32 %v3886, 16
      %v3959 = vrot.slane %v3957, 3
      %v3960 = vor.u32 %v3956, %v3959
      %v3961 = vsel %vm3899, %v3951, %v3960
      %v3963 = vshrl.u32 %v3887, 16
      %v3965 = vrot.slane %v3963, 2
      %v3966 = vshll.u32 %v3887, 16
      %v3968 = vrot.slane %v3966, 3
      %v3969 = vor.u32 %v3965, %v3968
      %v3970 = vsel %vm3899, %v3960, %v3969
      %v3972 = vshrl.u32 %v3888, 16
      %v3974 = vrot.slane %v3972, 2
      %v3975 = vshll.u32 %v3888, 16
      %v3977 = vrot.slane %v3975, 3
      %v3978 = vor.u32 %v3974, %v3977
      %v3979 = vsel %vm3899, %v3969, %v3978
      %v3981 = vshrl.u32 %v3889, 16
      %v3983 = vrot.slane %v3981, 2
      %v3984 = vshll.u32 %v3889, 16
      %v3986 = vrot.slane %v3984, 3
      %v3987 = vor.u32 %v3983, %v3986
      %v3988 = vsel %vm3899, %v3978, %v3987
      %v3990 = vshrl.u32 %v3890, 16
      %v3992 = vrot.slane %v3990, 2
      %v3993 = vshll.u32 %v3890, 16
      %v3995 = vrot.slane %v3993, 3
      %v3996 = vor.u32 %v3992, %v3995
      %v3997 = vsel %vm3899, %v3987, %v3996
      %v3999 = vshrl.u32 %v3891, 16
      %v4001 = vrot.slane %v3999, 2
      %v4002 = vshll.u32 %v3891, 16
      %v4004 = vrot.slane %v4002, 3
      %v4005 = vor.u32 %v4001, %v4004
      %v4006 = vsel %vm3899, %v3996, %v4005
      %v4008 = vshrl.u32 %v3892, 16
      %v4010 = vrot.slane %v4008, 2
      %v4011 = vshll.u32 %v3892, 16
      %v4013 = vrot.slane %v4011, 3
      %v4014 = vor.u32 %v4010, %v4013
      %v4015 = vsel %vm3899, %v4005, %v4014
      %v4017 = vshrl.u32 %v3893, 16
      %v4019 = vrot.slane %v4017, 2
      %v4020 = vshll.u32 %v3893, 16
      %v4022 = vrot.slane %v4020, 3
      %v4023 = vor.u32 %v4019, %v4022
      %v4024 = vsel %vm3899, %v4014, %v4023
      %v4026 = vshrl.u32 %v3894, 16
      %v4028 = vrot.slane %v4026, 2
      %v4029 = vshll.u32 %v3894, 16
      %v4031 = vrot.slane %v4029, 3
      %v4032 = vor.u32 %v4028, %v4031
      %v4033 = vsel %vm3899, %v4023, %v4032
      %v4035 = vshrl.u32 %v3895, 16
      %v4037 = vrot.slane %v4035, 2
      %v4038 = vshll.u32 %v3895, 16
      %v4040 = vrot.slane %v4038, 3
      %v4041 = vor.u32 %v4037, %v4040
      %v4042 = vsel %vm3899, %v4032, %v4041
      %v4044 = vshrl.u32 %v3896, 16
      %v4046 = vrot.slane %v4044, 2
      %v4047 = vshll.u32 %v3896, 16
      %v4049 = vrot.slane %v4047, 3
      %v4050 = vor.u32 %v4046, %v4049
      %v4051 = vsel %vm3899, %v4041, %v4050
      %v4053 = vshrl.u32 %v3897, 16
      %v4055 = vrot.slane %v4053, 2
      %v4056 = vshll.u32 %v3897, 16
      %v4058 = vrot.slane %v4056, 3
      %v4059 = vor.u32 %v4055, %v4058
      %v4060 = vsel %vm3899, %v4050, %v4059
      %v4062 = vshrl.u32 %v3898, 16
      %v4064 = vrot.slane %v4062, 2
      %v4065 = vshll.u32 %v3898, 16
      %v4067 = vrot.slane %v4065, 3
      %v4068 = vor.u32 %v4064, %v4067
      %v4069 = vsel %vm3899, %v4059, %v4068
      %v4074 = vunpack.c.l.b16 %v3802
      %v4075 = vunpack.c.l.b16 %v3803
      %v4076 = vunpack.c.l.b16 %v3804
      %v4077 = vunpack.c.l.b16 %v3805
      %v4078 = vpack.c.b16 %v4075, %v4074
      %v4079 = vpack.c.b16 %v4077, %v4076
      %v4083 = vsel %vm583, %v3916, 0
      %v4086 = vsel %vm583, %v3925, 0
      %v4089 = vsel %vm583, %v3934, 0
      %v4092 = vsel %vm583, %v3943, 0
      %v4095 = vsel %vm583, %v3952, 0
      %v4098 = vsel %vm583, %v3961, 0
      %v4101 = vsel %vm583, %v3970, 0
      %v4104 = vsel %vm583, %v3979, 0
      %v4107 = vsel %vm583, %v3988, 0
      %v4110 = vsel %vm583, %v3997, 0
      %v4113 = vsel %vm583, %v4006, 0
      %v4116 = vsel %vm583, %v4015, 0
      %v4119 = vsel %vm583, %v4024, 0
      %v4122 = vsel %vm583, %v4033, 0
      %v4125 = vsel %vm583, %v4042, 0
      %v4128 = vsel %vm583, %v4051, 0
      %v4131 = vsel %vm583, %v4060, 0
      %v4134 = vsel %vm583, %v4069, 0
      %4136 = vmatpush.bf16.msra.mxu0 0
      %4137 = vmatpush.bf16.msra.mxu0 0
      %4138 = vmatpush.bf16.msra.mxu0 0
      %4139 = vmatpush.bf16.msra.mxu0 0
      %4140 = vmatpush.bf16.msra.mxu0 0
      %4141 = vmatpush.bf16.msra.mxu0 0
      %4142 = vmatpush.bf16.msra.mxu0 %v4079
      %4143 = vmatpush.bf16.msra.mxu0 %v4078
      %4144 = vmatmul.bf16.gmra.mxu0 %v4083
      %v4145 = vpop.f32.mrf.mxu0
      %v4146 = vadd.f32 0.0, %v4145
      %v4147 = vpop.f32.mrf.mxu0
      %v4148 = vadd.f32 0.0, %v4147
      %4149 = vmatmul.bf16.gmra.mxu0 %v4086
      %v4150 = vpop.f32.mrf.mxu0
      %v4151 = vadd.f32 0.0, %v4150
      %v4152 = vpop.f32.mrf.mxu0
      %v4153 = vadd.f32 0.0, %v4152
      %4154 = vmatmul.bf16.gmra.mxu0 %v4089
      %v4155 = vpop.f32.mrf.mxu0
      %v4156 = vadd.f32 0.0, %v4155
      %v4157 = vpop.f32.mrf.mxu0
      %v4158 = vadd.f32 0.0, %v4157
      %4159 = vmatmul.bf16.gmra.mxu0 %v4092
      %v4160 = vpop.f32.mrf.mxu0
      %v4161 = vadd.f32 0.0, %v4160
      %v4162 = vpop.f32.mrf.mxu0
      %v4163 = vadd.f32 0.0, %v4162
      %4164 = vmatmul.bf16.gmra.mxu0 %v4095
      %v4165 = vpop.f32.mrf.mxu0
      %v4166 = vadd.f32 0.0, %v4165
      %v4167 = vpop.f32.mrf.mxu0
      %v4168 = vadd.f32 0.0, %v4167
      %4169 = vmatmul.bf16.gmra.mxu0 %v4098
      %v4170 = vpop.f32.mrf.mxu0
      %v4171 = vadd.f32 0.0, %v4170
      %v4172 = vpop.f32.mrf.mxu0
      %v4173 = vadd.f32 0.0, %v4172
      %4174 = vmatmul.bf16.gmra.mxu0 %v4101
      %v4175 = vpop.f32.mrf.mxu0
      %v4176 = vadd.f32 0.0, %v4175
      %v4177 = vpop.f32.mrf.mxu0
      %v4178 = vadd.f32 0.0, %v4177
      %4179 = vmatmul.bf16.gmra.mxu0 %v4104
      %v4180 = vpop.f32.mrf.mxu0
      %v4181 = vadd.f32 0.0, %v4180
      %v4182 = vpop.f32.mrf.mxu0
      %v4183 = vadd.f32 0.0, %v4182
      %4184 = vmatmul.bf16.gmra.mxu0 %v4107
      %v4185 = vpop.f32.mrf.mxu0
      %v4186 = vadd.f32 0.0, %v4185
      %v4187 = vpop.f32.mrf.mxu0
      %v4188 = vadd.f32 0.0, %v4187
      %4189 = vmatmul.bf16.gmra.mxu0 %v4110
      %v4190 = vpop.f32.mrf.mxu0
      %v4191 = vadd.f32 0.0, %v4190
      %v4192 = vpop.f32.mrf.mxu0
      %v4193 = vadd.f32 0.0, %v4192
      %4194 = vmatmul.bf16.gmra.mxu0 %v4113
      %v4195 = vpop.f32.mrf.mxu0
      %v4196 = vadd.f32 0.0, %v4195
      %v4197 = vpop.f32.mrf.mxu0
      %v4198 = vadd.f32 0.0, %v4197
      %4199 = vmatmul.bf16.gmra.mxu0 %v4116
      %v4200 = vpop.f32.mrf.mxu0
      %v4201 = vadd.f32 0.0, %v4200
      %v4202 = vpop.f32.mrf.mxu0
      %v4203 = vadd.f32 0.0, %v4202
      %4204 = vmatmul.bf16.gmra.mxu0 %v4119
      %v4205 = vpop.f32.mrf.mxu0
      %v4206 = vadd.f32 0.0, %v4205
      %v4207 = vpop.f32.mrf.mxu0
      %v4208 = vadd.f32 0.0, %v4207
      %4209 = vmatmul.bf16.gmra.mxu0 %v4122
      %v4210 = vpop.f32.mrf.mxu0
      %v4211 = vadd.f32 0.0, %v4210
      %v4212 = vpop.f32.mrf.mxu0
      %v4213 = vadd.f32 0.0, %v4212
      %4214 = vmatmul.bf16.gmra.mxu0 %v4125
      %v4215 = vpop.f32.mrf.mxu0
      %v4216 = vadd.f32 0.0, %v4215
      %v4217 = vpop.f32.mrf.mxu0
      %v4218 = vadd.f32 0.0, %v4217
      %4219 = vmatmul.bf16.gmra.mxu0 %v4128
      %v4220 = vpop.f32.mrf.mxu0
      %v4221 = vadd.f32 0.0, %v4220
      %v4222 = vpop.f32.mrf.mxu0
      %v4223 = vadd.f32 0.0, %v4222
      %4224 = vmatmul.bf16.gmra.mxu0 %v4131
      %v4225 = vpop.f32.mrf.mxu0
      %v4226 = vadd.f32 0.0, %v4225
      %v4227 = vpop.f32.mrf.mxu0
      %v4228 = vadd.f32 0.0, %v4227
      %4229 = vmatmul.bf16.gmra.mxu0 %v4134
      %v4230 = vpop.f32.mrf.mxu0
      %v4231 = vadd.f32 0.0, %v4230
      %v4232 = vpop.f32.mrf.mxu0
      %v4233 = vadd.f32 0.0, %v4232
      %4234 = vdwg.mxu0
      %v4235 = vadd.f32 %v3765, %v4146
      %v4236 = vadd.f32 %v3766, %v4148
      %v4237 = vadd.f32 %v3767, %v4151
      %v4238 = vadd.f32 %v3768, %v4153
      %v4239 = vadd.f32 %v3769, %v4156
      %v4240 = vadd.f32 %v3770, %v4158
      %v4241 = vadd.f32 %v3771, %v4161
      %v4242 = vadd.f32 %v3772, %v4163
      %v4243 = vadd.f32 %v3773, %v4166
      %v4244 = vadd.f32 %v3774, %v4168
      %v4245 = vadd.f32 %v3775, %v4171
      %v4246 = vadd.f32 %v3776, %v4173
      %v4247 = vadd.f32 %v3777, %v4176
      %v4248 = vadd.f32 %v3778, %v4178
      %v4249 = vadd.f32 %v3779, %v4181
      %v4250 = vadd.f32 %v3780, %v4183
      %v4251 = vadd.f32 %v3781, %v4186
      %v4252 = vadd.f32 %v3782, %v4188
      %v4253 = vadd.f32 %v3783, %v4191
      %v4254 = vadd.f32 %v3784, %v4193
      %v4255 = vadd.f32 %v3785, %v4196
      %v4256 = vadd.f32 %v3786, %v4198
      %v4257 = vadd.f32 %v3787, %v4201
      %v4258 = vadd.f32 %v3788, %v4203
      %v4259 = vadd.f32 %v3789, %v4206
      %v4260 = vadd.f32 %v3790, %v4208
      %v4261 = vadd.f32 %v3791, %v4211
      %v4262 = vadd.f32 %v3792, %v4213
      %v4263 = vadd.f32 %v3793, %v4216
      %v4264 = vadd.f32 %v3794, %v4218
      %v4265 = vadd.f32 %v3795, %v4221
      %v4266 = vadd.f32 %v3796, %v4223
      %v4267 = vadd.f32 %v3797, %v4226
      %v4268 = vadd.f32 %v3798, %v4228
      %v4269 = vadd.f32 %v3799, %v4231
      %v4270 = vadd.f32 %v3800, %v4233
      %4271 = vst.msk [vmem:[#allocation2] sm:$0xff] %vm773, %v4235
      %4272 = vst.msk [vmem:[#allocation2 + $0x8] sm:$0xff] %vm773, %v4236
      %4273 = vst.msk [vmem:[#allocation2 + $0x10] sm:$0xff] %vm773, %v4237
      %4274 = vst.msk [vmem:[#allocation2 + $0x18] sm:$0xff] %vm773, %v4238
      %4275 = vst.msk [vmem:[#allocation2 + $0x20] sm:$0xff] %vm773, %v4239
      %4276 = vst.msk [vmem:[#allocation2 + $0x28] sm:$0xff] %vm773, %v4240
      %4277 = vst.msk [vmem:[#allocation2 + $0x30] sm:$0xff] %vm773, %v4241
      %4278 = vst.msk [vmem:[#allocation2 + $0x38] sm:$0xff] %vm773, %v4242
      %4279 = vst.msk [vmem:[#allocation2 + $0x40] sm:$0xff] %vm773, %v4243
      %4280 = vst.msk [vmem:[#allocation2 + $0x48] sm:$0xff] %vm773, %v4244
      %4281 = vst.msk [vmem:[#allocation2 + $0x50] sm:$0xff] %vm773, %v4245
      %4282 = vst.msk [vmem:[#allocation2 + $0x58] sm:$0xff] %vm773, %v4246
      %4283 = vst.msk [vmem:[#allocation2 + $0x60] sm:$0xff] %vm773, %v4247
      %4284 = vst.msk [vmem:[#allocation2 + $0x68] sm:$0xff] %vm773, %v4248
      %4285 = vst.msk [vmem:[#allocation2 + $0x70] sm:$0xff] %vm773, %v4249
      %4286 = vst.msk [vmem:[#allocation2 + $0x78] sm:$0xff] %vm773, %v4250
      %4287 = vst.msk [vmem:[#allocation2 + $0x80] sm:$0xff] %vm773, %v4251
      %4288 = vst.msk [vmem:[#allocation2 + $0x88] sm:$0xff] %vm773, %v4252
      %4289 = vst.msk [vmem:[#allocation2 + $0x90] sm:$0xff] %vm773, %v4253
      %4290 = vst.msk [vmem:[#allocation2 + $0x98] sm:$0xff] %vm773, %v4254
      %4291 = vst.msk [vmem:[#allocation2 + $0xa0] sm:$0xff] %vm773, %v4255
      %4292 = vst.msk [vmem:[#allocation2 + $0xa8] sm:$0xff] %vm773, %v4256
      %4293 = vst.msk [vmem:[#allocation2 + $0xb0] sm:$0xff] %vm773, %v4257
      %4294 = vst.msk [vmem:[#allocation2 + $0xb8] sm:$0xff] %vm773, %v4258
      %4295 = vst.msk [vmem:[#allocation2 + $0xc0] sm:$0xff] %vm773, %v4259
      %4296 = vst.msk [vmem:[#allocation2 + $0xc8] sm:$0xff] %vm773, %v4260
      %4297 = vst.msk [vmem:[#allocation2 + $0xd0] sm:$0xff] %vm773, %v4261
      %4298 = vst.msk [vmem:[#allocation2 + $0xd8] sm:$0xff] %vm773, %v4262
      %4299 = vst.msk [vmem:[#allocation2 + $0xe0] sm:$0xff] %vm773, %v4263
      %4300 = vst.msk [vmem:[#allocation2 + $0xe8] sm:$0xff] %vm773, %v4264
      %4301 = vst.msk [vmem:[#allocation2 + $0xf0] sm:$0xff] %vm773, %v4265
      %4302 = vst.msk [vmem:[#allocation2 + $0xf8] sm:$0xff] %vm773, %v4266
      %4303 = vst.msk [vmem:[#allocation2 + $0x100] sm:$0xff] %vm773, %v4267
      %4304 = vst.msk [vmem:[#allocation2 + $0x108] sm:$0xff] %vm773, %v4268
      %4305 = vst.msk [vmem:[#allocation2 + $0x110] sm:$0xff] %vm773, %v4269
      %4306 = vst.msk [vmem:[#allocation2 + $0x118] sm:$0xff] %vm773, %v4270
      %v4307 = vld [vmem:[%s329 + $0x10] sm:$0x8]
      %v4308 = vld [vmem:[%s329 + $0x14] sm:$0xf]
      %v4309 = vld [vmem:[%s329 + $0x18] sm:$0xf]
      %v4310 = vld [vmem:[%s329 + $0x1c] sm:$0xf]
      %v4311 = vld [vmem:[%s329 + $0x20] sm:$0xf]
      %v4312 = vld [vmem:[%s329 + $0x24] sm:$0xf]
      %v4313 = vld [vmem:[%s329 + $0x28] sm:$0xf]
      %v4314 = vld [vmem:[%s329 + $0x2c] sm:$0xf]
      %v4315 = vld [vmem:[%s329 + $0x30] sm:$0xf]
      %v4316 = vld [vmem:[%s329 + $0x34] sm:$0xf]
      %v4317 = vld [vmem:[%s329 + $0x38] sm:$0xf]
      %v4318 = vld [vmem:[%s329 + $0x3c] sm:$0xf]
      %v4319 = vld [vmem:[%s329 + $0x40] sm:$0xf]
      %v4320 = vld [vmem:[%s329 + $0x44] sm:$0xf]
      %v4321 = vld [vmem:[%s329 + $0x48] sm:$0xf]
      %v4322 = vld [vmem:[%s329 + $0x4c] sm:$0xf]
      %v4323 = vld [vmem:[%s329 + $0x50] sm:$0xf]
      %v4324 = vld [vmem:[%s329 + $0x54] sm:$0xf]
      %v4325 = vld [vmem:[%s329 + $0x58] sm:$0xf]
      %v4326 = vld [vmem:[%s329 + $0x5c] sm:$0xf]
      %v4327 = vld [vmem:[%s329 + $0x60] sm:$0xf]
      %v4328 = vld [vmem:[%s329 + $0x64] sm:$0xf]
      %v4329 = vld [vmem:[%s329 + $0x68] sm:$0xf]
      %v4330 = vld [vmem:[%s329 + $0x6c] sm:$0xf]
      %v4331 = vld [vmem:[%s329 + $0x70] sm:$0xf]
      %v4332 = vld [vmem:[%s329 + $0x74] sm:$0xf]
      %v4333 = vld [vmem:[%s329 + $0x78] sm:$0xf]
      %v4334 = vld [vmem:[%s329 + $0x7c] sm:$0xf]
      %v4335 = vld [vmem:[%s329 + $0x80] sm:$0xf]
      %v4336 = vld [vmem:[%s329 + $0x84] sm:$0xf]
      %v4337 = vld [vmem:[%s329 + $0x88] sm:$0xf]
      %v4338 = vld [vmem:[%s329 + $0x8c] sm:$0xf]
      %v4339 = vld [vmem:[%s329 + $0x90] sm:$0xf]
      %v4340 = vld [vmem:[%s329 + $0x94] sm:$0xf]
      %v4341 = vld [vmem:[%s329 + $0x98] sm:$0xf]
      %v4342 = vld [vmem:[%s329 + $0x9c] sm:$0xf]
      %v4343 = vld [vmem:[%s329 + $0xa0] sm:$0x7]
      %v4344 = vld [vmem:[#allocation2] sm:$0xff]
      %v4345 = vld [vmem:[#allocation2 + $0x8] sm:$0xff]
      %v4346 = vld [vmem:[#allocation2 + $0x10] sm:$0xff]
      %v4347 = vld [vmem:[#allocation2 + $0x18] sm:$0xff]
      %v4348 = vld [vmem:[#allocation2 + $0x20] sm:$0xff]
      %v4349 = vld [vmem:[#allocation2 + $0x28] sm:$0xff]
      %v4350 = vld [vmem:[#allocation2 + $0x30] sm:$0xff]
      %v4351 = vld [vmem:[#allocation2 + $0x38] sm:$0xff]
      %v4352 = vld [vmem:[#allocation2 + $0x40] sm:$0xff]
      %v4353 = vld [vmem:[#allocation2 + $0x48] sm:$0xff]
      %v4354 = vld [vmem:[#allocation2 + $0x50] sm:$0xff]
      %v4355 = vld [vmem:[#allocation2 + $0x58] sm:$0xff]
      %v4356 = vld [vmem:[#allocation2 + $0x60] sm:$0xff]
      %v4357 = vld [vmem:[#allocation2 + $0x68] sm:$0xff]
      %v4358 = vld [vmem:[#allocation2 + $0x70] sm:$0xff]
      %v4359 = vld [vmem:[#allocation2 + $0x78] sm:$0xff]
      %v4360 = vld [vmem:[#allocation2 + $0x80] sm:$0xff]
      %v4361 = vld [vmem:[#allocation2 + $0x88] sm:$0xff]
      %v4362 = vld [vmem:[#allocation2 + $0x90] sm:$0xff]
      %v4363 = vld [vmem:[#allocation2 + $0x98] sm:$0xff]
      %v4364 = vld [vmem:[#allocation2 + $0xa0] sm:$0xff]
      %v4365 = vld [vmem:[#allocation2 + $0xa8] sm:$0xff]
      %v4366 = vld [vmem:[#allocation2 + $0xb0] sm:$0xff]
      %v4367 = vld [vmem:[#allocation2 + $0xb8] sm:$0xff]
      %v4368 = vld [vmem:[#allocation2 + $0xc0] sm:$0xff]
      %v4369 = vld [vmem:[#allocation2 + $0xc8] sm:$0xff]
      %v4370 = vld [vmem:[#allocation2 + $0xd0] sm:$0xff]
      %v4371 = vld [vmem:[#allocation2 + $0xd8] sm:$0xff]
      %v4372 = vld [vmem:[#allocation2 + $0xe0] sm:$0xff]
      %v4373 = vld [vmem:[#allocation2 + $0xe8] sm:$0xff]
      %v4374 = vld [vmem:[#allocation2 + $0xf0] sm:$0xff]
      %v4375 = vld [vmem:[#allocation2 + $0xf8] sm:$0xff]
      %v4376 = vld [vmem:[#allocation2 + $0x100] sm:$0xff]
      %v4377 = vld [vmem:[#allocation2 + $0x108] sm:$0xff]
      %v4378 = vld [vmem:[#allocation2 + $0x110] sm:$0xff]
      %v4379 = vld [vmem:[#allocation2 + $0x118] sm:$0xff]
      %s4380 = scalar_lea.vmem %s335, 128
      %v4381 = vld [vmem:[%s4380] sm:$0xf]
      %v4382 = vld [vmem:[%s4380 + $0x4] sm:$0xf]
      %v4383 = vld [vmem:[%s4380 + $0x8] sm:$0xf]
      %v4384 = vld [vmem:[%s4380 + $0xc] sm:$0xf]
      %v4422 = vunpack.c.l.b16 %v4307
      %v4423 = vunpack.c.l.b16 %v4308
      %v4424 = vunpack.c.l.b16 %v4309
      %v4425 = vunpack.c.l.b16 %v4310
      %v4426 = vunpack.c.l.b16 %v4311
      %v4427 = vunpack.c.l.b16 %v4312
      %v4428 = vunpack.c.l.b16 %v4313
      %v4429 = vunpack.c.l.b16 %v4314
      %v4430 = vunpack.c.l.b16 %v4315
      %v4431 = vunpack.c.l.b16 %v4316
      %v4432 = vunpack.c.l.b16 %v4317
      %v4433 = vunpack.c.l.b16 %v4318
      %v4434 = vunpack.c.l.b16 %v4319
      %v4435 = vunpack.c.l.b16 %v4320
      %v4436 = vunpack.c.l.b16 %v4321
      %v4437 = vunpack.c.l.b16 %v4322
      %v4438 = vunpack.c.l.b16 %v4323
      %v4439 = vunpack.c.l.b16 %v4324
      %v4440 = vunpack.c.l.b16 %v4325
      %v4441 = vunpack.c.l.b16 %v4326
      %v4442 = vunpack.c.l.b16 %v4327
      %v4443 = vunpack.c.l.b16 %v4328
      %v4444 = vunpack.c.l.b16 %v4329
      %v4445 = vunpack.c.l.b16 %v4330
      %v4446 = vunpack.c.l.b16 %v4331
      %v4447 = vunpack.c.l.b16 %v4332
      %v4448 = vunpack.c.l.b16 %v4333
      %v4449 = vunpack.c.l.b16 %v4334
      %v4450 = vunpack.c.l.b16 %v4335
      %v4451 = vunpack.c.l.b16 %v4336
      %v4452 = vunpack.c.l.b16 %v4337
      %v4453 = vunpack.c.l.b16 %v4338
      %v4454 = vunpack.c.l.b16 %v4339
      %v4455 = vunpack.c.l.b16 %v4340
      %v4456 = vunpack.c.l.b16 %v4341
      %v4457 = vunpack.c.l.b16 %v4342
      %v4458 = vunpack.c.l.b16 %v4343
      %v4459 = vpack.c.b16 %v4423, %v4422
      %v4460 = vpack.c.b16 %v4425, %v4424
      %v4461 = vpack.c.b16 %v4427, %v4426
      %v4462 = vpack.c.b16 %v4429, %v4428
      %v4463 = vpack.c.b16 %v4431, %v4430
      %v4464 = vpack.c.b16 %v4433, %v4432
      %v4465 = vpack.c.b16 %v4435, %v4434
      %v4466 = vpack.c.b16 %v4437, %v4436
      %v4467 = vpack.c.b16 %v4439, %v4438
      %v4468 = vpack.c.b16 %v4441, %v4440
      %v4469 = vpack.c.b16 %v4443, %v4442
      %v4470 = vpack.c.b16 %v4445, %v4444
      %v4471 = vpack.c.b16 %v4447, %v4446
      %v4472 = vpack.c.b16 %v4449, %v4448
      %v4473 = vpack.c.b16 %v4451, %v4450
      %v4474 = vpack.c.b16 %v4453, %v4452
      %v4475 = vpack.c.b16 %v4455, %v4454
      %v4476 = vpack.c.b16 %v4457, %v4456
      %v4477 = vpack.c.b16 %v4458, %v4458
      %vm4478 = vcmask 1044480
      %v4479 = vrot.slane %v4459, 3
      %v4480 = vrot.slane %v4460, 3
      %v4481 = vsel %vm4478, %v4479, %v4480
      %v4482 = vrot.slane %v4461, 3
      %v4483 = vsel %vm4478, %v4480, %v4482
      %v4484 = vrot.slane %v4462, 3
      %v4485 = vsel %vm4478, %v4482, %v4484
      %v4486 = vrot.slane %v4463, 3
      %v4487 = vsel %vm4478, %v4484, %v4486
      %v4488 = vrot.slane %v4464, 3
      %v4489 = vsel %vm4478, %v4486, %v4488
      %v4490 = vrot.slane %v4465, 3
      %v4491 = vsel %vm4478, %v4488, %v4490
      %v4492 = vrot.slane %v4466, 3
      %v4493 = vsel %vm4478, %v4490, %v4492
      %v4494 = vrot.slane %v4467, 3
      %v4495 = vsel %vm4478, %v4492, %v4494
      %v4496 = vrot.slane %v4468, 3
      %v4497 = vsel %vm4478, %v4494, %v4496
      %v4498 = vrot.slane %v4469, 3
      %v4499 = vsel %vm4478, %v4496, %v4498
      %v4500 = vrot.slane %v4470, 3
      %v4501 = vsel %vm4478, %v4498, %v4500
      %v4502 = vrot.slane %v4471, 3
      %v4503 = vsel %vm4478, %v4500, %v4502
      %v4504 = vrot.slane %v4472, 3
      %v4505 = vsel %vm4478, %v4502, %v4504
      %v4506 = vrot.slane %v4473, 3
      %v4507 = vsel %vm4478, %v4504, %v4506
      %v4508 = vrot.slane %v4474, 3
      %v4509 = vsel %vm4478, %v4506, %v4508
      %v4510 = vrot.slane %v4475, 3
      %v4511 = vsel %vm4478, %v4508, %v4510
      %v4512 = vrot.slane %v4476, 3
      %v4513 = vsel %vm4478, %v4510, %v4512
      %v4514 = vrot.slane %v4477, 3
      %v4515 = vsel %vm4478, %v4512, %v4514
      %v4520 = vunpack.c.l.b16 %v4381
      %v4521 = vunpack.c.l.b16 %v4382
      %v4522 = vunpack.c.l.b16 %v4383
      %v4523 = vunpack.c.l.b16 %v4384
      %v4524 = vpack.c.b16 %v4521, %v4520
      %v4525 = vpack.c.b16 %v4523, %v4522
      %v4529 = vsel %vm583, %v4481, 0
      %v4532 = vsel %vm583, %v4483, 0
      %v4535 = vsel %vm583, %v4485, 0
      %v4538 = vsel %vm583, %v4487, 0
      %v4541 = vsel %vm583, %v4489, 0
      %v4544 = vsel %vm583, %v4491, 0
      %v4547 = vsel %vm583, %v4493, 0
      %v4550 = vsel %vm583, %v4495, 0
      %v4553 = vsel %vm583, %v4497, 0
      %v4556 = vsel %vm583, %v4499, 0
      %v4559 = vsel %vm583, %v4501, 0
      %v4562 = vsel %vm583, %v4503, 0
      %v4565 = vsel %vm583, %v4505, 0
      %v4568 = vsel %vm583, %v4507, 0
      %v4571 = vsel %vm583, %v4509, 0
      %v4574 = vsel %vm583, %v4511, 0
      %v4577 = vsel %vm583, %v4513, 0
      %v4580 = vsel %vm583, %v4515, 0
      %4582 = vmatpush.bf16.msra.mxu0 0
      %4583 = vmatpush.bf16.msra.mxu0 0
      %4584 = vmatpush.bf16.msra.mxu0 0
      %4585 = vmatpush.bf16.msra.mxu0 0
      %4586 = vmatpush.bf16.msra.mxu0 0
      %4587 = vmatpush.bf16.msra.mxu0 0
      %4588 = vmatpush.bf16.msra.mxu0 %v4525
      %4589 = vmatpush.bf16.msra.mxu0 %v4524
      %4590 = vmatmul.bf16.gmra.mxu0 %v4529
      %v4591 = vpop.f32.mrf.mxu0
      %v4592 = vadd.f32 0.0, %v4591
      %v4593 = vpop.f32.mrf.mxu0
      %v4594 = vadd.f32 0.0, %v4593
      %4595 = vmatmul.bf16.gmra.mxu0 %v4532
      %v4596 = vpop.f32.mrf.mxu0
      %v4597 = vadd.f32 0.0, %v4596
      %v4598 = vpop.f32.mrf.mxu0
      %v4599 = vadd.f32 0.0, %v4598
      %4600 = vmatmul.bf16.gmra.mxu0 %v4535
      %v4601 = vpop.f32.mrf.mxu0
      %v4602 = vadd.f32 0.0, %v4601
      %v4603 = vpop.f32.mrf.mxu0
      %v4604 = vadd.f32 0.0, %v4603
      %4605 = vmatmul.bf16.gmra.mxu0 %v4538
      %v4606 = vpop.f32.mrf.mxu0
      %v4607 = vadd.f32 0.0, %v4606
      %v4608 = vpop.f32.mrf.mxu0
      %v4609 = vadd.f32 0.0, %v4608
      %4610 = vmatmul.bf16.gmra.mxu0 %v4541
      %v4611 = vpop.f32.mrf.mxu0
      %v4612 = vadd.f32 0.0, %v4611
      %v4613 = vpop.f32.mrf.mxu0
      %v4614 = vadd.f32 0.0, %v4613
      %4615 = vmatmul.bf16.gmra.mxu0 %v4544
      %v4616 = vpop.f32.mrf.mxu0
      %v4617 = vadd.f32 0.0, %v4616
      %v4618 = vpop.f32.mrf.mxu0
      %v4619 = vadd.f32 0.0, %v4618
      %4620 = vmatmul.bf16.gmra.mxu0 %v4547
      %v4621 = vpop.f32.mrf.mxu0
      %v4622 = vadd.f32 0.0, %v4621
      %v4623 = vpop.f32.mrf.mxu0
      %v4624 = vadd.f32 0.0, %v4623
      %4625 = vmatmul.bf16.gmra.mxu0 %v4550
      %v4626 = vpop.f32.mrf.mxu0
      %v4627 = vadd.f32 0.0, %v4626
      %v4628 = vpop.f32.mrf.mxu0
      %v4629 = vadd.f32 0.0, %v4628
      %4630 = vmatmul.bf16.gmra.mxu0 %v4553
      %v4631 = vpop.f32.mrf.mxu0
      %v4632 = vadd.f32 0.0, %v4631
      %v4633 = vpop.f32.mrf.mxu0
      %v4634 = vadd.f32 0.0, %v4633
      %4635 = vmatmul.bf16.gmra.mxu0 %v4556
      %v4636 = vpop.f32.mrf.mxu0
      %v4637 = vadd.f32 0.0, %v4636
      %v4638 = vpop.f32.mrf.mxu0
      %v4639 = vadd.f32 0.0, %v4638
      %4640 = vmatmul.bf16.gmra.mxu0 %v4559
      %v4641 = vpop.f32.mrf.mxu0
      %v4642 = vadd.f32 0.0, %v4641
      %v4643 = vpop.f32.mrf.mxu0
      %v4644 = vadd.f32 0.0, %v4643
      %4645 = vmatmul.bf16.gmra.mxu0 %v4562
      %v4646 = vpop.f32.mrf.mxu0
      %v4647 = vadd.f32 0.0, %v4646
      %v4648 = vpop.f32.mrf.mxu0
      %v4649 = vadd.f32 0.0, %v4648
      %4650 = vmatmul.bf16.gmra.mxu0 %v4565
      %v4651 = vpop.f32.mrf.mxu0
      %v4652 = vadd.f32 0.0, %v4651
      %v4653 = vpop.f32.mrf.mxu0
      %v4654 = vadd.f32 0.0, %v4653
      %4655 = vmatmul.bf16.gmra.mxu0 %v4568
      %v4656 = vpop.f32.mrf.mxu0
      %v4657 = vadd.f32 0.0, %v4656
      %v4658 = vpop.f32.mrf.mxu0
      %v4659 = vadd.f32 0.0, %v4658
      %4660 = vmatmul.bf16.gmra.mxu0 %v4571
      %v4661 = vpop.f32.mrf.mxu0
      %v4662 = vadd.f32 0.0, %v4661
      %v4663 = vpop.f32.mrf.mxu0
      %v4664 = vadd.f32 0.0, %v4663
      %4665 = vmatmul.bf16.gmra.mxu0 %v4574
      %v4666 = vpop.f32.mrf.mxu0
      %v4667 = vadd.f32 0.0, %v4666
      %v4668 = vpop.f32.mrf.mxu0
      %v4669 = vadd.f32 0.0, %v4668
      %4670 = vmatmul.bf16.gmra.mxu0 %v4577
      %v4671 = vpop.f32.mrf.mxu0
      %v4672 = vadd.f32 0.0, %v4671
      %v4673 = vpop.f32.mrf.mxu0
      %v4674 = vadd.f32 0.0, %v4673
      %4675 = vmatmul.bf16.gmra.mxu0 %v4580
      %v4676 = vpop.f32.mrf.mxu0
      %v4677 = vadd.f32 0.0, %v4676
      %v4678 = vpop.f32.mrf.mxu0
      %v4679 = vadd.f32 0.0, %v4678
      %4680 = vdwg.mxu0
      %v4681 = vadd.f32 %v4344, %v4592
      %v4682 = vadd.f32 %v4345, %v4594
      %v4683 = vadd.f32 %v4346, %v4597
      %v4684 = vadd.f32 %v4347, %v4599
      %v4685 = vadd.f32 %v4348, %v4602
      %v4686 = vadd.f32 %v4349, %v4604
      %v4687 = vadd.f32 %v4350, %v4607
      %v4688 = vadd.f32 %v4351, %v4609
      %v4689 = vadd.f32 %v4352, %v4612
      %v4690 = vadd.f32 %v4353, %v4614
      %v4691 = vadd.f32 %v4354, %v4617
      %v4692 = vadd.f32 %v4355, %v4619
      %v4693 = vadd.f32 %v4356, %v4622
      %v4694 = vadd.f32 %v4357, %v4624
      %v4695 = vadd.f32 %v4358, %v4627
      %v4696 = vadd.f32 %v4359, %v4629
      %v4697 = vadd.f32 %v4360, %v4632
      %v4698 = vadd.f32 %v4361, %v4634
      %v4699 = vadd.f32 %v4362, %v4637
      %v4700 = vadd.f32 %v4363, %v4639
      %v4701 = vadd.f32 %v4364, %v4642
      %v4702 = vadd.f32 %v4365, %v4644
      %v4703 = vadd.f32 %v4366, %v4647
      %v4704 = vadd.f32 %v4367, %v4649
      %v4705 = vadd.f32 %v4368, %v4652
      %v4706 = vadd.f32 %v4369, %v4654
      %v4707 = vadd.f32 %v4370, %v4657
      %v4708 = vadd.f32 %v4371, %v4659
      %v4709 = vadd.f32 %v4372, %v4662
      %v4710 = vadd.f32 %v4373, %v4664
      %v4711 = vadd.f32 %v4374, %v4667
      %v4712 = vadd.f32 %v4375, %v4669
      %v4713 = vadd.f32 %v4376, %v4672
      %v4714 = vadd.f32 %v4377, %v4674
      %v4715 = vadd.f32 %v4378, %v4677
      %v4716 = vadd.f32 %v4379, %v4679
      %4717 = vst.msk [vmem:[#allocation2] sm:$0xff] %vm773, %v4681
      %4718 = vst.msk [vmem:[#allocation2 + $0x8] sm:$0xff] %vm773, %v4682
      %4719 = vst.msk [vmem:[#allocation2 + $0x10] sm:$0xff] %vm773, %v4683
      %4720 = vst.msk [vmem:[#allocation2 + $0x18] sm:$0xff] %vm773, %v4684
      %4721 = vst.msk [vmem:[#allocation2 + $0x20] sm:$0xff] %vm773, %v4685
      %4722 = vst.msk [vmem:[#allocation2 + $0x28] sm:$0xff] %vm773, %v4686
      %4723 = vst.msk [vmem:[#allocation2 + $0x30] sm:$0xff] %vm773, %v4687
      %4724 = vst.msk [vmem:[#allocation2 + $0x38] sm:$0xff] %vm773, %v4688
      %4725 = vst.msk [vmem:[#allocation2 + $0x40] sm:$0xff] %vm773, %v4689
      %4726 = vst.msk [vmem:[#allocation2 + $0x48] sm:$0xff] %vm773, %v4690
      %4727 = vst.msk [vmem:[#allocation2 + $0x50] sm:$0xff] %vm773, %v4691
      %4728 = vst.msk [vmem:[#allocation2 + $0x58] sm:$0xff] %vm773, %v4692
      %4729 = vst.msk [vmem:[#allocation2 + $0x60] sm:$0xff] %vm773, %v4693
      %4730 = vst.msk [vmem:[#allocation2 + $0x68] sm:$0xff] %vm773, %v4694
      %4731 = vst.msk [vmem:[#allocation2 + $0x70] sm:$0xff] %vm773, %v4695
      %4732 = vst.msk [vmem:[#allocation2 + $0x78] sm:$0xff] %vm773, %v4696
      %4733 = vst.msk [vmem:[#allocation2 + $0x80] sm:$0xff] %vm773, %v4697
      %4734 = vst.msk [vmem:[#allocation2 + $0x88] sm:$0xff] %vm773, %v4698
      %4735 = vst.msk [vmem:[#allocation2 + $0x90] sm:$0xff] %vm773, %v4699
      %4736 = vst.msk [vmem:[#allocation2 + $0x98] sm:$0xff] %vm773, %v4700
      %4737 = vst.msk [vmem:[#allocation2 + $0xa0] sm:$0xff] %vm773, %v4701
      %4738 = vst.msk [vmem:[#allocation2 + $0xa8] sm:$0xff] %vm773, %v4702
      %4739 = vst.msk [vmem:[#allocation2 + $0xb0] sm:$0xff] %vm773, %v4703
      %4740 = vst.msk [vmem:[#allocation2 + $0xb8] sm:$0xff] %vm773, %v4704
      %4741 = vst.msk [vmem:[#allocation2 + $0xc0] sm:$0xff] %vm773, %v4705
      %4742 = vst.msk [vmem:[#allocation2 + $0xc8] sm:$0xff] %vm773, %v4706
      %4743 = vst.msk [vmem:[#allocation2 + $0xd0] sm:$0xff] %vm773, %v4707
      %4744 = vst.msk [vmem:[#allocation2 + $0xd8] sm:$0xff] %vm773, %v4708
      %4745 = vst.msk [vmem:[#allocation2 + $0xe0] sm:$0xff] %vm773, %v4709
      %4746 = vst.msk [vmem:[#allocation2 + $0xe8] sm:$0xff] %vm773, %v4710
      %4747 = vst.msk [vmem:[#allocation2 + $0xf0] sm:$0xff] %vm773, %v4711
      %4748 = vst.msk [vmem:[#allocation2 + $0xf8] sm:$0xff] %vm773, %v4712
      %4749 = vst.msk [vmem:[#allocation2 + $0x100] sm:$0xff] %vm773, %v4713
      %4750 = vst.msk [vmem:[#allocation2 + $0x108] sm:$0xff] %vm773, %v4714
      %4751 = vst.msk [vmem:[#allocation2 + $0x110] sm:$0xff] %vm773, %v4715
      %4752 = vst.msk [vmem:[#allocation2 + $0x118] sm:$0xff] %vm773, %v4716
      %p4753 = scmp.eq.s32.totalorder %s25, 2
      // Predicated region
      $region41: #{up_conv_forward.2} parent=35 // pred_check
        %p4754 = pneg %p4753
      $region42: #{up_conv_forward.2} parent=35 // pred_check_branch
        %4756 = sbr.rel (%p4754) target = $region44
      $region43: #{up_conv_forward.2} parent=35 // pred_region
        %v4757 = vld [vmem:[#allocation2] sm:$0xff]
        %v4758 = vld [vmem:[#allocation2 + $0x8] sm:$0xff]
        %v4759 = vld [vmem:[#allocation2 + $0x10] sm:$0xff]
        %v4760 = vld [vmem:[#allocation2 + $0x18] sm:$0xff]
        %v4761 = vld [vmem:[#allocation2 + $0x20] sm:$0xff]
        %v4762 = vld [vmem:[#allocation2 + $0x28] sm:$0xff]
        %v4763 = vld [vmem:[#allocation2 + $0x30] sm:$0xff]
        %v4764 = vld [vmem:[#allocation2 + $0x38] sm:$0xff]
        %v4765 = vld [vmem:[#allocation2 + $0x40] sm:$0xff]
        %v4766 = vld [vmem:[#allocation2 + $0x48] sm:$0xff]
        %v4767 = vld [vmem:[#allocation2 + $0x50] sm:$0xff]
        %v4768 = vld [vmem:[#allocation2 + $0x58] sm:$0xff]
        %v4769 = vld [vmem:[#allocation2 + $0x60] sm:$0xff]
        %v4770 = vld [vmem:[#allocation2 + $0x68] sm:$0xff]
        %v4771 = vld [vmem:[#allocation2 + $0x70] sm:$0xff]
        %v4772 = vld [vmem:[#allocation2 + $0x78] sm:$0xff]
        %v4773 = vld [vmem:[#allocation2 + $0x80] sm:$0xff]
        %v4774 = vld [vmem:[#allocation2 + $0x88] sm:$0xff]
        %v4775 = vld [vmem:[#allocation2 + $0x90] sm:$0xff]
        %v4776 = vld [vmem:[#allocation2 + $0x98] sm:$0xff]
        %v4777 = vld [vmem:[#allocation2 + $0xa0] sm:$0xff]
        %v4778 = vld [vmem:[#allocation2 + $0xa8] sm:$0xff]
        %v4779 = vld [vmem:[#allocation2 + $0xb0] sm:$0xff]
        %v4780 = vld [vmem:[#allocation2 + $0xb8] sm:$0xff]
        %v4781 = vld [vmem:[#allocation2 + $0xc0] sm:$0xff]
        %v4782 = vld [vmem:[#allocation2 + $0xc8] sm:$0xff]
        %v4783 = vld [vmem:[#allocation2 + $0xd0] sm:$0xff]
        %v4784 = vld [vmem:[#allocation2 + $0xd8] sm:$0xff]
        %v4785 = vld [vmem:[#allocation2 + $0xe0] sm:$0xff]
        %v4786 = vld [vmem:[#allocation2 + $0xe8] sm:$0xff]
        %v4787 = vld [vmem:[#allocation2 + $0xf0] sm:$0xff]
        %v4788 = vld [vmem:[#allocation2 + $0xf8] sm:$0xff]
        %v4789 = vld [vmem:[#allocation2 + $0x100] sm:$0xff]
        %v4790 = vld [vmem:[#allocation2 + $0x108] sm:$0xff]
        %v4791 = vld [vmem:[#allocation2 + $0x110] sm:$0xff]
        %v4792 = vld [vmem:[#allocation2 + $0x118] sm:$0xff]
        %v4793 = vpack.c.bf16 %v4757, %v4757
        %v4794 = vpack.c.bf16 %v4758, %v4758
        %v4795 = vpack.c.bf16 %v4759, %v4759
        %v4796 = vpack.c.bf16 %v4760, %v4760
        %v4797 = vpack.c.bf16 %v4761, %v4761
        %v4798 = vpack.c.bf16 %v4762, %v4762
        %v4799 = vpack.c.bf16 %v4763, %v4763
        %v4800 = vpack.c.bf16 %v4764, %v4764
        %v4801 = vpack.c.bf16 %v4765, %v4765
        %v4802 = vpack.c.bf16 %v4766, %v4766
        %v4803 = vpack.c.bf16 %v4767, %v4767
        %v4804 = vpack.c.bf16 %v4768, %v4768
        %v4805 = vpack.c.bf16 %v4769, %v4769
        %v4806 = vpack.c.bf16 %v4770, %v4770
        %v4807 = vpack.c.bf16 %v4771, %v4771
        %v4808 = vpack.c.bf16 %v4772, %v4772
        %v4809 = vpack.c.bf16 %v4773, %v4773
        %v4810 = vpack.c.bf16 %v4774, %v4774
        %v4811 = vpack.c.bf16 %v4775, %v4775
        %v4812 = vpack.c.bf16 %v4776, %v4776
        %v4813 = vpack.c.bf16 %v4777, %v4777
        %v4814 = vpack.c.bf16 %v4778, %v4778
        %v4815 = vpack.c.bf16 %v4779, %v4779
        %v4816 = vpack.c.bf16 %v4780, %v4780
        %v4817 = vpack.c.bf16 %v4781, %v4781
        %v4818 = vpack.c.bf16 %v4782, %v4782
        %v4819 = vpack.c.bf16 %v4783, %v4783
        %v4820 = vpack.c.bf16 %v4784, %v4784
        %v4821 = vpack.c.bf16 %v4785, %v4785
        %v4822 = vpack.c.bf16 %v4786, %v4786
        %v4823 = vpack.c.bf16 %v4787, %v4787
        %v4824 = vpack.c.bf16 %v4788, %v4788
        %v4825 = vpack.c.bf16 %v4789, %v4789
        %v4826 = vpack.c.bf16 %v4790, %v4790
        %v4827 = vpack.c.bf16 %v4791, %v4791
        %v4828 = vpack.c.bf16 %v4792, %v4792
        %vm4829 = vcmask 125952
        %4830 = vst.msk [vmem:[%s344] sm:$0xf] %vm4829, %v4793
        %4831 = vst.msk [vmem:[%s344 + $0x4] sm:$0xf] %vm4829, %v4794
        %4832 = vst.msk [vmem:[%s344 + $0x8] sm:$0xf] %vm4829, %v4795
        %4833 = vst.msk [vmem:[%s344 + $0xc] sm:$0xf] %vm4829, %v4796
        %4834 = vst.msk [vmem:[%s344 + $0x10] sm:$0xf] %vm4829, %v4797
        %4835 = vst.msk [vmem:[%s344 + $0x14] sm:$0xf] %vm4829, %v4798
        %4836 = vst.msk [vmem:[%s344 + $0x18] sm:$0xf] %vm4829, %v4799
        %4837 = vst.msk [vmem:[%s344 + $0x1c] sm:$0xf] %vm4829, %v4800
        %4838 = vst.msk [vmem:[%s344 + $0x20] sm:$0xf] %vm4829, %v4801
        %4839 = vst.msk [vmem:[%s344 + $0x24] sm:$0xf] %vm4829, %v4802
        %4840 = vst.msk [vmem:[%s344 + $0x28] sm:$0xf] %vm4829, %v4803
        %4841 = vst.msk [vmem:[%s344 + $0x2c] sm:$0xf] %vm4829, %v4804
        %4842 = vst.msk [vmem:[%s344 + $0x30] sm:$0xf] %vm4829, %v4805
        %4843 = vst.msk [vmem:[%s344 + $0x34] sm:$0xf] %vm4829, %v4806
        %4844 = vst.msk [vmem:[%s344 + $0x38] sm:$0xf] %vm4829, %v4807
        %4845 = vst.msk [vmem:[%s344 + $0x3c] sm:$0xf] %vm4829, %v4808
        %4846 = vst.msk [vmem:[%s344 + $0x40] sm:$0xf] %vm4829, %v4809
        %4847 = vst.msk [vmem:[%s344 + $0x44] sm:$0xf] %vm4829, %v4810
        %4848 = vst.msk [vmem:[%s344 + $0x48] sm:$0xf] %vm4829, %v4811
        %4849 = vst.msk [vmem:[%s344 + $0x4c] sm:$0xf] %vm4829, %v4812
        %4850 = vst.msk [vmem:[%s344 + $0x50] sm:$0xf] %vm4829, %v4813
        %4851 = vst.msk [vmem:[%s344 + $0x54] sm:$0xf] %vm4829, %v4814
        %4852 = vst.msk [vmem:[%s344 + $0x58] sm:$0xf] %vm4829, %v4815
        %4853 = vst.msk [vmem:[%s344 + $0x5c] sm:$0xf] %vm4829, %v4816
        %4854 = vst.msk [vmem:[%s344 + $0x60] sm:$0xf] %vm4829, %v4817
        %4855 = vst.msk [vmem:[%s344 + $0x64] sm:$0xf] %vm4829, %v4818
        %4856 = vst.msk [vmem:[%s344 + $0x68] sm:$0xf] %vm4829, %v4819
        %4857 = vst.msk [vmem:[%s344 + $0x6c] sm:$0xf] %vm4829, %v4820
        %4858 = vst.msk [vmem:[%s344 + $0x70] sm:$0xf] %vm4829, %v4821
        %4859 = vst.msk [vmem:[%s344 + $0x74] sm:$0xf] %vm4829, %v4822
        %4860 = vst.msk [vmem:[%s344 + $0x78] sm:$0xf] %vm4829, %v4823
        %4861 = vst.msk [vmem:[%s344 + $0x7c] sm:$0xf] %vm4829, %v4824
        %4862 = vst.msk [vmem:[%s344 + $0x80] sm:$0xf] %vm4829, %v4825
        %4863 = vst.msk [vmem:[%s344 + $0x84] sm:$0xf] %vm4829, %v4826
        %4864 = vst.msk [vmem:[%s344 + $0x88] sm:$0xf] %vm4829, %v4827
        %4865 = vst.msk [vmem:[%s344 + $0x8c] sm:$0xf] %vm4829, %v4828
        %v4866 = vld [vmem:[%s3] sm:$0xff]
        %v4867 = vld [vmem:[%s3 + $0x8] sm:$0xff]
        %v4868 = vld [vmem:[%s3 + $0x10] sm:$0xff]
        %v4869 = vld [vmem:[%s3 + $0x18] sm:$0xff]
        %v4870 = vld [vmem:[%s3 + $0x20] sm:$0xff]
        %v4871 = vld [vmem:[%s3 + $0x28] sm:$0xff]
        %v4872 = vld [vmem:[%s3 + $0x30] sm:$0xff]
        %v4873 = vld [vmem:[%s3 + $0x38] sm:$0xff]
        %v4874 = vld [vmem:[%s3 + $0x40] sm:$0xff]
        %v4875 = vld [vmem:[%s3 + $0x48] sm:$0xff]
        %v4876 = vld [vmem:[%s3 + $0x50] sm:$0xff]
        %v4877 = vld [vmem:[%s3 + $0x58] sm:$0xff]
        %v4878 = vld [vmem:[%s3 + $0x60] sm:$0xff]
        %v4879 = vld [vmem:[%s3 + $0x68] sm:$0xff]
        %v4880 = vld [vmem:[%s3 + $0x70] sm:$0xff]
        %v4881 = vld [vmem:[%s3 + $0x78] sm:$0xff]
        %v4882 = vld [vmem:[%s3 + $0x80] sm:$0xff]
        %v4883 = vld [vmem:[%s3 + $0x88] sm:$0xff]
        %v4884 = vld [vmem:[%s3 + $0x90] sm:$0xff]
        %v4885 = vld [vmem:[%s3 + $0x98] sm:$0xff]
        %v4886 = vld [vmem:[%s3 + $0xa0] sm:$0xff]
        %v4887 = vld [vmem:[%s3 + $0xa8] sm:$0xff]
        %v4888 = vld [vmem:[%s3 + $0xb0] sm:$0xff]
        %v4889 = vld [vmem:[%s3 + $0xb8] sm:$0xff]
        %v4890 = vld [vmem:[%s3 + $0xc0] sm:$0xff]
        %v4891 = vld [vmem:[%s3 + $0xc8] sm:$0xff]
        %v4892 = vld [vmem:[%s3 + $0xd0] sm:$0xff]
        %v4893 = vld [vmem:[%s3 + $0xd8] sm:$0xff]
        %v4894 = vld [vmem:[%s3 + $0xe0] sm:$0xff]
        %v4895 = vld [vmem:[%s3 + $0xe8] sm:$0xff]
        %v4896 = vld [vmem:[%s3 + $0xf0] sm:$0xff]
        %v4897 = vld [vmem:[%s3 + $0xf8] sm:$0xff]
        %v4898 = vld [vmem:[%s3 + $0x100] sm:$0xff]
        %v4899 = vld [vmem:[%s3 + $0x108] sm:$0xff]
        %v4900 = vld [vmem:[%s3 + $0x110] sm:$0xff]
        %v4901 = vld [vmem:[%s3 + $0x118] sm:$0xff]
        %4903 = vset.pattern.permute.xlu0 0
        %4904 = vperm.xlu0 %4903, %v4866
        %v4905 = vpop.permute.xlu0 %4904
        %4908 = vset.pattern.permute.xlu0 0
        %4909 = vperm.xlu0 %4908, %v4867
        %v4910 = vpop.permute.xlu0 %4909
        %4913 = vset.pattern.permute.xlu0 0
        %4914 = vperm.xlu0 %4913, %v4868
        %v4915 = vpop.permute.xlu0 %4914
        %4918 = vset.pattern.permute.xlu0 0
        %4919 = vperm.xlu0 %4918, %v4869
        %v4920 = vpop.permute.xlu0 %4919
        %4923 = vset.pattern.permute.xlu0 0
        %4924 = vperm.xlu0 %4923, %v4870
        %v4925 = vpop.permute.xlu0 %4924
        %4928 = vset.pattern.permute.xlu0 0
        %4929 = vperm.xlu0 %4928, %v4871
        %v4930 = vpop.permute.xlu0 %4929
        %4933 = vset.pattern.permute.xlu0 0
        %4934 = vperm.xlu0 %4933, %v4872
        %v4935 = vpop.permute.xlu0 %4934
        %4938 = vset.pattern.permute.xlu0 0
        %4939 = vperm.xlu0 %4938, %v4873
        %v4940 = vpop.permute.xlu0 %4939
        %4943 = vset.pattern.permute.xlu0 0
        %4944 = vperm.xlu0 %4943, %v4874
        %v4945 = vpop.permute.xlu0 %4944
        %4948 = vset.pattern.permute.xlu0 0
        %4949 = vperm.xlu0 %4948, %v4875
        %v4950 = vpop.permute.xlu0 %4949
        %4953 = vset.pattern.permute.xlu0 0
        %4954 = vperm.xlu0 %4953, %v4876
        %v4955 = vpop.permute.xlu0 %4954
        %4958 = vset.pattern.permute.xlu0 0
        %4959 = vperm.xlu0 %4958, %v4877
        %v4960 = vpop.permute.xlu0 %4959
        %4963 = vset.pattern.permute.xlu0 0
        %4964 = vperm.xlu0 %4963, %v4878
        %v4965 = vpop.permute.xlu0 %4964
        %4968 = vset.pattern.permute.xlu0 0
        %4969 = vperm.xlu0 %4968, %v4879
        %v4970 = vpop.permute.xlu0 %4969
        %4973 = vset.pattern.permute.xlu0 0
        %4974 = vperm.xlu0 %4973, %v4880
        %v4975 = vpop.permute.xlu0 %4974
        %4978 = vset.pattern.permute.xlu0 0
        %4979 = vperm.xlu0 %4978, %v4881
        %v4980 = vpop.permute.xlu0 %4979
        %4983 = vset.pattern.permute.xlu0 0
        %4984 = vperm.xlu0 %4983, %v4882
        %v4985 = vpop.permute.xlu0 %4984
        %4988 = vset.pattern.permute.xlu0 0
        %4989 = vperm.xlu0 %4988, %v4883
        %v4990 = vpop.permute.xlu0 %4989
        %4993 = vset.pattern.permute.xlu0 0
        %4994 = vperm.xlu0 %4993, %v4884
        %v4995 = vpop.permute.xlu0 %4994
        %4998 = vset.pattern.permute.xlu0 0
        %4999 = vperm.xlu0 %4998, %v4885
        %v5000 = vpop.permute.xlu0 %4999
        %5003 = vset.pattern.permute.xlu0 0
        %5004 = vperm.xlu0 %5003, %v4886
        %v5005 = vpop.permute.xlu0 %5004
        %5008 = vset.pattern.permute.xlu0 0
        %5009 = vperm.xlu0 %5008, %v4887
        %v5010 = vpop.permute.xlu0 %5009
        %5013 = vset.pattern.permute.xlu0 0
        %5014 = vperm.xlu0 %5013, %v4888
        %v5015 = vpop.permute.xlu0 %5014
        %5018 = vset.pattern.permute.xlu0 0
        %5019 = vperm.xlu0 %5018, %v4889
        %v5020 = vpop.permute.xlu0 %5019
        %5023 = vset.pattern.permute.xlu0 0
        %5024 = vperm.xlu0 %5023, %v4890
        %v5025 = vpop.permute.xlu0 %5024
        %5028 = vset.pattern.permute.xlu0 0
        %5029 = vperm.xlu0 %5028, %v4891
        %v5030 = vpop.permute.xlu0 %5029
        %5033 = vset.pattern.permute.xlu0 0
        %5034 = vperm.xlu0 %5033, %v4892
        %v5035 = vpop.permute.xlu0 %5034
        %5038 = vset.pattern.permute.xlu0 0
        %5039 = vperm.xlu0 %5038, %v4893
        %v5040 = vpop.permute.xlu0 %5039
        %5043 = vset.pattern.permute.xlu0 0
        %5044 = vperm.xlu0 %5043, %v4894
        %v5045 = vpop.permute.xlu0 %5044
        %5048 = vset.pattern.permute.xlu0 0
        %5049 = vperm.xlu0 %5048, %v4895
        %v5050 = vpop.permute.xlu0 %5049
        %5053 = vset.pattern.permute.xlu0 0
        %5054 = vperm.xlu0 %5053, %v4896
        %v5055 = vpop.permute.xlu0 %5054
        %5058 = vset.pattern.permute.xlu0 0
        %5059 = vperm.xlu0 %5058, %v4897
        %v5060 = vpop.permute.xlu0 %5059
        %5063 = vset.pattern.permute.xlu0 0
        %5064 = vperm.xlu0 %5063, %v4898
        %v5065 = vpop.permute.xlu0 %5064
        %5068 = vset.pattern.permute.xlu0 0
        %5069 = vperm.xlu0 %5068, %v4899
        %v5070 = vpop.permute.xlu0 %5069
        %5073 = vset.pattern.permute.xlu0 0
        %5074 = vperm.xlu0 %5073, %v4900
        %v5075 = vpop.permute.xlu0 %5074
        %5078 = vset.pattern.permute.xlu0 0
        %5079 = vperm.xlu0 %5078, %v4901
        %v5080 = vpop.permute.xlu0 %5079
        %v5082 = vmul.f32 %v4757, %v4905
        %v5083 = vmul.f32 %v4758, %v4910
        %v5084 = vmul.f32 %v4759, %v4915
        %v5085 = vmul.f32 %v4760, %v4920
        %v5086 = vmul.f32 %v4761, %v4925
        %v5087 = vmul.f32 %v4762, %v4930
        %v5088 = vmul.f32 %v4763, %v4935
        %v5089 = vmul.f32 %v4764, %v4940
        %v5090 = vmul.f32 %v4765, %v4945
        %v5091 = vmul.f32 %v4766, %v4950
        %v5092 = vmul.f32 %v4767, %v4955
        %v5093 = vmul.f32 %v4768, %v4960
        %v5094 = vmul.f32 %v4769, %v4965
        %v5095 = vmul.f32 %v4770, %v4970
        %v5096 = vmul.f32 %v4771, %v4975
        %v5097 = vmul.f32 %v4772, %v4980
        %v5098 = vmul.f32 %v4773, %v4985
        %v5099 = vmul.f32 %v4774, %v4990
        %v5100 = vmul.f32 %v4775, %v4995
        %v5101 = vmul.f32 %v4776, %v5000
        %v5102 = vmul.f32 %v4777, %v5005
        %v5103 = vmul.f32 %v4778, %v5010
        %v5104 = vmul.f32 %v4779, %v5015
        %v5105 = vmul.f32 %v4780, %v5020
        %v5106 = vmul.f32 %v4781, %v5025
        %v5107 = vmul.f32 %v4782, %v5030
        %v5108 = vmul.f32 %v4783, %v5035
        %v5109 = vmul.f32 %v4784, %v5040
        %v5110 = vmul.f32 %v4785, %v5045
        %v5111 = vmul.f32 %v4786, %v5050
        %v5112 = vmul.f32 %v4787, %v5055
        %v5113 = vmul.f32 %v4788, %v5060
        %v5114 = vmul.f32 %v4789, %v5065
        %v5115 = vmul.f32 %v4790, %v5070
        %v5116 = vmul.f32 %v4791, %v5075
        %v5117 = vmul.f32 %v4792, %v5080
        %v5118 = vsel %vm773, %v5082, 0.0
        %v5119 = vsel %vm773, %v5083, 0.0
        %v5120 = vadd.f32 %v5118, %v5119
        %v5121 = vsel %vm773, %v5084, 0.0
        %v5122 = vadd.f32 %v5120, %v5121
        %v5123 = vsel %vm773, %v5085, 0.0
        %v5124 = vadd.f32 %v5122, %v5123
        %v5125 = vsel %vm773, %v5086, 0.0
        %v5126 = vadd.f32 %v5124, %v5125
        %v5127 = vsel %vm773, %v5087, 0.0
        %v5128 = vadd.f32 %v5126, %v5127
        %v5129 = vsel %vm773, %v5088, 0.0
        %v5130 = vadd.f32 %v5128, %v5129
        %v5131 = vsel %vm773, %v5089, 0.0
        %v5132 = vadd.f32 %v5130, %v5131
        %v5133 = vsel %vm773, %v5090, 0.0
        %v5134 = vadd.f32 %v5132, %v5133
        %v5135 = vsel %vm773, %v5091, 0.0
        %v5136 = vadd.f32 %v5134, %v5135
        %v5137 = vsel %vm773, %v5092, 0.0
        %v5138 = vadd.f32 %v5136, %v5137
        %v5139 = vsel %vm773, %v5093, 0.0
        %v5140 = vadd.f32 %v5138, %v5139
        %v5141 = vsel %vm773, %v5094, 0.0
        %v5142 = vadd.f32 %v5140, %v5141
        %v5143 = vsel %vm773, %v5095, 0.0
        %v5144 = vadd.f32 %v5142, %v5143
        %v5145 = vsel %vm773, %v5096, 0.0
        %v5146 = vadd.f32 %v5144, %v5145
        %v5147 = vsel %vm773, %v5097, 0.0
        %v5148 = vadd.f32 %v5146, %v5147
        %v5149 = vsel %vm773, %v5098, 0.0
        %v5150 = vadd.f32 %v5148, %v5149
        %v5151 = vsel %vm773, %v5099, 0.0
        %v5152 = vadd.f32 %v5150, %v5151
        %v5153 = vsel %vm773, %v5100, 0.0
        %v5154 = vadd.f32 %v5152, %v5153
        %v5155 = vsel %vm773, %v5101, 0.0
        %v5156 = vadd.f32 %v5154, %v5155
        %v5157 = vsel %vm773, %v5102, 0.0
        %v5158 = vadd.f32 %v5156, %v5157
        %v5159 = vsel %vm773, %v5103, 0.0
        %v5160 = vadd.f32 %v5158, %v5159
        %v5161 = vsel %vm773, %v5104, 0.0
        %v5162 = vadd.f32 %v5160, %v5161
        %v5163 = vsel %vm773, %v5105, 0.0
        %v5164 = vadd.f32 %v5162, %v5163
        %v5165 = vsel %vm773, %v5106, 0.0
        %v5166 = vadd.f32 %v5164, %v5165
        %v5167 = vsel %vm773, %v5107, 0.0
        %v5168 = vadd.f32 %v5166, %v5167
        %v5169 = vsel %vm773, %v5108, 0.0
        %v5170 = vadd.f32 %v5168, %v5169
        %v5171 = vsel %vm773, %v5109, 0.0
        %v5172 = vadd.f32 %v5170, %v5171
        %v5173 = vsel %vm773, %v5110, 0.0
        %v5174 = vadd.f32 %v5172, %v5173
        %v5175 = vsel %vm773, %v5111, 0.0
        %v5176 = vadd.f32 %v5174, %v5175
        %v5177 = vsel %vm773, %v5112, 0.0
        %v5178 = vadd.f32 %v5176, %v5177
        %v5179 = vsel %vm773, %v5113, 0.0
        %v5180 = vadd.f32 %v5178, %v5179
        %v5181 = vsel %vm773, %v5114, 0.0
        %v5182 = vadd.f32 %v5180, %v5181
        %v5183 = vsel %vm773, %v5115, 0.0
        %v5184 = vadd.f32 %v5182, %v5183
        %v5185 = vsel %vm773, %v5116, 0.0
        %v5186 = vadd.f32 %v5184, %v5185
        %v5187 = vsel %vm773, %v5117, 0.0
        %v5188 = vadd.f32 %v5186, %v5187
        %v5189 = vrot.slane %v5188, 4
        %v5190 = vadd.f32 %v5188, %v5189
        %v5191 = vrot.slane %v5190, 2
        %v5192 = vadd.f32 %v5190, %v5191
        %v5193 = vrot.slane %v5192, 1
        %v5194 = vadd.f32 %v5192, %v5193
        %vm5195 = vcmask 122880
        %5196 = vst.msk [vmem:[%s351] sm:$0x1] %vm5195, %v5194
        %v5197 = vmul.f32 %v5082, %v5082
        %v5198 = vmul.f32 %v5083, %v5083
        %v5199 = vmul.f32 %v5084, %v5084
        %v5200 = vmul.f32 %v5085, %v5085
        %v5201 = vmul.f32 %v5086, %v5086
        %v5202 = vmul.f32 %v5087, %v5087
        %v5203 = vmul.f32 %v5088, %v5088
        %v5204 = vmul.f32 %v5089, %v5089
        %v5205 = vmul.f32 %v5090, %v5090
        %v5206 = vmul.f32 %v5091, %v5091
        %v5207 = vmul.f32 %v5092, %v5092
        %v5208 = vmul.f32 %v5093, %v5093
        %v5209 = vmul.f32 %v5094, %v5094
        %v5210 = vmul.f32 %v5095, %v5095
        %v5211 = vmul.f32 %v5096, %v5096
        %v5212 = vmul.f32 %v5097, %v5097
        %v5213 = vmul.f32 %v5098, %v5098
        %v5214 = vmul.f32 %v5099, %v5099
        %v5215 = vmul.f32 %v5100, %v5100
        %v5216 = vmul.f32 %v5101, %v5101
        %v5217 = vmul.f32 %v5102, %v5102
        %v5218 = vmul.f32 %v5103, %v5103
        %v5219 = vmul.f32 %v5104, %v5104
        %v5220 = vmul.f32 %v5105, %v5105
        %v5221 = vmul.f32 %v5106, %v5106
        %v5222 = vmul.f32 %v5107, %v5107
        %v5223 = vmul.f32 %v5108, %v5108
        %v5224 = vmul.f32 %v5109, %v5109
        %v5225 = vmul.f32 %v5110, %v5110
        %v5226 = vmul.f32 %v5111, %v5111
        %v5227 = vmul.f32 %v5112, %v5112
        %v5228 = vmul.f32 %v5113, %v5113
        %v5229 = vmul.f32 %v5114, %v5114
        %v5230 = vmul.f32 %v5115, %v5115
        %v5231 = vmul.f32 %v5116, %v5116
        %v5232 = vmul.f32 %v5117, %v5117
        %v5233 = vsel %vm773, %v5197, 0.0
        %v5234 = vsel %vm773, %v5198, 0.0
        %v5235 = vadd.f32 %v5233, %v5234
        %v5236 = vsel %vm773, %v5199, 0.0
        %v5237 = vadd.f32 %v5235, %v5236
        %v5238 = vsel %vm773, %v5200, 0.0
        %v5239 = vadd.f32 %v5237, %v5238
        %v5240 = vsel %vm773, %v5201, 0.0
        %v5241 = vadd.f32 %v5239, %v5240
        %v5242 = vsel %vm773, %v5202, 0.0
        %v5243 = vadd.f32 %v5241, %v5242
        %v5244 = vsel %vm773, %v5203, 0.0
        %v5245 = vadd.f32 %v5243, %v5244
        %v5246 = vsel %vm773, %v5204, 0.0
        %v5247 = vadd.f32 %v5245, %v5246
        %v5248 = vsel %vm773, %v5205, 0.0
        %v5249 = vadd.f32 %v5247, %v5248
        %v5250 = vsel %vm773, %v5206, 0.0
        %v5251 = vadd.f32 %v5249, %v5250
        %v5252 = vsel %vm773, %v5207, 0.0
        %v5253 = vadd.f32 %v5251, %v5252
        %v5254 = vsel %vm773, %v5208, 0.0
        %v5255 = vadd.f32 %v5253, %v5254
        %v5256 = vsel %vm773, %v5209, 0.0
        %v5257 = vadd.f32 %v5255, %v5256
        %v5258 = vsel %vm773, %v5210, 0.0
        %v5259 = vadd.f32 %v5257, %v5258
        %v5260 = vsel %vm773, %v5211, 0.0
        %v5261 = vadd.f32 %v5259, %v5260
        %v5262 = vsel %vm773, %v5212, 0.0
        %v5263 = vadd.f32 %v5261, %v5262
        %v5264 = vsel %vm773, %v5213, 0.0
        %v5265 = vadd.f32 %v5263, %v5264
        %v5266 = vsel %vm773, %v5214, 0.0
        %v5267 = vadd.f32 %v5265, %v5266
        %v5268 = vsel %vm773, %v5215, 0.0
        %v5269 = vadd.f32 %v5267, %v5268
        %v5270 = vsel %vm773, %v5216, 0.0
        %v5271 = vadd.f32 %v5269, %v5270
        %v5272 = vsel %vm773, %v5217, 0.0
        %v5273 = vadd.f32 %v5271, %v5272
        %v5274 = vsel %vm773, %v5218, 0.0
        %v5275 = vadd.f32 %v5273, %v5274
        %v5276 = vsel %vm773, %v5219, 0.0
        %v5277 = vadd.f32 %v5275, %v5276
        %v5278 = vsel %vm773, %v5220, 0.0
        %v5279 = vadd.f32 %v5277, %v5278
        %v5280 = vsel %vm773, %v5221, 0.0
        %v5281 = vadd.f32 %v5279, %v5280
        %v5282 = vsel %vm773, %v5222, 0.0
        %v5283 = vadd.f32 %v5281, %v5282
        %v5284 = vsel %vm773, %v5223, 0.0
        %v5285 = vadd.f32 %v5283, %v5284
        %v5286 = vsel %vm773, %v5224, 0.0
        %v5287 = vadd.f32 %v5285, %v5286
        %v5288 = vsel %vm773, %v5225, 0.0
        %v5289 = vadd.f32 %v5287, %v5288
        %v5290 = vsel %vm773, %v5226, 0.0
        %v5291 = vadd.f32 %v5289, %v5290
        %v5292 = vsel %vm773, %v5227, 0.0
        %v5293 = vadd.f32 %v5291, %v5292
        %v5294 = vsel %vm773, %v5228, 0.0
        %v5295 = vadd.f32 %v5293, %v5294
        %v5296 = vsel %vm773, %v5229, 0.0
        %v5297 = vadd.f32 %v5295, %v5296
        %v5298 = vsel %vm773, %v5230, 0.0
        %v5299 = vadd.f32 %v5297, %v5298
        %v5300 = vsel %vm773, %v5231, 0.0
        %v5301 = vadd.f32 %v5299, %v5300
        %v5302 = vsel %vm773, %v5232, 0.0
        %v5303 = vadd.f32 %v5301, %v5302
        %v5304 = vrot.slane %v5303, 4
        %v5305 = vadd.f32 %v5303, %v5304
        %v5306 = vrot.slane %v5305, 2
        %v5307 = vadd.f32 %v5305, %v5306
        %v5308 = vrot.slane %v5307, 1
        %v5309 = vadd.f32 %v5307, %v5308
        %5310 = vst.msk [vmem:[%s358] sm:$0x1] %vm5195, %v5309
      $region44: #{up_conv_forward.2} parent=35 // pred_fallthru
        _
      %p5311 = scmp.lt.s32.totalorder %s23, 1
      %s5312 = scalar_select %p5311, %s23, 1
      %p5313 = scmp.lt.s32.totalorder %s24, 15
      %s5314 = scalar_select %p5313, %s24, 15
      %s5315 = smul.addr %s5314, 36
      %s5316 = smul.addr %s5312, 576
      %s5317 = sadd.s32 %s5315, %s5316
      %s5318 = smul.addr %s5317, 4
      %s5319 = scalar_lea.vmem %s4, %s5318
      %p5320 = scmp.lt.s32.totalorder %s23, 1
      %s5321 = scalar_select %p5320, %s23, 1
      %p5322 = scmp.lt.s32.totalorder %s24, 15
      %s5323 = scalar_select %p5322, %s24, 15
      %s5324 = smul.addr %s5321, 16
      %s5325 = sadd.s32 %s5323, %s5324
      %s5326 = scalar_lea.vmem %s5, %s5325
      %p5327 = scmp.lt.s32.totalorder %s23, 1
      %s5328 = scalar_select %p5327, %s23, 1
      %p5329 = scmp.lt.s32.totalorder %s24, 15
      %s5330 = scalar_select %p5329, %s24, 15
      %s5331 = smul.addr %s5328, 16
      %s5332 = sadd.s32 %s5330, %s5331
      %s5333 = scalar_lea.vmem %s6, %s5332
      // Predicated region
      $region45: #{up_conv_forward.2} parent=35 // pred_check
        %p5334 = pneg %p155
      $region46: #{up_conv_forward.2} parent=35 // pred_check_branch
        %5336 = sbr.rel (%p5334) target = $region48
      $region47: #{up_conv_forward.2} parent=35 // pred_region
        _
      $region48: #{up_conv_forward.2} parent=35 // pred_fallthru
        _
      // Predicated region
      $region49: #{up_conv_forward.2} parent=35 // pred_check
        %p5337 = pneg %p183
      $region50: #{up_conv_forward.2} parent=35 // pred_check_branch
        %5339 = sbr.rel (%p5337) target = $region52
      $region51: #{up_conv_forward.2} parent=35 // pred_region
        _
      $region52: #{up_conv_forward.2} parent=35 // pred_fallthru
        _
      // Predicated region
      $region53: #{up_conv_forward.2} parent=35 // pred_check
        %p5340 = pneg %p211
      $region54: #{up_conv_forward.2} parent=35 // pred_check_branch
        %5342 = sbr.rel (%p5340) target = $region56
      $region55: #{up_conv_forward.2} parent=35 // pred_region
        _
      $region56: #{up_conv_forward.2} parent=35 // pred_fallthru
        _
    $region36: #{up_conv_forward.2} parent=5 // pred_fallthru
      _
    %p5343 = scmp.le.s32.totalorder 2, %s13
    // Predicated region
    $region57: #{up_conv_forward.2} parent=5 // pred_check
      %p5344 = pneg %p5343
    $region58: #{up_conv_forward.2} parent=5 // pred_check_branch
      %5346 = sbr.rel (%p5344) target = $region60
    $region59: #{up_conv_forward.2} parent=5 // pred_region
      %s5347 = ssub.s32 %s13, 2
      // Predicated region
      $region61: #{up_conv_forward.2} parent=59 // pred_check
        %p5348 = pneg %p161
      $region62: #{up_conv_forward.2} parent=59 // pred_check_branch
        %5350 = sbr.rel (%p5348) target = $region64
      $region63: #{up_conv_forward.2} parent=59 // pred_region
        %p5351 = scmp.lt.s32.totalorder %s26, 1
        %s5352 = scalar_select %p5351, %s26, 1
        %p5353 = scmp.lt.s32.totalorder %s27, 15
        %s5354 = scalar_select %p5353, %s27, 15
        %s5355 = smul.addr %s5354, 36
        %s5356 = smul.addr %s5352, 576
        %s5357 = sadd.s32 %s5355, %s5356
        %s5358 = smul.addr %s5357, 4
        %s5359 = scalar_lea.vmem %s4, %s5358
      $region64: #{up_conv_forward.2} parent=59 // pred_fallthru
        _
      // Predicated region
      $region65: #{up_conv_forward.2} parent=59 // pred_check
        %p5360 = pneg %p189
      $region66: #{up_conv_forward.2} parent=59 // pred_check_branch
        %5362 = sbr.rel (%p5360) target = $region68
      $region67: #{up_conv_forward.2} parent=59 // pred_region
        %p5363 = scmp.lt.s32.totalorder %s26, 1
        %s5364 = scalar_select %p5363, %s26, 1
        %p5365 = scmp.lt.s32.totalorder %s27, 15
        %s5366 = scalar_select %p5365, %s27, 15
        %s5367 = smul.addr %s5364, 16
        %s5368 = sadd.s32 %s5366, %s5367
        %s5369 = scalar_lea.vmem %s5, %s5368
      $region68: #{up_conv_forward.2} parent=59 // pred_fallthru
        _
      // Predicated region
      $region69: #{up_conv_forward.2} parent=59 // pred_check
        %p5370 = pneg %p217
      $region70: #{up_conv_forward.2} parent=59 // pred_check_branch
        %5372 = sbr.rel (%p5370) target = $region72
      $region71: #{up_conv_forward.2} parent=59 // pred_region
        %p5373 = scmp.lt.s32.totalorder %s26, 1
        %s5374 = scalar_select %p5373, %s26, 1
        %p5375 = scmp.lt.s32.totalorder %s27, 15
        %s5376 = scalar_select %p5375, %s27, 15
        %s5377 = smul.addr %s5374, 16
        %s5378 = sadd.s32 %s5376, %s5377
        %s5379 = scalar_lea.vmem %s6, %s5378
      $region72: #{up_conv_forward.2} parent=59 // pred_fallthru
        _
    $region60: #{up_conv_forward.2} parent=5 // pred_fallthru
      _
  $region6: #{up_conv_forward.2} parent=0 // loop_footer
    %s17 = sadd.s32 1, %s13
  $region7: #{up_conv_forward.2} parent=0 // loop_footer_branch
    %12 = sbr.rel target = $region3
  $region8: #{up_conv_forward.2} parent=0 // loop_exit
    _

</llo_original>
